<compile_context>
chip_gen: v7x
topology: tpu7x:2x2x1
jax: 0.10.0
libtpu: 0.0.40
codegen_flags: <defaults>
</compile_context>

<pallas_src>
import functools

import jax
import jax.numpy as jnp
from jax import lax
from jax.experimental import pallas as pl
from jax.experimental.pallas import tpu as pltpu

# ---- small hyperparameters (scaled-down versions of the torch globals) ----
N_EMBD = 32          # n_embd
N_HEAD = 4           # n_head
HEAD_SIZE = N_EMBD // N_HEAD
BLOCK_SIZE = 8       # block_size (max sequence length)
N_LAYER = 2          # n_layer
VOCAB_SIZE = 16      # vocab_size
VOCAB_PAD = 128      # lane-dense logits slab (multiple of 128 lanes)
LN_EPS = 1e-5        # torch nn.LayerNorm default eps
NEG_INF = -1e30      # finite large negative for the causal mask (no inf/NaN hazards)
DTYPE = jnp.float32


# --------------------------- fused Pallas kernel -----------------------------

def _gpt_fused_kernel(
    x_ref,                                   # (R, C)        R = B*T
    ln1_g_ref, ln1_b_ref,                    # (L, 1, C)
    wqkv_ref,                                # (L, C, 3C)    [q | k | v]
    wproj_ref, bproj_ref,                    # (L, C, C), (L, 1, C)
    ln2_g_ref, ln2_b_ref,                    # (L, 1, C)
    w1_ref, b1_ref,                          # (L, C, 4C), (L, 1, 4C)
    w2_ref, b2_ref,                          # (L, 4C, C), (L, 1, C)
    lnf_g_ref, lnf_b_ref,                    # (1, C)
    lmw_ref, lmb_ref,                        # (C, VOCAB_PAD), (1, VOCAB_PAD)
    out_ref,                                 # (R, VOCAB_PAD)
    *, B, T, H, D, n_layer, eps,
):
    C = H * D
    scale = D ** -0.5

    def ln(x, g, b):
        mu = jnp.mean(x, axis=-1, keepdims=True)
        xc = x - mu
        var = jnp.mean(xc * xc, axis=-1, keepdims=True)   # biased var (torch LN)
        return xc * lax.rsqrt(var + eps) * g + b

    x = x_ref[...].astype(jnp.float32)                    # (R, C)

    # causal mask, shared across layers / heads
    row = lax.broadcasted_iota(jnp.int32, (T, T), 0)
    col = lax.broadcasted_iota(jnp.int32, (T, T), 1)
    causal = (col <= row)[None, :, :]                     # (1, T, T)

    for l in range(n_layer):                              # static unroll (small)
        # ---- multi-head causal self-attention ----
        h = ln(x, ln1_g_ref[l], ln1_b_ref[l])             # (R, C)
        qkv = jnp.dot(h, wqkv_ref[l],
                      preferred_element_type=jnp.float32)  # (R, 3C) fused QKV
        head_outs = []
        for hd in range(H):                               # static per-head loop
            q = qkv[:, hd * D:(hd + 1) * D] * scale       # scale folded into q
            k = qkv[:, C + hd * D:C + (hd + 1) * D]
            v = qkv[:, 2 * C + hd * D:2 * C + (hd + 1) * D]
            q3 = q.reshape(B, T, D)
            k3 = k.reshape(B, T, D)
            v3 = v.reshape(B, T, D)
            # contract last dims directly (no explicit k.T transpose)
            s = jnp.einsum("bqd,bkd->bqk", q3, k3,
                           preferred_element_type=jnp.float32)      # (B, T, T)
            s = jnp.where(causal, s, NEG_INF)
            m = jnp.max(s, axis=-1, keepdims=True)
            p = jnp.exp(s - m)
            denom = jnp.sum(p, axis=-1, keepdims=True)
            w = p * pl.reciprocal(denom, approx=True)     # EUP reciprocal
            o3 = jnp.einsum("bqk,bkd->bqd", w, v3,
                            preferred_element_type=jnp.float32)     # (B, T, D)
            head_outs.append(o3.reshape(B * T, D))
        att = jnp.concatenate(head_outs, axis=-1)         # (R, C) in-register merge
        sa = jnp.dot(att, wproj_ref[l],
                     preferred_element_type=jnp.float32) + bproj_ref[l]
        x = x + sa                                        # residual

        # ---- feed-forward ----
        h2 = ln(x, ln2_g_ref[l], ln2_b_ref[l])
        ff = jnp.dot(h2, w1_ref[l],
                     preferred_element_type=jnp.float32) + b1_ref[l]
        ff = jnp.maximum(ff, 0.0)
        ff = jnp.dot(ff, w2_ref[l],
                     preferred_element_type=jnp.float32) + b2_ref[l]
        x = x + ff                                        # residual

    # ---- final LN + LM head (lane-dense padded output) ----
    xf = ln(x, lnf_g_ref[...], lnf_b_ref[...])
    logits = jnp.dot(xf, lmw_ref[...],
                     preferred_element_type=jnp.float32) + lmb_ref[...]
    out_ref[...] = logits.astype(out_ref.dtype)


def gpt_fused_forward(params, x_flat):
    """x_flat: (B*T, C) embeddings. Returns logits (B*T, VOCAB_SIZE)."""
    R, C = x_flat.shape
    # pad LM head to 128 lanes -> unmasked vector stores for the kernel output
    lm_w_pad = jnp.zeros((C, VOCAB_PAD), DTYPE).at[:, :VOCAB_SIZE].set(params["lm_w"])
    lm_b_pad = jnp.zeros((1, VOCAB_PAD), DTYPE).at[:, :VOCAB_SIZE].set(params["lm_b"])

    kernel = functools.partial(
        _gpt_fused_kernel,
        B=R // BLOCK_SIZE, T=BLOCK_SIZE, H=N_HEAD, D=HEAD_SIZE,
        n_layer=N_LAYER, eps=LN_EPS,
    )
    logits_pad = pl.pallas_call(
        kernel,
        out_shape=jax.ShapeDtypeStruct((R, VOCAB_PAD), DTYPE),
        # No grid: the whole working set (weights + activations, ~0.2 MiB) lives
        # in VMEM.  If N_EMBD/BLOCK_SIZE are scaled up, add a row-tiled grid with
        # dimension_semantics=("parallel",) (v7x has 2 TCs) and re-budget VMEM
        # against v7x's 64 MiB.
        compiler_params=pltpu.CompilerParams(vmem_limit_bytes=8 * 1024 * 1024),
    )(
        x_flat,
        params["ln1_g"], params["ln1_b"], params["wqkv"],
        params["wproj"], params["bproj"],
        params["ln2_g"], params["ln2_b"],
        params["w1"], params["b1"], params["w2"], params["b2"],
        params["lnf_g"], params["lnf_b"],
        lm_w_pad, lm_b_pad,
    )
    return logits_pad[:, :VOCAB_SIZE]


# --------------------------- model (glue in JAX) -----------------------------

def init_params(key):
    def nrm(k, shape, std=0.02):
        return (std * jax.random.normal(k, shape)).astype(DTYPE)

    k0, k1, k2, k3, k4, k5, k6 = jax.random.split(key, 7)
    L, C = N_LAYER, N_EMBD
    return {
        "tok_emb": nrm(k0, (VOCAB_SIZE, C)),
        "pos_emb": nrm(k1, (BLOCK_SIZE, C)),
        "ln1_g": jnp.ones((L, 1, C), DTYPE),
        "ln1_b": jnp.zeros((L, 1, C), DTYPE),
        "wqkv": nrm(k2, (L, C, 3 * C)),          # [Wq | Wk | Wv], (in, out)
        "wproj": nrm(k3, (L, C, C)),
        "bproj": jnp.zeros((L, 1, C), DTYPE),
        "ln2_g": jnp.ones((L, 1, C), DTYPE),
        "ln2_b": jnp.zeros((L, 1, C), DTYPE),
        "w1": nrm(k4, (L, C, 4 * C)),
        "b1": jnp.zeros((L, 1, 4 * C), DTYPE),
        "w2": nrm(k5, (L, 4 * C, C)),
        "b2": jnp.zeros((L, 1, C), DTYPE),
        "lnf_g": jnp.ones((1, C), DTYPE),
        "lnf_b": jnp.zeros((1, C), DTYPE),
        "lm_w": nrm(k6, (C, VOCAB_SIZE)),
        "lm_b": jnp.zeros((1, VOCAB_SIZE), DTYPE),
    }


def gpt_forward(params, idx, targets=None):
    B, T = idx.shape
    tok = params["tok_emb"][idx]                       # (B, T, C) gather (glue)
    pos = params["pos_emb"][:T][None, :, :]            # (1, T, C)
    x = (tok + pos).reshape(B * T, N_EMBD)
    logits = gpt_fused_forward(params, x).reshape(B, T, VOCAB_SIZE)
    if targets is None:
        return logits, None
    lgf = logits.reshape(B * T, VOCAB_SIZE)
    logp = jax.nn.log_softmax(lgf, axis=-1)
    loss = -jnp.mean(logp[jnp.arange(B * T), targets.reshape(-1)])
    return logits, loss


# --------------------------- pure-JAX reference ------------------------------

def _ref_ln(x, g, b):
    mu = jnp.mean(x, axis=-1, keepdims=True)
    var = jnp.mean((x - mu) ** 2, axis=-1, keepdims=True)
    return (x - mu) / jnp.sqrt(var + LN_EPS) * g + b


def ref_forward(params, idx):
    B, T = idx.shape
    x = params["tok_emb"][idx] + params["pos_emb"][:T][None]
    for l in range(N_LAYER):
        h = _ref_ln(x, params["ln1_g"][l], params["ln1_b"][l])
        qkv = h @ params["wqkv"][l]
        q, k, v = jnp.split(qkv, 3, axis=-1)
        q = q.reshape(B, T, N_HEAD, HEAD_SIZE).transpose(0, 2, 1, 3)
        k = k.reshape(B, T, N_HEAD, HEAD_SIZE).transpose(0, 2, 1, 3)
        v = v.reshape(B, T, N_HEAD, HEAD_SIZE).transpose(0, 2, 1, 3)
        s = jnp.einsum("bhtd,bhsd->bhts", q, k) * (HEAD_SIZE ** -0.5)
        mask = jnp.tril(jnp.ones((T, T), bool))
        s = jnp.where(mask, s, -jnp.inf)
        w = jax.nn.softmax(s, axis=-1)
        a = (jnp.einsum("bhts,bhsd->bhtd", w, v)
             .transpose(0, 2, 1, 3).reshape(B, T, N_EMBD))
        x = x + a @ params["wproj"][l] + params["bproj"][l]
        h2 = _ref_ln(x, params["ln2_g"][l], params["ln2_b"][l])
        ff = jnp.maximum(h2 @ params["w1"][l] + params["b1"][l], 0.0)
        ff = ff @ params["w2"][l] + params["b2"][l]
        x = x + ff
    x = _ref_ln(x, params["lnf_g"], params["lnf_b"])
    return x @ params["lm_w"] + params["lm_b"]


# ------------------------------- main ----------------------------------------

if __name__ == "__main__":
    key = jax.random.PRNGKey(0)
    kp, ki, kt = jax.random.split(key, 3)

    params = init_params(kp)
    B, T = 2, BLOCK_SIZE
    idx = jax.random.randint(ki, (B, T), 0, VOCAB_SIZE, dtype=jnp.int32)
    targets = jax.random.randint(kt, (B, T), 0, VOCAB_SIZE, dtype=jnp.int32)

    logits, loss = gpt_forward(params, idx, targets)
    logits = jax.block_until_ready(logits)
    loss = jax.block_until_ready(loss)

    # correctness check against pure-JAX reference (tolerance covers the
    # in-kernel approximate-reciprocal softmax normalization)
    ref = jax.block_until_ready(ref_forward(params, idx))
    assert logits.shape == (B, T, VOCAB_SIZE)
    assert jnp.isfinite(loss)
    assert jnp.allclose(logits, ref, atol=1e-3, rtol=1e-3), "mismatch vs reference"

    print("KERNEL_OK")
</pallas_src>

<mosaic_0001>
module attributes {stable_mosaic.version = 11 : i64} {
  func.func @_gpt_fused_kernel(%arg0: memref<16x32xf32, #tpu.memory_space<vmem>>, %arg1: memref<2x1x32xf32, #tpu.memory_space<vmem>>, %arg2: memref<2x1x32xf32, #tpu.memory_space<vmem>>, %arg3: memref<2x32x96xf32, #tpu.memory_space<vmem>>, %arg4: memref<2x32x32xf32, #tpu.memory_space<vmem>>, %arg5: memref<2x1x32xf32, #tpu.memory_space<vmem>>, %arg6: memref<2x1x32xf32, #tpu.memory_space<vmem>>, %arg7: memref<2x1x32xf32, #tpu.memory_space<vmem>>, %arg8: memref<2x32x128xf32, #tpu.memory_space<vmem>>, %arg9: memref<2x1x128xf32, #tpu.memory_space<vmem>>, %arg10: memref<2x128x32xf32, #tpu.memory_space<vmem>>, %arg11: memref<2x1x32xf32, #tpu.memory_space<vmem>>, %arg12: memref<1x32xf32, #tpu.memory_space<vmem>>, %arg13: memref<1x32xf32, #tpu.memory_space<vmem>>, %arg14: memref<32x128xf32, #tpu.memory_space<vmem>>, %arg15: memref<1x128xf32, #tpu.memory_space<vmem>>, %arg16: memref<16x128xf32, #tpu.memory_space<vmem>>) attributes {dimension_semantics = [], scalar_prefetch = 0 : i64, scratch_operands = 0 : i64, tpu.core_type = #tpu.core_type<tc>} {
    %c0 = arith.constant 0 : index
    %c0_0 = arith.constant 0 : index
    %0 = vector.load %arg0[%c0, %c0_0] : memref<16x32xf32, #tpu.memory_space<vmem>>, vector<16x32xf32>
    %1 = tpu.iota {dimensions = array<i32: 0>} : vector<8x8xi32>
    %2 = tpu.iota {dimensions = array<i32: 1>} : vector<8x8xi32>
    %3 = arith.cmpi sle, %2, %1 : vector<8x8xi32>
    %4 = vector.shape_cast %3 : vector<8x8xi1> to vector<1x8x8xi1>
    %c0_1 = arith.constant 0 : index
    %c0_2 = arith.constant 0 : index
    %c0_3 = arith.constant 0 : index
    %5 = vector.load %arg1[%c0_1, %c0_2, %c0_3] : memref<2x1x32xf32, #tpu.memory_space<vmem>>, vector<1x1x32xf32>
    %6 = vector.shape_cast %5 : vector<1x1x32xf32> to vector<1x32xf32>
    %c0_4 = arith.constant 0 : index
    %c0_5 = arith.constant 0 : index
    %c0_6 = arith.constant 0 : index
    %7 = vector.load %arg2[%c0_4, %c0_5, %c0_6] : memref<2x1x32xf32, #tpu.memory_space<vmem>>, vector<1x1x32xf32>
    %8 = vector.shape_cast %7 : vector<1x1x32xf32> to vector<1x32xf32>
    %cst = arith.constant dense<0.000000e+00> : vector<16xf32>
    %9 = vector.multi_reduction <add>, %0, %cst [1] : vector<16x32xf32> to vector<16xf32>
    %10 = vector.shape_cast %9 : vector<16xf32> to vector<16x1xf32>
    %cst_7 = arith.constant 3.200000e+01 : f32
    %11 = vector.broadcast %cst_7 : f32 to vector<16x1xf32>
    %12 = arith.divf %10, %11 : vector<16x1xf32>
    %13 = vector.broadcast %12 : vector<16x1xf32> to vector<16x32xf32>
    %14 = arith.subf %0, %13 : vector<16x32xf32>
    %15 = arith.mulf %14, %14 : vector<16x32xf32>
    %cst_8 = arith.constant dense<0.000000e+00> : vector<16xf32>
    %16 = vector.multi_reduction <add>, %15, %cst_8 [1] : vector<16x32xf32> to vector<16xf32>
    %17 = vector.shape_cast %16 : vector<16xf32> to vector<16x1xf32>
    %cst_9 = arith.constant 3.200000e+01 : f32
    %18 = vector.broadcast %cst_9 : f32 to vector<16x1xf32>
    %19 = arith.divf %17, %18 : vector<16x1xf32>
    %cst_10 = arith.constant 9.99999974E-6 : f32
    %20 = vector.broadcast %cst_10 : f32 to vector<16x1xf32>
    %21 = arith.addf %19, %20 : vector<16x1xf32>
    %22 = math.rsqrt %21 : vector<16x1xf32>
    %23 = vector.broadcast %22 : vector<16x1xf32> to vector<16x32xf32>
    %24 = arith.mulf %14, %23 : vector<16x32xf32>
    %25 = vector.broadcast %6 : vector<1x32xf32> to vector<16x32xf32>
    %26 = arith.mulf %24, %25 : vector<16x32xf32>
    %27 = vector.broadcast %8 : vector<1x32xf32> to vector<16x32xf32>
    %28 = arith.addf %26, %27 : vector<16x32xf32>
    %c0_11 = arith.constant 0 : index
    %c0_12 = arith.constant 0 : index
    %c0_13 = arith.constant 0 : index
    %29 = vector.load %arg3[%c0_11, %c0_12, %c0_13] : memref<2x32x96xf32, #tpu.memory_space<vmem>>, vector<1x32x96xf32>
    %30 = vector.shape_cast %29 : vector<1x32x96xf32> to vector<32x96xf32>
    %cst_14 = arith.constant dense<0.000000e+00> : vector<16x96xf32>
    %31 = tpu.matmul %28, %30, %cst_14 {dimension_numbers = #tpu.dot_dimension_numbers<[1], [0], [0], [1], [0, 0, 1, 1], [], []>} : vector<16x32xf32>, vector<32x96xf32>, vector<16x96xf32> -> vector<16x96xf32>
    %32 = vector.extract_strided_slice %31 {offsets = [0, 0], sizes = [16, 8], strides = [1, 1]} : vector<16x96xf32> to vector<16x8xf32>
    %cst_15 = arith.constant 0.353553385 : f32
    %33 = vector.broadcast %cst_15 : f32 to vector<16x8xf32>
    %34 = arith.mulf %32, %33 : vector<16x8xf32>
    %35 = vector.extract_strided_slice %31 {offsets = [0, 32], sizes = [16, 8], strides = [1, 1]} : vector<16x96xf32> to vector<16x8xf32>
    %36 = vector.extract_strided_slice %31 {offsets = [0, 64], sizes = [16, 8], strides = [1, 1]} : vector<16x96xf32> to vector<16x8xf32>
    %37 = vector.shape_cast %34 : vector<16x8xf32> to vector<2x8x8xf32>
    %38 = vector.shape_cast %35 : vector<16x8xf32> to vector<2x8x8xf32>
    %39 = vector.shape_cast %36 : vector<16x8xf32> to vector<2x8x8xf32>
    "tpu.trace_start"() <{level = 10 : i32, message = "bqd,bkd->bqk"}> : () -> ()
    %cst_16 = arith.constant dense<0.000000e+00> : vector<2x8x8xf32>
    %40 = tpu.matmul %37, %38, %cst_16 {dimension_numbers = #tpu.dot_dimension_numbers<[2], [2], [1], [1], [0, 0, 0, 1, 1, 1], [0], [0]>} : vector<2x8x8xf32>, vector<2x8x8xf32>, vector<2x8x8xf32> -> vector<2x8x8xf32>
    %cst_17 = arith.constant -1.000000e+30 : f32
    "tpu.trace_stop"() : () -> ()
    %41 = vector.shape_cast %4 : vector<1x8x8xi1> to vector<1x8x8xi1>
    %42 = vector.broadcast %41 : vector<1x8x8xi1> to vector<2x8x8xi1>
    %43 = vector.broadcast %cst_17 : f32 to vector<2x8x8xf32>
    %44 = arith.select %42, %40, %43 : vector<2x8x8xi1>, vector<2x8x8xf32>
    %cst_18 = arith.constant dense<0xFF800000> : vector<2x8xf32>
    %45 = vector.multi_reduction <maximumf>, %44, %cst_18 [2] : vector<2x8x8xf32> to vector<2x8xf32>
    %46 = vector.shape_cast %45 : vector<2x8xf32> to vector<2x8x1xf32>
    %47 = vector.broadcast %46 : vector<2x8x1xf32> to vector<2x8x8xf32>
    %48 = arith.subf %44, %47 : vector<2x8x8xf32>
    %49 = math.exp %48 : vector<2x8x8xf32>
    %cst_19 = arith.constant dense<0.000000e+00> : vector<2x8xf32>
    %50 = vector.multi_reduction <add>, %49, %cst_19 [2] : vector<2x8x8xf32> to vector<2x8xf32>
    %51 = vector.shape_cast %50 : vector<2x8xf32> to vector<2x8x1xf32>
    %52 = tpu.reciprocal %51 {approx = true} : vector<2x8x1xf32> -> vector<2x8x1xf32>
    %53 = vector.broadcast %52 : vector<2x8x1xf32> to vector<2x8x8xf32>
    %54 = arith.mulf %49, %53 : vector<2x8x8xf32>
    "tpu.trace_start"() <{level = 10 : i32, message = "bqk,bkd->bqd"}> : () -> ()
    %cst_20 = arith.constant dense<0.000000e+00> : vector<2x8x8xf32>
    %55 = tpu.matmul %54, %39, %cst_20 {dimension_numbers = #tpu.dot_dimension_numbers<[2], [1], [1], [2], [0, 0, 0, 1, 1, 2], [0], [0]>} : vector<2x8x8xf32>, vector<2x8x8xf32>, vector<2x8x8xf32> -> vector<2x8x8xf32>
    "tpu.trace_stop"() : () -> ()
    %56 = vector.shape_cast %55 : vector<2x8x8xf32> to vector<16x8xf32>
    %57 = vector.extract_strided_slice %31 {offsets = [0, 8], sizes = [16, 8], strides = [1, 1]} : vector<16x96xf32> to vector<16x8xf32>
    %cst_21 = arith.constant 0.353553385 : f32
    %58 = vector.broadcast %cst_21 : f32 to vector<16x8xf32>
    %59 = arith.mulf %57, %58 : vector<16x8xf32>
    %60 = vector.extract_strided_slice %31 {offsets = [0, 40], sizes = [16, 8], strides = [1, 1]} : vector<16x96xf32> to vector<16x8xf32>
    %61 = vector.extract_strided_slice %31 {offsets = [0, 72], sizes = [16, 8], strides = [1, 1]} : vector<16x96xf32> to vector<16x8xf32>
    %62 = vector.shape_cast %59 : vector<16x8xf32> to vector<2x8x8xf32>
    %63 = vector.shape_cast %60 : vector<16x8xf32> to vector<2x8x8xf32>
    %64 = vector.shape_cast %61 : vector<16x8xf32> to vector<2x8x8xf32>
    "tpu.trace_start"() <{level = 10 : i32, message = "bqd,bkd->bqk"}> : () -> ()
    %cst_22 = arith.constant dense<0.000000e+00> : vector<2x8x8xf32>
    %65 = tpu.matmul %62, %63, %cst_22 {dimension_numbers = #tpu.dot_dimension_numbers<[2], [2], [1], [1], [0, 0, 0, 1, 1, 1], [0], [0]>} : vector<2x8x8xf32>, vector<2x8x8xf32>, vector<2x8x8xf32> -> vector<2x8x8xf32>
    %cst_23 = arith.constant -1.000000e+30 : f32
    "tpu.trace_stop"() : () -> ()
    %66 = vector.shape_cast %4 : vector<1x8x8xi1> to vector<1x8x8xi1>
    %67 = vector.broadcast %66 : vector<1x8x8xi1> to vector<2x8x8xi1>
    %68 = vector.broadcast %cst_23 : f32 to vector<2x8x8xf32>
    %69 = arith.select %67, %65, %68 : vector<2x8x8xi1>, vector<2x8x8xf32>
    %cst_24 = arith.constant dense<0xFF800000> : vector<2x8xf32>
    %70 = vector.multi_reduction <maximumf>, %69, %cst_24 [2] : vector<2x8x8xf32> to vector<2x8xf32>
    %71 = vector.shape_cast %70 : vector<2x8xf32> to vector<2x8x1xf32>
    %72 = vector.broadcast %71 : vector<2x8x1xf32> to vector<2x8x8xf32>
    %73 = arith.subf %69, %72 : vector<2x8x8xf32>
    %74 = math.exp %73 : vector<2x8x8xf32>
    %cst_25 = arith.constant dense<0.000000e+00> : vector<2x8xf32>
    %75 = vector.multi_reduction <add>, %74, %cst_25 [2] : vector<2x8x8xf32> to vector<2x8xf32>
    %76 = vector.shape_cast %75 : vector<2x8xf32> to vector<2x8x1xf32>
    %77 = tpu.reciprocal %76 {approx = true} : vector<2x8x1xf32> -> vector<2x8x1xf32>
    %78 = vector.broadcast %77 : vector<2x8x1xf32> to vector<2x8x8xf32>
    %79 = arith.mulf %74, %78 : vector<2x8x8xf32>
    "tpu.trace_start"() <{level = 10 : i32, message = "bqk,bkd->bqd"}> : () -> ()
    %cst_26 = arith.constant dense<0.000000e+00> : vector<2x8x8xf32>
    %80 = tpu.matmul %79, %64, %cst_26 {dimension_numbers = #tpu.dot_dimension_numbers<[2], [1], [1], [2], [0, 0, 0, 1, 1, 2], [0], [0]>} : vector<2x8x8xf32>, vector<2x8x8xf32>, vector<2x8x8xf32> -> vector<2x8x8xf32>
    "tpu.trace_stop"() : () -> ()
    %81 = vector.shape_cast %80 : vector<2x8x8xf32> to vector<16x8xf32>
    %82 = vector.extract_strided_slice %31 {offsets = [0, 16], sizes = [16, 8], strides = [1, 1]} : vector<16x96xf32> to vector<16x8xf32>
    %cst_27 = arith.constant 0.353553385 : f32
    %83 = vector.broadcast %cst_27 : f32 to vector<16x8xf32>
    %84 = arith.mulf %82, %83 : vector<16x8xf32>
    %85 = vector.extract_strided_slice %31 {offsets = [0, 48], sizes = [16, 8], strides = [1, 1]} : vector<16x96xf32> to vector<16x8xf32>
    %86 = vector.extract_strided_slice %31 {offsets = [0, 80], sizes = [16, 8], strides = [1, 1]} : vector<16x96xf32> to vector<16x8xf32>
    %87 = vector.shape_cast %84 : vector<16x8xf32> to vector<2x8x8xf32>
    %88 = vector.shape_cast %85 : vector<16x8xf32> to vector<2x8x8xf32>
    %89 = vector.shape_cast %86 : vector<16x8xf32> to vector<2x8x8xf32>
    "tpu.trace_start"() <{level = 10 : i32, message = "bqd,bkd->bqk"}> : () -> ()
    %cst_28 = arith.constant dense<0.000000e+00> : vector<2x8x8xf32>
    %90 = tpu.matmul %87, %88, %cst_28 {dimension_numbers = #tpu.dot_dimension_numbers<[2], [2], [1], [1], [0, 0, 0, 1, 1, 1], [0], [0]>} : vector<2x8x8xf32>, vector<2x8x8xf32>, vector<2x8x8xf32> -> vector<2x8x8xf32>
    %cst_29 = arith.constant -1.000000e+30 : f32
    "tpu.trace_stop"() : () -> ()
    %91 = vector.shape_cast %4 : vector<1x8x8xi1> to vector<1x8x8xi1>
    %92 = vector.broadcast %91 : vector<1x8x8xi1> to vector<2x8x8xi1>
    %93 = vector.broadcast %cst_29 : f32 to vector<2x8x8xf32>
    %94 = arith.select %92, %90, %93 : vector<2x8x8xi1>, vector<2x8x8xf32>
    %cst_30 = arith.constant dense<0xFF800000> : vector<2x8xf32>
    %95 = vector.multi_reduction <maximumf>, %94, %cst_30 [2] : vector<2x8x8xf32> to vector<2x8xf32>
    %96 = vector.shape_cast %95 : vector<2x8xf32> to vector<2x8x1xf32>
    %97 = vector.broadcast %96 : vector<2x8x1xf32> to vector<2x8x8xf32>
    %98 = arith.subf %94, %97 : vector<2x8x8xf32>
    %99 = math.exp %98 : vector<2x8x8xf32>
    %cst_31 = arith.constant dense<0.000000e+00> : vector<2x8xf32>
    %100 = vector.multi_reduction <add>, %99, %cst_31 [2] : vector<2x8x8xf32> to vector<2x8xf32>
    %101 = vector.shape_cast %100 : vector<2x8xf32> to vector<2x8x1xf32>
    %102 = tpu.reciprocal %101 {approx = true} : vector<2x8x1xf32> -> vector<2x8x1xf32>
    %103 = vector.broadcast %102 : vector<2x8x1xf32> to vector<2x8x8xf32>
    %104 = arith.mulf %99, %103 : vector<2x8x8xf32>
    "tpu.trace_start"() <{level = 10 : i32, message = "bqk,bkd->bqd"}> : () -> ()
    %cst_32 = arith.constant dense<0.000000e+00> : vector<2x8x8xf32>
    %105 = tpu.matmul %104, %89, %cst_32 {dimension_numbers = #tpu.dot_dimension_numbers<[2], [1], [1], [2], [0, 0, 0, 1, 1, 2], [0], [0]>} : vector<2x8x8xf32>, vector<2x8x8xf32>, vector<2x8x8xf32> -> vector<2x8x8xf32>
    "tpu.trace_stop"() : () -> ()
    %106 = vector.shape_cast %105 : vector<2x8x8xf32> to vector<16x8xf32>
    %107 = vector.extract_strided_slice %31 {offsets = [0, 24], sizes = [16, 8], strides = [1, 1]} : vector<16x96xf32> to vector<16x8xf32>
    %cst_33 = arith.constant 0.353553385 : f32
    %108 = vector.broadcast %cst_33 : f32 to vector<16x8xf32>
    %109 = arith.mulf %107, %108 : vector<16x8xf32>
    %110 = vector.extract_strided_slice %31 {offsets = [0, 56], sizes = [16, 8], strides = [1, 1]} : vector<16x96xf32> to vector<16x8xf32>
    %111 = vector.extract_strided_slice %31 {offsets = [0, 88], sizes = [16, 8], strides = [1, 1]} : vector<16x96xf32> to vector<16x8xf32>
    %112 = vector.shape_cast %109 : vector<16x8xf32> to vector<2x8x8xf32>
    %113 = vector.shape_cast %110 : vector<16x8xf32> to vector<2x8x8xf32>
    %114 = vector.shape_cast %111 : vector<16x8xf32> to vector<2x8x8xf32>
    "tpu.trace_start"() <{level = 10 : i32, message = "bqd,bkd->bqk"}> : () -> ()
    %cst_34 = arith.constant dense<0.000000e+00> : vector<2x8x8xf32>
    %115 = tpu.matmul %112, %113, %cst_34 {dimension_numbers = #tpu.dot_dimension_numbers<[2], [2], [1], [1], [0, 0, 0, 1, 1, 1], [0], [0]>} : vector<2x8x8xf32>, vector<2x8x8xf32>, vector<2x8x8xf32> -> vector<2x8x8xf32>
    %cst_35 = arith.constant -1.000000e+30 : f32
    "tpu.trace_stop"() : () -> ()
    %116 = vector.shape_cast %4 : vector<1x8x8xi1> to vector<1x8x8xi1>
    %117 = vector.broadcast %116 : vector<1x8x8xi1> to vector<2x8x8xi1>
    %118 = vector.broadcast %cst_35 : f32 to vector<2x8x8xf32>
    %119 = arith.select %117, %115, %118 : vector<2x8x8xi1>, vector<2x8x8xf32>
    %cst_36 = arith.constant dense<0xFF800000> : vector<2x8xf32>
    %120 = vector.multi_reduction <maximumf>, %119, %cst_36 [2] : vector<2x8x8xf32> to vector<2x8xf32>
    %121 = vector.shape_cast %120 : vector<2x8xf32> to vector<2x8x1xf32>
    %122 = vector.broadcast %121 : vector<2x8x1xf32> to vector<2x8x8xf32>
    %123 = arith.subf %119, %122 : vector<2x8x8xf32>
    %124 = math.exp %123 : vector<2x8x8xf32>
    %cst_37 = arith.constant dense<0.000000e+00> : vector<2x8xf32>
    %125 = vector.multi_reduction <add>, %124, %cst_37 [2] : vector<2x8x8xf32> to vector<2x8xf32>
    %126 = vector.shape_cast %125 : vector<2x8xf32> to vector<2x8x1xf32>
    %127 = tpu.reciprocal %126 {approx = true} : vector<2x8x1xf32> -> vector<2x8x1xf32>
    %128 = vector.broadcast %127 : vector<2x8x1xf32> to vector<2x8x8xf32>
    %129 = arith.mulf %124, %128 : vector<2x8x8xf32>
    "tpu.trace_start"() <{level = 10 : i32, message = "bqk,bkd->bqd"}> : () -> ()
    %cst_38 = arith.constant dense<0.000000e+00> : vector<2x8x8xf32>
    %130 = tpu.matmul %129, %114, %cst_38 {dimension_numbers = #tpu.dot_dimension_numbers<[2], [1], [1], [2], [0, 0, 0, 1, 1, 2], [0], [0]>} : vector<2x8x8xf32>, vector<2x8x8xf32>, vector<2x8x8xf32> -> vector<2x8x8xf32>
    "tpu.trace_stop"() : () -> ()
    %131 = vector.shape_cast %130 : vector<2x8x8xf32> to vector<16x8xf32>
    %132 = tpu.concatenate %56, %81, %106, %131 in 1 : vector<16x8xf32>, vector<16x8xf32>, vector<16x8xf32>, vector<16x8xf32> -> vector<16x32xf32>
    %c0_39 = arith.constant 0 : index
    %c0_40 = arith.constant 0 : index
    %c0_41 = arith.constant 0 : index
    %133 = vector.load %arg4[%c0_39, %c0_40, %c0_41] : memref<2x32x32xf32, #tpu.memory_space<vmem>>, vector<1x32x32xf32>
    %134 = vector.shape_cast %133 : vector<1x32x32xf32> to vector<32x32xf32>
    %cst_42 = arith.constant dense<0.000000e+00> : vector<16x32xf32>
    %135 = tpu.matmul %132, %134, %cst_42 {dimension_numbers = #tpu.dot_dimension_numbers<[1], [0], [0], [1], [0, 0, 1, 1], [], []>} : vector<16x32xf32>, vector<32x32xf32>, vector<16x32xf32> -> vector<16x32xf32>
    %c0_43 = arith.constant 0 : index
    %c0_44 = arith.constant 0 : index
    %c0_45 = arith.constant 0 : index
    %136 = vector.load %arg5[%c0_43, %c0_44, %c0_45] : memref<2x1x32xf32, #tpu.memory_space<vmem>>, vector<1x1x32xf32>
    %137 = vector.shape_cast %136 : vector<1x1x32xf32> to vector<1x32xf32>
    %138 = vector.broadcast %137 : vector<1x32xf32> to vector<16x32xf32>
    %139 = arith.addf %135, %138 : vector<16x32xf32>
    %140 = arith.addf %0, %139 : vector<16x32xf32>
    %c0_46 = arith.constant 0 : index
    %c0_47 = arith.constant 0 : index
    %c0_48 = arith.constant 0 : index
    %141 = vector.load %arg6[%c0_46, %c0_47, %c0_48] : memref<2x1x32xf32, #tpu.memory_space<vmem>>, vector<1x1x32xf32>
    %142 = vector.shape_cast %141 : vector<1x1x32xf32> to vector<1x32xf32>
    %c0_49 = arith.constant 0 : index
    %c0_50 = arith.constant 0 : index
    %c0_51 = arith.constant 0 : index
    %143 = vector.load %arg7[%c0_49, %c0_50, %c0_51] : memref<2x1x32xf32, #tpu.memory_space<vmem>>, vector<1x1x32xf32>
    %144 = vector.shape_cast %143 : vector<1x1x32xf32> to vector<1x32xf32>
    %cst_52 = arith.constant dense<0.000000e+00> : vector<16xf32>
    %145 = vector.multi_reduction <add>, %140, %cst_52 [1] : vector<16x32xf32> to vector<16xf32>
    %146 = vector.shape_cast %145 : vector<16xf32> to vector<16x1xf32>
    %cst_53 = arith.constant 3.200000e+01 : f32
    %147 = vector.broadcast %cst_53 : f32 to vector<16x1xf32>
    %148 = arith.divf %146, %147 : vector<16x1xf32>
    %149 = vector.broadcast %148 : vector<16x1xf32> to vector<16x32xf32>
    %150 = arith.subf %140, %149 : vector<16x32xf32>
    %151 = arith.mulf %150, %150 : vector<16x32xf32>
    %cst_54 = arith.constant dense<0.000000e+00> : vector<16xf32>
    %152 = vector.multi_reduction <add>, %151, %cst_54 [1] : vector<16x32xf32> to vector<16xf32>
    %153 = vector.shape_cast %152 : vector<16xf32> to vector<16x1xf32>
    %cst_55 = arith.constant 3.200000e+01 : f32
    %154 = vector.broadcast %cst_55 : f32 to vector<16x1xf32>
    %155 = arith.divf %153, %154 : vector<16x1xf32>
    %cst_56 = arith.constant 9.99999974E-6 : f32
    %156 = vector.broadcast %cst_56 : f32 to vector<16x1xf32>
    %157 = arith.addf %155, %156 : vector<16x1xf32>
    %158 = math.rsqrt %157 : vector<16x1xf32>
    %159 = vector.broadcast %158 : vector<16x1xf32> to vector<16x32xf32>
    %160 = arith.mulf %150, %159 : vector<16x32xf32>
    %161 = vector.broadcast %142 : vector<1x32xf32> to vector<16x32xf32>
    %162 = arith.mulf %160, %161 : vector<16x32xf32>
    %163 = vector.broadcast %144 : vector<1x32xf32> to vector<16x32xf32>
    %164 = arith.addf %162, %163 : vector<16x32xf32>
    %c0_57 = arith.constant 0 : index
    %c0_58 = arith.constant 0 : index
    %c0_59 = arith.constant 0 : index
    %165 = vector.load %arg8[%c0_57, %c0_58, %c0_59] : memref<2x32x128xf32, #tpu.memory_space<vmem>>, vector<1x32x128xf32>
    %166 = vector.shape_cast %165 : vector<1x32x128xf32> to vector<32x128xf32>
    %cst_60 = arith.constant dense<0.000000e+00> : vector<16x128xf32>
    %167 = tpu.matmul %164, %166, %cst_60 {dimension_numbers = #tpu.dot_dimension_numbers<[1], [0], [0], [1], [0, 0, 1, 1], [], []>} : vector<16x32xf32>, vector<32x128xf32>, vector<16x128xf32> -> vector<16x128xf32>
    %c0_61 = arith.constant 0 : index
    %c0_62 = arith.constant 0 : index
    %c0_63 = arith.constant 0 : index
    %168 = vector.load %arg9[%c0_61, %c0_62, %c0_63] : memref<2x1x128xf32, #tpu.memory_space<vmem>>, vector<1x1x128xf32>
    %169 = vector.shape_cast %168 : vector<1x1x128xf32> to vector<1x128xf32>
    %170 = vector.broadcast %169 : vector<1x128xf32> to vector<16x128xf32>
    %171 = arith.addf %167, %170 : vector<16x128xf32>
    %cst_64 = arith.constant 0.000000e+00 : f32
    %172 = vector.broadcast %cst_64 : f32 to vector<16x128xf32>
    %173 = arith.maximumf %171, %172 : vector<16x128xf32>
    %c0_65 = arith.constant 0 : index
    %c0_66 = arith.constant 0 : index
    %c0_67 = arith.constant 0 : index
    %174 = vector.load %arg10[%c0_65, %c0_66, %c0_67] : memref<2x128x32xf32, #tpu.memory_space<vmem>>, vector<1x128x32xf32>
    %175 = vector.shape_cast %174 : vector<1x128x32xf32> to vector<128x32xf32>
    %cst_68 = arith.constant dense<0.000000e+00> : vector<16x32xf32>
    %176 = tpu.matmul %173, %175, %cst_68 {dimension_numbers = #tpu.dot_dimension_numbers<[1], [0], [0], [1], [0, 0, 1, 1], [], []>} : vector<16x128xf32>, vector<128x32xf32>, vector<16x32xf32> -> vector<16x32xf32>
    %c0_69 = arith.constant 0 : index
    %c0_70 = arith.constant 0 : index
    %c0_71 = arith.constant 0 : index
    %177 = vector.load %arg11[%c0_69, %c0_70, %c0_71] : memref<2x1x32xf32, #tpu.memory_space<vmem>>, vector<1x1x32xf32>
    %178 = vector.shape_cast %177 : vector<1x1x32xf32> to vector<1x32xf32>
    %179 = vector.broadcast %178 : vector<1x32xf32> to vector<16x32xf32>
    %180 = arith.addf %176, %179 : vector<16x32xf32>
    %181 = arith.addf %140, %180 : vector<16x32xf32>
    %c1 = arith.constant 1 : index
    %c0_72 = arith.constant 0 : index
    %c0_73 = arith.constant 0 : index
    %182 = vector.load %arg1[%c1, %c0_72, %c0_73] : memref<2x1x32xf32, #tpu.memory_space<vmem>>, vector<1x1x32xf32>
    %183 = vector.shape_cast %182 : vector<1x1x32xf32> to vector<1x32xf32>
    %c1_74 = arith.constant 1 : index
    %c0_75 = arith.constant 0 : index
    %c0_76 = arith.constant 0 : index
    %184 = vector.load %arg2[%c1_74, %c0_75, %c0_76] : memref<2x1x32xf32, #tpu.memory_space<vmem>>, vector<1x1x32xf32>
    %185 = vector.shape_cast %184 : vector<1x1x32xf32> to vector<1x32xf32>
    %cst_77 = arith.constant dense<0.000000e+00> : vector<16xf32>
    %186 = vector.multi_reduction <add>, %181, %cst_77 [1] : vector<16x32xf32> to vector<16xf32>
    %187 = vector.shape_cast %186 : vector<16xf32> to vector<16x1xf32>
    %cst_78 = arith.constant 3.200000e+01 : f32
    %188 = vector.broadcast %cst_78 : f32 to vector<16x1xf32>
    %189 = arith.divf %187, %188 : vector<16x1xf32>
    %190 = vector.broadcast %189 : vector<16x1xf32> to vector<16x32xf32>
    %191 = arith.subf %181, %190 : vector<16x32xf32>
    %192 = arith.mulf %191, %191 : vector<16x32xf32>
    %cst_79 = arith.constant dense<0.000000e+00> : vector<16xf32>
    %193 = vector.multi_reduction <add>, %192, %cst_79 [1] : vector<16x32xf32> to vector<16xf32>
    %194 = vector.shape_cast %193 : vector<16xf32> to vector<16x1xf32>
    %cst_80 = arith.constant 3.200000e+01 : f32
    %195 = vector.broadcast %cst_80 : f32 to vector<16x1xf32>
    %196 = arith.divf %194, %195 : vector<16x1xf32>
    %cst_81 = arith.constant 9.99999974E-6 : f32
    %197 = vector.broadcast %cst_81 : f32 to vector<16x1xf32>
    %198 = arith.addf %196, %197 : vector<16x1xf32>
    %199 = math.rsqrt %198 : vector<16x1xf32>
    %200 = vector.broadcast %199 : vector<16x1xf32> to vector<16x32xf32>
    %201 = arith.mulf %191, %200 : vector<16x32xf32>
    %202 = vector.broadcast %183 : vector<1x32xf32> to vector<16x32xf32>
    %203 = arith.mulf %201, %202 : vector<16x32xf32>
    %204 = vector.broadcast %185 : vector<1x32xf32> to vector<16x32xf32>
    %205 = arith.addf %203, %204 : vector<16x32xf32>
    %c1_82 = arith.constant 1 : index
    %c0_83 = arith.constant 0 : index
    %c0_84 = arith.constant 0 : index
    %206 = vector.load %arg3[%c1_82, %c0_83, %c0_84] : memref<2x32x96xf32, #tpu.memory_space<vmem>>, vector<1x32x96xf32>
    %207 = vector.shape_cast %206 : vector<1x32x96xf32> to vector<32x96xf32>
    %cst_85 = arith.constant dense<0.000000e+00> : vector<16x96xf32>
    %208 = tpu.matmul %205, %207, %cst_85 {dimension_numbers = #tpu.dot_dimension_numbers<[1], [0], [0], [1], [0, 0, 1, 1], [], []>} : vector<16x32xf32>, vector<32x96xf32>, vector<16x96xf32> -> vector<16x96xf32>
    %209 = vector.extract_strided_slice %208 {offsets = [0, 0], sizes = [16, 8], strides = [1, 1]} : vector<16x96xf32> to vector<16x8xf32>
    %cst_86 = arith.constant 0.353553385 : f32
    %210 = vector.broadcast %cst_86 : f32 to vector<16x8xf32>
    %211 = arith.mulf %209, %210 : vector<16x8xf32>
    %212 = vector.extract_strided_slice %208 {offsets = [0, 32], sizes = [16, 8], strides = [1, 1]} : vector<16x96xf32> to vector<16x8xf32>
    %213 = vector.extract_strided_slice %208 {offsets = [0, 64], sizes = [16, 8], strides = [1, 1]} : vector<16x96xf32> to vector<16x8xf32>
    %214 = vector.shape_cast %211 : vector<16x8xf32> to vector<2x8x8xf32>
    %215 = vector.shape_cast %212 : vector<16x8xf32> to vector<2x8x8xf32>
    %216 = vector.shape_cast %213 : vector<16x8xf32> to vector<2x8x8xf32>
    "tpu.trace_start"() <{level = 10 : i32, message = "bqd,bkd->bqk"}> : () -> ()
    %cst_87 = arith.constant dense<0.000000e+00> : vector<2x8x8xf32>
    %217 = tpu.matmul %214, %215, %cst_87 {dimension_numbers = #tpu.dot_dimension_numbers<[2], [2], [1], [1], [0, 0, 0, 1, 1, 1], [0], [0]>} : vector<2x8x8xf32>, vector<2x8x8xf32>, vector<2x8x8xf32> -> vector<2x8x8xf32>
    %cst_88 = arith.constant -1.000000e+30 : f32
    "tpu.trace_stop"() : () -> ()
    %218 = vector.shape_cast %4 : vector<1x8x8xi1> to vector<1x8x8xi1>
    %219 = vector.broadcast %218 : vector<1x8x8xi1> to vector<2x8x8xi1>
    %220 = vector.broadcast %cst_88 : f32 to vector<2x8x8xf32>
    %221 = arith.select %219, %217, %220 : vector<2x8x8xi1>, vector<2x8x8xf32>
    %cst_89 = arith.constant dense<0xFF800000> : vector<2x8xf32>
    %222 = vector.multi_reduction <maximumf>, %221, %cst_89 [2] : vector<2x8x8xf32> to vector<2x8xf32>
    %223 = vector.shape_cast %222 : vector<2x8xf32> to vector<2x8x1xf32>
    %224 = vector.broadcast %223 : vector<2x8x1xf32> to vector<2x8x8xf32>
    %225 = arith.subf %221, %224 : vector<2x8x8xf32>
    %226 = math.exp %225 : vector<2x8x8xf32>
    %cst_90 = arith.constant dense<0.000000e+00> : vector<2x8xf32>
    %227 = vector.multi_reduction <add>, %226, %cst_90 [2] : vector<2x8x8xf32> to vector<2x8xf32>
    %228 = vector.shape_cast %227 : vector<2x8xf32> to vector<2x8x1xf32>
    %229 = tpu.reciprocal %228 {approx = true} : vector<2x8x1xf32> -> vector<2x8x1xf32>
    %230 = vector.broadcast %229 : vector<2x8x1xf32> to vector<2x8x8xf32>
    %231 = arith.mulf %226, %230 : vector<2x8x8xf32>
    "tpu.trace_start"() <{level = 10 : i32, message = "bqk,bkd->bqd"}> : () -> ()
    %cst_91 = arith.constant dense<0.000000e+00> : vector<2x8x8xf32>
    %232 = tpu.matmul %231, %216, %cst_91 {dimension_numbers = #tpu.dot_dimension_numbers<[2], [1], [1], [2], [0, 0, 0, 1, 1, 2], [0], [0]>} : vector<2x8x8xf32>, vector<2x8x8xf32>, vector<2x8x8xf32> -> vector<2x8x8xf32>
    "tpu.trace_stop"() : () -> ()
    %233 = vector.shape_cast %232 : vector<2x8x8xf32> to vector<16x8xf32>
    %234 = vector.extract_strided_slice %208 {offsets = [0, 8], sizes = [16, 8], strides = [1, 1]} : vector<16x96xf32> to vector<16x8xf32>
    %cst_92 = arith.constant 0.353553385 : f32
    %235 = vector.broadcast %cst_92 : f32 to vector<16x8xf32>
    %236 = arith.mulf %234, %235 : vector<16x8xf32>
    %237 = vector.extract_strided_slice %208 {offsets = [0, 40], sizes = [16, 8], strides = [1, 1]} : vector<16x96xf32> to vector<16x8xf32>
    %238 = vector.extract_strided_slice %208 {offsets = [0, 72], sizes = [16, 8], strides = [1, 1]} : vector<16x96xf32> to vector<16x8xf32>
    %239 = vector.shape_cast %236 : vector<16x8xf32> to vector<2x8x8xf32>
    %240 = vector.shape_cast %237 : vector<16x8xf32> to vector<2x8x8xf32>
    %241 = vector.shape_cast %238 : vector<16x8xf32> to vector<2x8x8xf32>
    "tpu.trace_start"() <{level = 10 : i32, message = "bqd,bkd->bqk"}> : () -> ()
    %cst_93 = arith.constant dense<0.000000e+00> : vector<2x8x8xf32>
    %242 = tpu.matmul %239, %240, %cst_93 {dimension_numbers = #tpu.dot_dimension_numbers<[2], [2], [1], [1], [0, 0, 0, 1, 1, 1], [0], [0]>} : vector<2x8x8xf32>, vector<2x8x8xf32>, vector<2x8x8xf32> -> vector<2x8x8xf32>
    %cst_94 = arith.constant -1.000000e+30 : f32
    "tpu.trace_stop"() : () -> ()
    %243 = vector.shape_cast %4 : vector<1x8x8xi1> to vector<1x8x8xi1>
    %244 = vector.broadcast %243 : vector<1x8x8xi1> to vector<2x8x8xi1>
    %245 = vector.broadcast %cst_94 : f32 to vector<2x8x8xf32>
    %246 = arith.select %244, %242, %245 : vector<2x8x8xi1>, vector<2x8x8xf32>
    %cst_95 = arith.constant dense<0xFF800000> : vector<2x8xf32>
    %247 = vector.multi_reduction <maximumf>, %246, %cst_95 [2] : vector<2x8x8xf32> to vector<2x8xf32>
    %248 = vector.shape_cast %247 : vector<2x8xf32> to vector<2x8x1xf32>
    %249 = vector.broadcast %248 : vector<2x8x1xf32> to vector<2x8x8xf32>
    %250 = arith.subf %246, %249 : vector<2x8x8xf32>
    %251 = math.exp %250 : vector<2x8x8xf32>
    %cst_96 = arith.constant dense<0.000000e+00> : vector<2x8xf32>
    %252 = vector.multi_reduction <add>, %251, %cst_96 [2] : vector<2x8x8xf32> to vector<2x8xf32>
    %253 = vector.shape_cast %252 : vector<2x8xf32> to vector<2x8x1xf32>
    %254 = tpu.reciprocal %253 {approx = true} : vector<2x8x1xf32> -> vector<2x8x1xf32>
    %255 = vector.broadcast %254 : vector<2x8x1xf32> to vector<2x8x8xf32>
    %256 = arith.mulf %251, %255 : vector<2x8x8xf32>
    "tpu.trace_start"() <{level = 10 : i32, message = "bqk,bkd->bqd"}> : () -> ()
    %cst_97 = arith.constant dense<0.000000e+00> : vector<2x8x8xf32>
    %257 = tpu.matmul %256, %241, %cst_97 {dimension_numbers = #tpu.dot_dimension_numbers<[2], [1], [1], [2], [0, 0, 0, 1, 1, 2], [0], [0]>} : vector<2x8x8xf32>, vector<2x8x8xf32>, vector<2x8x8xf32> -> vector<2x8x8xf32>
    "tpu.trace_stop"() : () -> ()
    %258 = vector.shape_cast %257 : vector<2x8x8xf32> to vector<16x8xf32>
    %259 = vector.extract_strided_slice %208 {offsets = [0, 16], sizes = [16, 8], strides = [1, 1]} : vector<16x96xf32> to vector<16x8xf32>
    %cst_98 = arith.constant 0.353553385 : f32
    %260 = vector.broadcast %cst_98 : f32 to vector<16x8xf32>
    %261 = arith.mulf %259, %260 : vector<16x8xf32>
    %262 = vector.extract_strided_slice %208 {offsets = [0, 48], sizes = [16, 8], strides = [1, 1]} : vector<16x96xf32> to vector<16x8xf32>
    %263 = vector.extract_strided_slice %208 {offsets = [0, 80], sizes = [16, 8], strides = [1, 1]} : vector<16x96xf32> to vector<16x8xf32>
    %264 = vector.shape_cast %261 : vector<16x8xf32> to vector<2x8x8xf32>
    %265 = vector.shape_cast %262 : vector<16x8xf32> to vector<2x8x8xf32>
    %266 = vector.shape_cast %263 : vector<16x8xf32> to vector<2x8x8xf32>
    "tpu.trace_start"() <{level = 10 : i32, message = "bqd,bkd->bqk"}> : () -> ()
    %cst_99 = arith.constant dense<0.000000e+00> : vector<2x8x8xf32>
    %267 = tpu.matmul %264, %265, %cst_99 {dimension_numbers = #tpu.dot_dimension_numbers<[2], [2], [1], [1], [0, 0, 0, 1, 1, 1], [0], [0]>} : vector<2x8x8xf32>, vector<2x8x8xf32>, vector<2x8x8xf32> -> vector<2x8x8xf32>
    %cst_100 = arith.constant -1.000000e+30 : f32
    "tpu.trace_stop"() : () -> ()
    %268 = vector.shape_cast %4 : vector<1x8x8xi1> to vector<1x8x8xi1>
    %269 = vector.broadcast %268 : vector<1x8x8xi1> to vector<2x8x8xi1>
    %270 = vector.broadcast %cst_100 : f32 to vector<2x8x8xf32>
    %271 = arith.select %269, %267, %270 : vector<2x8x8xi1>, vector<2x8x8xf32>
    %cst_101 = arith.constant dense<0xFF800000> : vector<2x8xf32>
    %272 = vector.multi_reduction <maximumf>, %271, %cst_101 [2] : vector<2x8x8xf32> to vector<2x8xf32>
    %273 = vector.shape_cast %272 : vector<2x8xf32> to vector<2x8x1xf32>
    %274 = vector.broadcast %273 : vector<2x8x1xf32> to vector<2x8x8xf32>
    %275 = arith.subf %271, %274 : vector<2x8x8xf32>
    %276 = math.exp %275 : vector<2x8x8xf32>
    %cst_102 = arith.constant dense<0.000000e+00> : vector<2x8xf32>
    %277 = vector.multi_reduction <add>, %276, %cst_102 [2] : vector<2x8x8xf32> to vector<2x8xf32>
    %278 = vector.shape_cast %277 : vector<2x8xf32> to vector<2x8x1xf32>
    %279 = tpu.reciprocal %278 {approx = true} : vector<2x8x1xf32> -> vector<2x8x1xf32>
    %280 = vector.broadcast %279 : vector<2x8x1xf32> to vector<2x8x8xf32>
    %281 = arith.mulf %276, %280 : vector<2x8x8xf32>
    "tpu.trace_start"() <{level = 10 : i32, message = "bqk,bkd->bqd"}> : () -> ()
    %cst_103 = arith.constant dense<0.000000e+00> : vector<2x8x8xf32>
    %282 = tpu.matmul %281, %266, %cst_103 {dimension_numbers = #tpu.dot_dimension_numbers<[2], [1], [1], [2], [0, 0, 0, 1, 1, 2], [0], [0]>} : vector<2x8x8xf32>, vector<2x8x8xf32>, vector<2x8x8xf32> -> vector<2x8x8xf32>
    "tpu.trace_stop"() : () -> ()
    %283 = vector.shape_cast %282 : vector<2x8x8xf32> to vector<16x8xf32>
    %284 = vector.extract_strided_slice %208 {offsets = [0, 24], sizes = [16, 8], strides = [1, 1]} : vector<16x96xf32> to vector<16x8xf32>
    %cst_104 = arith.constant 0.353553385 : f32
    %285 = vector.broadcast %cst_104 : f32 to vector<16x8xf32>
    %286 = arith.mulf %284, %285 : vector<16x8xf32>
    %287 = vector.extract_strided_slice %208 {offsets = [0, 56], sizes = [16, 8], strides = [1, 1]} : vector<16x96xf32> to vector<16x8xf32>
    %288 = vector.extract_strided_slice %208 {offsets = [0, 88], sizes = [16, 8], strides = [1, 1]} : vector<16x96xf32> to vector<16x8xf32>
    %289 = vector.shape_cast %286 : vector<16x8xf32> to vector<2x8x8xf32>
    %290 = vector.shape_cast %287 : vector<16x8xf32> to vector<2x8x8xf32>
    %291 = vector.shape_cast %288 : vector<16x8xf32> to vector<2x8x8xf32>
    "tpu.trace_start"() <{level = 10 : i32, message = "bqd,bkd->bqk"}> : () -> ()
    %cst_105 = arith.constant dense<0.000000e+00> : vector<2x8x8xf32>
    %292 = tpu.matmul %289, %290, %cst_105 {dimension_numbers = #tpu.dot_dimension_numbers<[2], [2], [1], [1], [0, 0, 0, 1, 1, 1], [0], [0]>} : vector<2x8x8xf32>, vector<2x8x8xf32>, vector<2x8x8xf32> -> vector<2x8x8xf32>
    %cst_106 = arith.constant -1.000000e+30 : f32
    "tpu.trace_stop"() : () -> ()
    %293 = vector.shape_cast %4 : vector<1x8x8xi1> to vector<1x8x8xi1>
    %294 = vector.broadcast %293 : vector<1x8x8xi1> to vector<2x8x8xi1>
    %295 = vector.broadcast %cst_106 : f32 to vector<2x8x8xf32>
    %296 = arith.select %294, %292, %295 : vector<2x8x8xi1>, vector<2x8x8xf32>
    %cst_107 = arith.constant dense<0xFF800000> : vector<2x8xf32>
    %297 = vector.multi_reduction <maximumf>, %296, %cst_107 [2] : vector<2x8x8xf32> to vector<2x8xf32>
    %298 = vector.shape_cast %297 : vector<2x8xf32> to vector<2x8x1xf32>
    %299 = vector.broadcast %298 : vector<2x8x1xf32> to vector<2x8x8xf32>
    %300 = arith.subf %296, %299 : vector<2x8x8xf32>
    %301 = math.exp %300 : vector<2x8x8xf32>
    %cst_108 = arith.constant dense<0.000000e+00> : vector<2x8xf32>
    %302 = vector.multi_reduction <add>, %301, %cst_108 [2] : vector<2x8x8xf32> to vector<2x8xf32>
    %303 = vector.shape_cast %302 : vector<2x8xf32> to vector<2x8x1xf32>
    %304 = tpu.reciprocal %303 {approx = true} : vector<2x8x1xf32> -> vector<2x8x1xf32>
    %305 = vector.broadcast %304 : vector<2x8x1xf32> to vector<2x8x8xf32>
    %306 = arith.mulf %301, %305 : vector<2x8x8xf32>
    "tpu.trace_start"() <{level = 10 : i32, message = "bqk,bkd->bqd"}> : () -> ()
    %cst_109 = arith.constant dense<0.000000e+00> : vector<2x8x8xf32>
    %307 = tpu.matmul %306, %291, %cst_109 {dimension_numbers = #tpu.dot_dimension_numbers<[2], [1], [1], [2], [0, 0, 0, 1, 1, 2], [0], [0]>} : vector<2x8x8xf32>, vector<2x8x8xf32>, vector<2x8x8xf32> -> vector<2x8x8xf32>
    "tpu.trace_stop"() : () -> ()
    %308 = vector.shape_cast %307 : vector<2x8x8xf32> to vector<16x8xf32>
    %309 = tpu.concatenate %233, %258, %283, %308 in 1 : vector<16x8xf32>, vector<16x8xf32>, vector<16x8xf32>, vector<16x8xf32> -> vector<16x32xf32>
    %c1_110 = arith.constant 1 : index
    %c0_111 = arith.constant 0 : index
    %c0_112 = arith.constant 0 : index
    %310 = vector.load %arg4[%c1_110, %c0_111, %c0_112] : memref<2x32x32xf32, #tpu.memory_space<vmem>>, vector<1x32x32xf32>
    %311 = vector.shape_cast %310 : vector<1x32x32xf32> to vector<32x32xf32>
    %cst_113 = arith.constant dense<0.000000e+00> : vector<16x32xf32>
    %312 = tpu.matmul %309, %311, %cst_113 {dimension_numbers = #tpu.dot_dimension_numbers<[1], [0], [0], [1], [0, 0, 1, 1], [], []>} : vector<16x32xf32>, vector<32x32xf32>, vector<16x32xf32> -> vector<16x32xf32>
    %c1_114 = arith.constant 1 : index
    %c0_115 = arith.constant 0 : index
    %c0_116 = arith.constant 0 : index
    %313 = vector.load %arg5[%c1_114, %c0_115, %c0_116] : memref<2x1x32xf32, #tpu.memory_space<vmem>>, vector<1x1x32xf32>
    %314 = vector.shape_cast %313 : vector<1x1x32xf32> to vector<1x32xf32>
    %315 = vector.broadcast %314 : vector<1x32xf32> to vector<16x32xf32>
    %316 = arith.addf %312, %315 : vector<16x32xf32>
    %317 = arith.addf %181, %316 : vector<16x32xf32>
    %c1_117 = arith.constant 1 : index
    %c0_118 = arith.constant 0 : index
    %c0_119 = arith.constant 0 : index
    %318 = vector.load %arg6[%c1_117, %c0_118, %c0_119] : memref<2x1x32xf32, #tpu.memory_space<vmem>>, vector<1x1x32xf32>
    %319 = vector.shape_cast %318 : vector<1x1x32xf32> to vector<1x32xf32>
    %c1_120 = arith.constant 1 : index
    %c0_121 = arith.constant 0 : index
    %c0_122 = arith.constant 0 : index
    %320 = vector.load %arg7[%c1_120, %c0_121, %c0_122] : memref<2x1x32xf32, #tpu.memory_space<vmem>>, vector<1x1x32xf32>
    %321 = vector.shape_cast %320 : vector<1x1x32xf32> to vector<1x32xf32>
    %cst_123 = arith.constant dense<0.000000e+00> : vector<16xf32>
    %322 = vector.multi_reduction <add>, %317, %cst_123 [1] : vector<16x32xf32> to vector<16xf32>
    %323 = vector.shape_cast %322 : vector<16xf32> to vector<16x1xf32>
    %cst_124 = arith.constant 3.200000e+01 : f32
    %324 = vector.broadcast %cst_124 : f32 to vector<16x1xf32>
    %325 = arith.divf %323, %324 : vector<16x1xf32>
    %326 = vector.broadcast %325 : vector<16x1xf32> to vector<16x32xf32>
    %327 = arith.subf %317, %326 : vector<16x32xf32>
    %328 = arith.mulf %327, %327 : vector<16x32xf32>
    %cst_125 = arith.constant dense<0.000000e+00> : vector<16xf32>
    %329 = vector.multi_reduction <add>, %328, %cst_125 [1] : vector<16x32xf32> to vector<16xf32>
    %330 = vector.shape_cast %329 : vector<16xf32> to vector<16x1xf32>
    %cst_126 = arith.constant 3.200000e+01 : f32
    %331 = vector.broadcast %cst_126 : f32 to vector<16x1xf32>
    %332 = arith.divf %330, %331 : vector<16x1xf32>
    %cst_127 = arith.constant 9.99999974E-6 : f32
    %333 = vector.broadcast %cst_127 : f32 to vector<16x1xf32>
    %334 = arith.addf %332, %333 : vector<16x1xf32>
    %335 = math.rsqrt %334 : vector<16x1xf32>
    %336 = vector.broadcast %335 : vector<16x1xf32> to vector<16x32xf32>
    %337 = arith.mulf %327, %336 : vector<16x32xf32>
    %338 = vector.broadcast %319 : vector<1x32xf32> to vector<16x32xf32>
    %339 = arith.mulf %337, %338 : vector<16x32xf32>
    %340 = vector.broadcast %321 : vector<1x32xf32> to vector<16x32xf32>
    %341 = arith.addf %339, %340 : vector<16x32xf32>
    %c1_128 = arith.constant 1 : index
    %c0_129 = arith.constant 0 : index
    %c0_130 = arith.constant 0 : index
    %342 = vector.load %arg8[%c1_128, %c0_129, %c0_130] : memref<2x32x128xf32, #tpu.memory_space<vmem>>, vector<1x32x128xf32>
    %343 = vector.shape_cast %342 : vector<1x32x128xf32> to vector<32x128xf32>
    %cst_131 = arith.constant dense<0.000000e+00> : vector<16x128xf32>
    %344 = tpu.matmul %341, %343, %cst_131 {dimension_numbers = #tpu.dot_dimension_numbers<[1], [0], [0], [1], [0, 0, 1, 1], [], []>} : vector<16x32xf32>, vector<32x128xf32>, vector<16x128xf32> -> vector<16x128xf32>
    %c1_132 = arith.constant 1 : index
    %c0_133 = arith.constant 0 : index
    %c0_134 = arith.constant 0 : index
    %345 = vector.load %arg9[%c1_132, %c0_133, %c0_134] : memref<2x1x128xf32, #tpu.memory_space<vmem>>, vector<1x1x128xf32>
    %346 = vector.shape_cast %345 : vector<1x1x128xf32> to vector<1x128xf32>
    %347 = vector.broadcast %346 : vector<1x128xf32> to vector<16x128xf32>
    %348 = arith.addf %344, %347 : vector<16x128xf32>
    %cst_135 = arith.constant 0.000000e+00 : f32
    %349 = vector.broadcast %cst_135 : f32 to vector<16x128xf32>
    %350 = arith.maximumf %348, %349 : vector<16x128xf32>
    %c1_136 = arith.constant 1 : index
    %c0_137 = arith.constant 0 : index
    %c0_138 = arith.constant 0 : index
    %351 = vector.load %arg10[%c1_136, %c0_137, %c0_138] : memref<2x128x32xf32, #tpu.memory_space<vmem>>, vector<1x128x32xf32>
    %352 = vector.shape_cast %351 : vector<1x128x32xf32> to vector<128x32xf32>
    %cst_139 = arith.constant dense<0.000000e+00> : vector<16x32xf32>
    %353 = tpu.matmul %350, %352, %cst_139 {dimension_numbers = #tpu.dot_dimension_numbers<[1], [0], [0], [1], [0, 0, 1, 1], [], []>} : vector<16x128xf32>, vector<128x32xf32>, vector<16x32xf32> -> vector<16x32xf32>
    %c1_140 = arith.constant 1 : index
    %c0_141 = arith.constant 0 : index
    %c0_142 = arith.constant 0 : index
    %354 = vector.load %arg11[%c1_140, %c0_141, %c0_142] : memref<2x1x32xf32, #tpu.memory_space<vmem>>, vector<1x1x32xf32>
    %355 = vector.shape_cast %354 : vector<1x1x32xf32> to vector<1x32xf32>
    %356 = vector.broadcast %355 : vector<1x32xf32> to vector<16x32xf32>
    %357 = arith.addf %353, %356 : vector<16x32xf32>
    %358 = arith.addf %317, %357 : vector<16x32xf32>
    %c0_143 = arith.constant 0 : index
    %c0_144 = arith.constant 0 : index
    %359 = vector.load %arg12[%c0_143, %c0_144] : memref<1x32xf32, #tpu.memory_space<vmem>>, vector<1x32xf32>
    %c0_145 = arith.constant 0 : index
    %c0_146 = arith.constant 0 : index
    %360 = vector.load %arg13[%c0_145, %c0_146] : memref<1x32xf32, #tpu.memory_space<vmem>>, vector<1x32xf32>
    %cst_147 = arith.constant dense<0.000000e+00> : vector<16xf32>
    %361 = vector.multi_reduction <add>, %358, %cst_147 [1] : vector<16x32xf32> to vector<16xf32>
    %362 = vector.shape_cast %361 : vector<16xf32> to vector<16x1xf32>
    %cst_148 = arith.constant 3.200000e+01 : f32
    %363 = vector.broadcast %cst_148 : f32 to vector<16x1xf32>
    %364 = arith.divf %362, %363 : vector<16x1xf32>
    %365 = vector.broadcast %364 : vector<16x1xf32> to vector<16x32xf32>
    %366 = arith.subf %358, %365 : vector<16x32xf32>
    %367 = arith.mulf %366, %366 : vector<16x32xf32>
    %cst_149 = arith.constant dense<0.000000e+00> : vector<16xf32>
    %368 = vector.multi_reduction <add>, %367, %cst_149 [1] : vector<16x32xf32> to vector<16xf32>
    %369 = vector.shape_cast %368 : vector<16xf32> to vector<16x1xf32>
    %cst_150 = arith.constant 3.200000e+01 : f32
    %370 = vector.broadcast %cst_150 : f32 to vector<16x1xf32>
    %371 = arith.divf %369, %370 : vector<16x1xf32>
    %cst_151 = arith.constant 9.99999974E-6 : f32
    %372 = vector.broadcast %cst_151 : f32 to vector<16x1xf32>
    %373 = arith.addf %371, %372 : vector<16x1xf32>
    %374 = math.rsqrt %373 : vector<16x1xf32>
    %375 = vector.broadcast %374 : vector<16x1xf32> to vector<16x32xf32>
    %376 = arith.mulf %366, %375 : vector<16x32xf32>
    %377 = vector.broadcast %359 : vector<1x32xf32> to vector<16x32xf32>
    %378 = arith.mulf %376, %377 : vector<16x32xf32>
    %379 = vector.broadcast %360 : vector<1x32xf32> to vector<16x32xf32>
    %380 = arith.addf %378, %379 : vector<16x32xf32>
    %c0_152 = arith.constant 0 : index
    %c0_153 = arith.constant 0 : index
    %381 = vector.load %arg14[%c0_152, %c0_153] : memref<32x128xf32, #tpu.memory_space<vmem>>, vector<32x128xf32>
    %cst_154 = arith.constant dense<0.000000e+00> : vector<16x128xf32>
    %382 = tpu.matmul %380, %381, %cst_154 {dimension_numbers = #tpu.dot_dimension_numbers<[1], [0], [0], [1], [0, 0, 1, 1], [], []>} : vector<16x32xf32>, vector<32x128xf32>, vector<16x128xf32> -> vector<16x128xf32>
    %c0_155 = arith.constant 0 : index
    %c0_156 = arith.constant 0 : index
    %383 = vector.load %arg15[%c0_155, %c0_156] : memref<1x128xf32, #tpu.memory_space<vmem>>, vector<1x128xf32>
    %384 = vector.broadcast %383 : vector<1x128xf32> to vector<16x128xf32>
    %385 = arith.addf %382, %384 : vector<16x128xf32>
    %c0_157 = arith.constant 0 : index
    %c0_158 = arith.constant 0 : index
    %386 = vector.load %arg16[%c0_157, %c0_158] : memref<16x128xf32, #tpu.memory_space<vmem>>, vector<16x128xf32>
    tpu.vector_store %arg16[%c0_157, %c0_158], %385 {strides = array<i32>} : memref<16x128xf32, #tpu.memory_space<vmem>>, vector<16x128xf32>,
    return
  }
}

</mosaic_0001>

<llo_original>
// kernel: tpu_custom_call.1
$region0: #{tpu_custom_call.1}
  #allocation0 [shape = 'u32[]', space=smem, size = 0x4, offset = 0x4, fixed_abs, tag = 'smem constant byte address 0x4 - core index']
  #allocation1 [shape = 'u32[144,128]{1,0:T(1,128)}', space=vmem, size = 0x12000, scoped, tag = 'internal scratch']
  %s0 = inlined_call_operand.vmem [shape: f32[16,32], index: 0, kind: input, shape index: {}]
  %s1 = inlined_call_operand.vmem [shape: f32[2,1,32], index: 1, kind: input, shape index: {}]
  %s2 = inlined_call_operand.vmem [shape: f32[2,1,32], index: 2, kind: input, shape index: {}]
  %s3 = inlined_call_operand.vmem [shape: f32[2,32,96], index: 3, kind: input, shape index: {}]
  %s4 = inlined_call_operand.vmem [shape: f32[2,32,32], index: 4, kind: input, shape index: {}]
  %s5 = inlined_call_operand.vmem [shape: f32[2,1,32], index: 5, kind: input, shape index: {}]
  %s6 = inlined_call_operand.vmem [shape: f32[2,1,32], index: 6, kind: input, shape index: {}]
  %s7 = inlined_call_operand.vmem [shape: f32[2,1,32], index: 7, kind: input, shape index: {}]
  %s8 = inlined_call_operand.vmem [shape: f32[2,32,128], index: 8, kind: input, shape index: {}]
  %s9 = inlined_call_operand.vmem [shape: f32[2,1,128], index: 9, kind: input, shape index: {}]
  %s10 = inlined_call_operand.vmem [shape: f32[2,128,32], index: 10, kind: input, shape index: {}]
  %s11 = inlined_call_operand.vmem [shape: f32[2,1,32], index: 11, kind: input, shape index: {}]
  %s12 = inlined_call_operand.vmem [shape: f32[1,32], index: 12, kind: input, shape index: {}]
  %s13 = inlined_call_operand.vmem [shape: f32[1,32], index: 13, kind: input, shape index: {}]
  %s14 = inlined_call_operand.vmem [shape: f32[32,128], index: 14, kind: input, shape index: {}]
  %s15 = inlined_call_operand.vmem [shape: f32[1,128], index: 15, kind: input, shape index: {}]
  %s16 = inlined_call_operand.hbm [shape: f32[16,128], index: 16, kind: output, shape index: {}]
  %s17 = sld [smem:[#allocation0]]
  $region74: #{tpu_custom_call.1} parent=0
    _
  %s19 = ssub.s32 1, %s17
  %s20 = scalar_select 0, %s19, %s17
  $region1: #{tpu_custom_call.1} parent=0
    #allocation2 [shape = 'u8[8192]{0}', space=vmem, size = 0x2000, scoped, tag = 'output window, operand 0, single buffered']
    #allocation3 [shape = 's32[1]{0}', space=sflag, size = 0x4, scoped, tag = 'scoped memory for tpu_custom_call.1']
    %21 = vsyncpa [#allocation3], 0
    // Predicated region
    $region2: #{tpu_custom_call.1} parent=1 // pred_check
      _
    $region3: #{tpu_custom_call.1} parent=1 // pred_check_branch
      %23 = sbr.rel (0) target = $region5
    $region4: #{tpu_custom_call.1} parent=1 // pred_region
      _
    $region5: #{tpu_custom_call.1} parent=1 // pred_fallthru
      _
    // Predicated region
    $region6: #{tpu_custom_call.1} parent=1 // pred_check
      _
    $region7: #{tpu_custom_call.1} parent=1 // pred_check_branch
      %25 = sbr.rel (0) target = $region9
    $region8: #{tpu_custom_call.1} parent=1 // pred_region
      _
    $region9: #{tpu_custom_call.1} parent=1 // pred_fallthru
      _
    // Predicated region
    $region10: #{tpu_custom_call.1} parent=1 // pred_check
      _
    $region11: #{tpu_custom_call.1} parent=1 // pred_check_branch
      %27 = sbr.rel (0) target = $region13
    $region12: #{tpu_custom_call.1} parent=1 // pred_region
      _
    $region13: #{tpu_custom_call.1} parent=1 // pred_fallthru
      _
    // Predicated region
    $region14: #{tpu_custom_call.1} parent=1 // pred_check
      _
    $region15: #{tpu_custom_call.1} parent=1 // pred_check_branch
      %29 = sbr.rel (0) target = $region17
    $region16: #{tpu_custom_call.1} parent=1 // pred_region
      _
    $region17: #{tpu_custom_call.1} parent=1 // pred_fallthru
      _
    // Predicated region
    $region18: #{tpu_custom_call.1} parent=1 // pred_check
      _
    $region19: #{tpu_custom_call.1} parent=1 // pred_check_branch
      %31 = sbr.rel (0) target = $region21
    $region20: #{tpu_custom_call.1} parent=1 // pred_region
      _
    $region21: #{tpu_custom_call.1} parent=1 // pred_fallthru
      _
    // Predicated region
    $region22: #{tpu_custom_call.1} parent=1 // pred_check
      _
    $region23: #{tpu_custom_call.1} parent=1 // pred_check_branch
      %33 = sbr.rel (0) target = $region25
    $region24: #{tpu_custom_call.1} parent=1 // pred_region
      _
    $region25: #{tpu_custom_call.1} parent=1 // pred_fallthru
      _
    // Predicated region
    $region26: #{tpu_custom_call.1} parent=1 // pred_check
      _
    $region27: #{tpu_custom_call.1} parent=1 // pred_check_branch
      %35 = sbr.rel (0) target = $region29
    $region28: #{tpu_custom_call.1} parent=1 // pred_region
      _
    $region29: #{tpu_custom_call.1} parent=1 // pred_fallthru
      _
    // Predicated region
    $region30: #{tpu_custom_call.1} parent=1 // pred_check
      _
    $region31: #{tpu_custom_call.1} parent=1 // pred_check_branch
      %37 = sbr.rel (0) target = $region33
    $region32: #{tpu_custom_call.1} parent=1 // pred_region
      _
    $region33: #{tpu_custom_call.1} parent=1 // pred_fallthru
      _
    // Predicated region
    $region34: #{tpu_custom_call.1} parent=1 // pred_check
      _
    $region35: #{tpu_custom_call.1} parent=1 // pred_check_branch
      %39 = sbr.rel (0) target = $region37
    $region36: #{tpu_custom_call.1} parent=1 // pred_region
      _
    $region37: #{tpu_custom_call.1} parent=1 // pred_fallthru
      _
    // Predicated region
    $region38: #{tpu_custom_call.1} parent=1 // pred_check
      _
    $region39: #{tpu_custom_call.1} parent=1 // pred_check_branch
      %41 = sbr.rel (0) target = $region41
    $region40: #{tpu_custom_call.1} parent=1 // pred_region
      _
    $region41: #{tpu_custom_call.1} parent=1 // pred_fallthru
      _
    // Predicated region
    $region42: #{tpu_custom_call.1} parent=1 // pred_check
      _
    $region43: #{tpu_custom_call.1} parent=1 // pred_check_branch
      %43 = sbr.rel (0) target = $region45
    $region44: #{tpu_custom_call.1} parent=1 // pred_region
      _
    $region45: #{tpu_custom_call.1} parent=1 // pred_fallthru
      _
    // Predicated region
    $region46: #{tpu_custom_call.1} parent=1 // pred_check
      _
    $region47: #{tpu_custom_call.1} parent=1 // pred_check_branch
      %45 = sbr.rel (0) target = $region49
    $region48: #{tpu_custom_call.1} parent=1 // pred_region
      _
    $region49: #{tpu_custom_call.1} parent=1 // pred_fallthru
      _
    // Predicated region
    $region50: #{tpu_custom_call.1} parent=1 // pred_check
      _
    $region51: #{tpu_custom_call.1} parent=1 // pred_check_branch
      %47 = sbr.rel (0) target = $region53
    $region52: #{tpu_custom_call.1} parent=1 // pred_region
      _
    $region53: #{tpu_custom_call.1} parent=1 // pred_fallthru
      _
    // Predicated region
    $region54: #{tpu_custom_call.1} parent=1 // pred_check
      _
    $region55: #{tpu_custom_call.1} parent=1 // pred_check_branch
      %49 = sbr.rel (0) target = $region57
    $region56: #{tpu_custom_call.1} parent=1 // pred_region
      _
    $region57: #{tpu_custom_call.1} parent=1 // pred_fallthru
      _
    // Predicated region
    $region58: #{tpu_custom_call.1} parent=1 // pred_check
      _
    $region59: #{tpu_custom_call.1} parent=1 // pred_check_branch
      %51 = sbr.rel (0) target = $region61
    $region60: #{tpu_custom_call.1} parent=1 // pred_region
      _
    $region61: #{tpu_custom_call.1} parent=1 // pred_fallthru
      _
    // Predicated region
    $region62: #{tpu_custom_call.1} parent=1 // pred_check
      _
    $region63: #{tpu_custom_call.1} parent=1 // pred_check_branch
      %53 = sbr.rel (0) target = $region65
    $region64: #{tpu_custom_call.1} parent=1 // pred_region
      _
    $region65: #{tpu_custom_call.1} parent=1 // pred_fallthru
      _
    %v54 = vld [vmem:[%s0] sm:$0xff]
    %v55 = vld [vmem:[%s0 + $0x8] sm:$0xff]
    %v56 = vlaneseq
    %v57 = vshrl.u32 %v56, 7
    %v58 = vlaneseq
    %v59 = vand.u32 %v58, 127
    %vm60 = vcmp.le.s32.totalorder %v59, %v57
    %v61 = vld [vmem:[%s1] sm:$0x1]
    %v62 = vld [vmem:[%s2] sm:$0x1]
    %vm63 = vcmask 261120
    %v64 = vsel %vm63, %v54, 0.0
    %65 = vadd.xlane.f32.xlu0 %v64
    %v66 = vpop.xlane.xlu0 %65
    %v67 = vsel %vm63, %v55, 0.0
    %68 = vadd.xlane.f32.xlu0 %v67
    %v69 = vpop.xlane.xlu0 %68
    %v70 = vrcp.pop 32.0
    %v71 = vmul.f32 %v66, %v70
    %v72 = vmul.f32 %v69, %v70
    %v73 = vsub.f32 %v54, %v71
    %v74 = vsub.f32 %v55, %v72
    %v75 = vmul.f32 %v73, %v73
    %v76 = vmul.f32 %v74, %v74
    %v77 = vsel %vm63, %v75, 0.0
    %78 = vadd.xlane.f32.xlu0 %v77
    %v79 = vpop.xlane.xlu0 %78
    %v80 = vsel %vm63, %v76, 0.0
    %81 = vadd.xlane.f32.xlu0 %v80
    %v82 = vpop.xlane.xlu0 %81
    %v83 = vmul.f32 %v79, %v70
    %v84 = vmul.f32 %v82, %v70
    %v85 = vadd.f32 %v83, 1e-05
    %v86 = vadd.f32 %v84, 1e-05
    %v87 = vrsqrt.pop %v85
    %v88 = vrsqrt.pop %v86
    %v89 = vmul.f32 %v73, %v87
    %v90 = vmul.f32 %v74, %v88
    %v92 = vlaneseq
    %v93 = vshrl.u32 %v92, 7
    %v94 = vsub.s32 0, %v93
    %v95 = vrot.slane %v61, %v94
    %v97 = vmul.f32 %v89, %v95
    %v98 = vmul.f32 %v90, %v95
    %v100 = vlaneseq
    %v101 = vshrl.u32 %v100, 7
    %v102 = vsub.s32 0, %v101
    %v103 = vrot.slane %v62, %v102
    %v105 = vadd.f32 %v97, %v103
    %v106 = vadd.f32 %v98, %v103
    %v107 = vld [vmem:[%s3] sm:$0xff]
    %v108 = vld [vmem:[%s3 + $0x8] sm:$0xff]
    %v109 = vld [vmem:[%s3 + $0x10] sm:$0xff]
    %v110 = vld [vmem:[%s3 + $0x18] sm:$0xff]
    %v112 = vsel %vm63, %v105, 0
    %v115 = vsel %vm63, %v106, 0
    %117 = vmatprep.subr.mxu0 0.0
    %118 = vmatpush1.msra.mxu0 %v107
    %119 = vmatprep.subr.mxu0 0.0
    %120 = vmatpush1.msra.mxu0 %v108
    %121 = vmatprep.subr.mxu0 0.0
    %122 = vmatpush1.msra.mxu0 %v109
    %123 = vmatprep.subr.mxu0 0.0
    %124 = vmatpush1.msra.mxu0 %v110
    %125 = vmatprep.subr.mxu0 0.0
    %126 = vmatpush1.msra.mxu0 0.0
    %127 = vmatprep.subr.mxu0 0.0
    %128 = vmatpush1.msra.mxu0 0.0
    %129 = vmatprep.subr.mxu0 0.0
    %130 = vmatpush1.msra.mxu0 0.0
    %131 = vmatprep.subr.mxu0 0.0
    %132 = vmatpush1.msra.mxu0 0.0
    %133 = vmatprep.subr.mxu0 0.0
    %134 = vmatpush1.msra.mxu0 0.0
    %135 = vmatprep.subr.mxu0 0.0
    %136 = vmatpush1.msra.mxu0 0.0
    %137 = vmatprep.subr.mxu0 0.0
    %138 = vmatpush1.msra.mxu0 0.0
    %139 = vmatprep.subr.mxu0 0.0
    %140 = vmatpush1.msra.mxu0 0.0
    %141 = vmatprep.subr.mxu0 0.0
    %142 = vmatpush1.msra.mxu0 0.0
    %143 = vmatprep.subr.mxu0 0.0
    %144 = vmatpush1.msra.mxu0 0.0
    %145 = vmatprep.subr.mxu0 0.0
    %146 = vmatpush1.msra.mxu0 0.0
    %147 = vmatprep.subr.mxu0 0.0
    %148 = vmatpush1.msra.mxu0 0.0
    %149 = vmatprep.subr.mxu0 0.0
    %150 = vmatpush1.msra.mxu0 0.0
    %151 = vmatprep.subr.mxu0 0.0
    %152 = vmatpush1.msra.mxu0 0.0
    %153 = vmatprep.subr.mxu0 0.0
    %154 = vmatpush1.msra.mxu0 0.0
    %155 = vmatprep.subr.mxu0 0.0
    %156 = vmatpush1.msra.mxu0 0.0
    %157 = vmatprep.subr.mxu0 0.0
    %158 = vmatpush1.msra.mxu0 0.0
    %159 = vmatprep.subr.mxu0 0.0
    %160 = vmatpush1.msra.mxu0 0.0
    %161 = vmatprep.subr.mxu0 0.0
    %162 = vmatpush1.msra.mxu0 0.0
    %163 = vmatprep.subr.mxu0 0.0
    %164 = vmatpush1.msra.mxu0 0.0
    %165 = vmatprep.subr.mxu0 0.0
    %166 = vmatpush1.msra.mxu0 0.0
    %167 = vmatprep.subr.mxu0 0.0
    %168 = vmatpush1.msra.mxu0 0.0
    %169 = vmatprep.subr.mxu0 0.0
    %170 = vmatpush1.msra.mxu0 0.0
    %171 = vmatprep.subr.mxu0 0.0
    %172 = vmatpush1.msra.mxu0 0.0
    %173 = vmatprep.subr.mxu0 0.0
    %174 = vmatpush1.msra.mxu0 0.0
    %175 = vmatprep.subr.mxu0 0.0
    %176 = vmatpush1.msra.mxu0 0.0
    %177 = vmatprep.subr.mxu0 0.0
    %178 = vmatpush1.msra.mxu0 0.0
    %179 = vmatprep.subr.mxu0 0.0
    %180 = vmatpush1.msra.mxu0 0.0
    %181 = vmatprep.mubr.f32.mxu0 0.0
    %182 = vmatmul.mubr.f32.gmra.mrb[0].mxu0 %v112
    %v183 = vpop.f32.mrb[0].mxu0
    %v184 = vadd.f32 0.0, %v183
    %v185 = vpop.f32.mrb[0].mxu0
    %186 = vmatprep.mubr.f32.mxu0 0.0
    %187 = vmatmul.mubr.f32.gmra.mrb[0].mxu0 %v115
    %v188 = vpop.f32.mrb[0].mxu0
    %v189 = vadd.f32 0.0, %v188
    %v190 = vpop.f32.mrb[0].mxu0
    %191 = vdwg.mxu0
    %v192 = vmul.f32 %v184, 0.35355338
    %v193 = vmul.f32 %v189, 0.35355338
    %195 = vrot.lane.b32.xlu0 %v184, 96
    %v196 = vpop.permute.xlu0 %195
    %vm197 = vcmask 64512
    %v199 = vsel %vm197, %v192, 0
    %v201 = vsel %vm197, %v196, 0
    %203 = vmatprep.subr.mxu0 0.0
    %204 = vmatpush1.xpose.msra.mxu0 %v201
    %205 = vmatprep.subr.mxu0 0.0
    %206 = vmatpush1.xpose.msra.mxu0 0.0
    %207 = vmatprep.subr.mxu0 0.0
    %208 = vmatpush1.xpose.msra.mxu0 0.0
    %209 = vmatprep.subr.mxu0 0.0
    %210 = vmatpush1.xpose.msra.mxu0 0.0
    %211 = vmatprep.subr.mxu0 0.0
    %212 = vmatpush1.xpose.msra.mxu0 0.0
    %213 = vmatprep.subr.mxu0 0.0
    %214 = vmatpush1.xpose.msra.mxu0 0.0
    %215 = vmatprep.subr.mxu0 0.0
    %216 = vmatpush1.xpose.msra.mxu0 0.0
    %217 = vmatprep.subr.mxu0 0.0
    %218 = vmatpush1.xpose.msra.mxu0 0.0
    %219 = vmatprep.subr.mxu0 0.0
    %220 = vmatpush1.xpose.msra.mxu0 0.0
    %221 = vmatprep.subr.mxu0 0.0
    %222 = vmatpush1.xpose.msra.mxu0 0.0
    %223 = vmatprep.subr.mxu0 0.0
    %224 = vmatpush1.xpose.msra.mxu0 0.0
    %225 = vmatprep.subr.mxu0 0.0
    %226 = vmatpush1.xpose.msra.mxu0 0.0
    %227 = vmatprep.subr.mxu0 0.0
    %228 = vmatpush1.xpose.msra.mxu0 0.0
    %229 = vmatprep.subr.mxu0 0.0
    %230 = vmatpush1.xpose.msra.mxu0 0.0
    %231 = vmatprep.subr.mxu0 0.0
    %232 = vmatpush1.xpose.msra.mxu0 0.0
    %233 = vmatprep.subr.mxu0 0.0
    %234 = vmatpush1.xpose.msra.mxu0 0.0
    %235 = vmatprep.subr.mxu0 0.0
    %236 = vmatpush1.xpose.msra.mxu0 0.0
    %237 = vmatprep.subr.mxu0 0.0
    %238 = vmatpush1.xpose.msra.mxu0 0.0
    %239 = vmatprep.subr.mxu0 0.0
    %240 = vmatpush1.xpose.msra.mxu0 0.0
    %241 = vmatprep.subr.mxu0 0.0
    %242 = vmatpush1.xpose.msra.mxu0 0.0
    %243 = vmatprep.subr.mxu0 0.0
    %244 = vmatpush1.xpose.msra.mxu0 0.0
    %245 = vmatprep.subr.mxu0 0.0
    %246 = vmatpush1.xpose.msra.mxu0 0.0
    %247 = vmatprep.subr.mxu0 0.0
    %248 = vmatpush1.xpose.msra.mxu0 0.0
    %249 = vmatprep.subr.mxu0 0.0
    %250 = vmatpush1.xpose.msra.mxu0 0.0
    %251 = vmatprep.subr.mxu0 0.0
    %252 = vmatpush1.xpose.msra.mxu0 0.0
    %253 = vmatprep.subr.mxu0 0.0
    %254 = vmatpush1.xpose.msra.mxu0 0.0
    %255 = vmatprep.subr.mxu0 0.0
    %256 = vmatpush1.xpose.msra.mxu0 0.0
    %257 = vmatprep.subr.mxu0 0.0
    %258 = vmatpush1.xpose.msra.mxu0 0.0
    %259 = vmatprep.subr.mxu0 0.0
    %260 = vmatpush1.xpose.msra.mxu0 0.0
    %261 = vmatprep.subr.mxu0 0.0
    %262 = vmatpush1.xpose.msra.mxu0 0.0
    %263 = vmatprep.subr.mxu0 0.0
    %264 = vmatpush1.xpose.msra.mxu0 0.0
    %265 = vmatprep.subr.mxu0 0.0
    %266 = vmatpush1.xpose.msra.mxu0 0.0
    %267 = vmatprep.mubr.f32.mxu0 0.0
    %268 = vmatmul.mubr.f32.gmra.mrb[0].mxu0 %v199
    %v269 = vpop.f32.mrb[0].mxu0
    %v270 = vadd.f32 0.0, %v269
    %v271 = vpop.f32.mrb[0].mxu0
    %272 = vdwg.mxu0
    %274 = vrot.lane.b32.xlu0 %v189, 96
    %v275 = vpop.permute.xlu0 %274
    %v277 = vsel %vm197, %v193, 0
    %v279 = vsel %vm197, %v275, 0
    %281 = vmatprep.subr.mxu0 0.0
    %282 = vmatpush1.xpose.msra.mxu0 %v279
    %283 = vmatprep.subr.mxu0 0.0
    %284 = vmatpush1.xpose.msra.mxu0 0.0
    %285 = vmatprep.subr.mxu0 0.0
    %286 = vmatpush1.xpose.msra.mxu0 0.0
    %287 = vmatprep.subr.mxu0 0.0
    %288 = vmatpush1.xpose.msra.mxu0 0.0
    %289 = vmatprep.subr.mxu0 0.0
    %290 = vmatpush1.xpose.msra.mxu0 0.0
    %291 = vmatprep.subr.mxu0 0.0
    %292 = vmatpush1.xpose.msra.mxu0 0.0
    %293 = vmatprep.subr.mxu0 0.0
    %294 = vmatpush1.xpose.msra.mxu0 0.0
    %295 = vmatprep.subr.mxu0 0.0
    %296 = vmatpush1.xpose.msra.mxu0 0.0
    %297 = vmatprep.subr.mxu0 0.0
    %298 = vmatpush1.xpose.msra.mxu0 0.0
    %299 = vmatprep.subr.mxu0 0.0
    %300 = vmatpush1.xpose.msra.mxu0 0.0
    %301 = vmatprep.subr.mxu0 0.0
    %302 = vmatpush1.xpose.msra.mxu0 0.0
    %303 = vmatprep.subr.mxu0 0.0
    %304 = vmatpush1.xpose.msra.mxu0 0.0
    %305 = vmatprep.subr.mxu0 0.0
    %306 = vmatpush1.xpose.msra.mxu0 0.0
    %307 = vmatprep.subr.mxu0 0.0
    %308 = vmatpush1.xpose.msra.mxu0 0.0
    %309 = vmatprep.subr.mxu0 0.0
    %310 = vmatpush1.xpose.msra.mxu0 0.0
    %311 = vmatprep.subr.mxu0 0.0
    %312 = vmatpush1.xpose.msra.mxu0 0.0
    %313 = vmatprep.subr.mxu0 0.0
    %314 = vmatpush1.xpose.msra.mxu0 0.0
    %315 = vmatprep.subr.mxu0 0.0
    %316 = vmatpush1.xpose.msra.mxu0 0.0
    %317 = vmatprep.subr.mxu0 0.0
    %318 = vmatpush1.xpose.msra.mxu0 0.0
    %319 = vmatprep.subr.mxu0 0.0
    %320 = vmatpush1.xpose.msra.mxu0 0.0
    %321 = vmatprep.subr.mxu0 0.0
    %322 = vmatpush1.xpose.msra.mxu0 0.0
    %323 = vmatprep.subr.mxu0 0.0
    %324 = vmatpush1.xpose.msra.mxu0 0.0
    %325 = vmatprep.subr.mxu0 0.0
    %326 = vmatpush1.xpose.msra.mxu0 0.0
    %327 = vmatprep.subr.mxu0 0.0
    %328 = vmatpush1.xpose.msra.mxu0 0.0
    %329 = vmatprep.subr.mxu0 0.0
    %330 = vmatpush1.xpose.msra.mxu0 0.0
    %331 = vmatprep.subr.mxu0 0.0
    %332 = vmatpush1.xpose.msra.mxu0 0.0
    %333 = vmatprep.subr.mxu0 0.0
    %334 = vmatpush1.xpose.msra.mxu0 0.0
    %335 = vmatprep.subr.mxu0 0.0
    %336 = vmatpush1.xpose.msra.mxu0 0.0
    %337 = vmatprep.subr.mxu0 0.0
    %338 = vmatpush1.xpose.msra.mxu0 0.0
    %339 = vmatprep.subr.mxu0 0.0
    %340 = vmatpush1.xpose.msra.mxu0 0.0
    %341 = vmatprep.subr.mxu0 0.0
    %342 = vmatpush1.xpose.msra.mxu0 0.0
    %343 = vmatprep.subr.mxu0 0.0
    %344 = vmatpush1.xpose.msra.mxu0 0.0
    %345 = vmatprep.mubr.f32.mxu0 0.0
    %346 = vmatmul.mubr.f32.gmra.mrb[0].mxu0 %v277
    %v347 = vpop.f32.mrb[0].mxu0
    %v348 = vadd.f32 0.0, %v347
    %v349 = vpop.f32.mrb[0].mxu0
    %350 = vdwg.mxu0
    %v351 = vsel %vm60, 1, 0
    %vm352 = vcmp.eq.s32.totalorder %v351, 1
    %v353 = vsel %vm352, %v270, -1e+30
    %v354 = vsel %vm352, %v348, -1e+30
    %v355 = vsel %vm197, %v353, -inf
    %356 = vmax.xlane.f32.xlu0 %v355
    %v357 = vpop.xlane.xlu0 %356
    %v358 = vsel %vm197, %v354, -inf
    %359 = vmax.xlane.f32.xlu0 %v358
    %v360 = vpop.xlane.xlu0 %359
    %v361 = vsub.f32 %v353, %v357
    %v362 = vsub.f32 %v354, %v360
    %v363 = vmul.f32 %v361, 1.442695
    %v364 = vpow.pop %v363
    %v365 = vmul.f32 %v362, 1.442695
    %v366 = vpow.pop %v365
    %v367 = vsel %vm197, %v364, 0.0
    %368 = vadd.xlane.f32.xlu0 %v367
    %v369 = vpop.xlane.xlu0 %368
    %v370 = vsel %vm197, %v366, 0.0
    %371 = vadd.xlane.f32.xlu0 %v370
    %v372 = vpop.xlane.xlu0 %371
    %v373 = vrcp.pop %v369
    %v374 = vrcp.pop %v372
    %v375 = vmul.f32 %v364, %v373
    %v376 = vmul.f32 %v366, %v374
    %377 = vrot.lane.b32.xlu0 %v184, 64
    %v378 = vpop.permute.xlu0 %377
    %v381 = vsel %vm197, %v375, 0
    %383 = vmatprep.subr.mxu0 0.0
    %384 = vmatpush1.msra.mxu0 %v378
    %385 = vmatprep.subr.mxu0 0.0
    %386 = vmatpush1.msra.mxu0 0.0
    %387 = vmatprep.subr.mxu0 0.0
    %388 = vmatpush1.msra.mxu0 0.0
    %389 = vmatprep.subr.mxu0 0.0
    %390 = vmatpush1.msra.mxu0 0.0
    %391 = vmatprep.subr.mxu0 0.0
    %392 = vmatpush1.msra.mxu0 0.0
    %393 = vmatprep.subr.mxu0 0.0
    %394 = vmatpush1.msra.mxu0 0.0
    %395 = vmatprep.subr.mxu0 0.0
    %396 = vmatpush1.msra.mxu0 0.0
    %397 = vmatprep.subr.mxu0 0.0
    %398 = vmatpush1.msra.mxu0 0.0
    %399 = vmatprep.subr.mxu0 0.0
    %400 = vmatpush1.msra.mxu0 0.0
    %401 = vmatprep.subr.mxu0 0.0
    %402 = vmatpush1.msra.mxu0 0.0
    %403 = vmatprep.subr.mxu0 0.0
    %404 = vmatpush1.msra.mxu0 0.0
    %405 = vmatprep.subr.mxu0 0.0
    %406 = vmatpush1.msra.mxu0 0.0
    %407 = vmatprep.subr.mxu0 0.0
    %408 = vmatpush1.msra.mxu0 0.0
    %409 = vmatprep.subr.mxu0 0.0
    %410 = vmatpush1.msra.mxu0 0.0
    %411 = vmatprep.subr.mxu0 0.0
    %412 = vmatpush1.msra.mxu0 0.0
    %413 = vmatprep.subr.mxu0 0.0
    %414 = vmatpush1.msra.mxu0 0.0
    %415 = vmatprep.subr.mxu0 0.0
    %416 = vmatpush1.msra.mxu0 0.0
    %417 = vmatprep.subr.mxu0 0.0
    %418 = vmatpush1.msra.mxu0 0.0
    %419 = vmatprep.subr.mxu0 0.0
    %420 = vmatpush1.msra.mxu0 0.0
    %421 = vmatprep.subr.mxu0 0.0
    %422 = vmatpush1.msra.mxu0 0.0
    %423 = vmatprep.subr.mxu0 0.0
    %424 = vmatpush1.msra.mxu0 0.0
    %425 = vmatprep.subr.mxu0 0.0
    %426 = vmatpush1.msra.mxu0 0.0
    %427 = vmatprep.subr.mxu0 0.0
    %428 = vmatpush1.msra.mxu0 0.0
    %429 = vmatprep.subr.mxu0 0.0
    %430 = vmatpush1.msra.mxu0 0.0
    %431 = vmatprep.subr.mxu0 0.0
    %432 = vmatpush1.msra.mxu0 0.0
    %433 = vmatprep.subr.mxu0 0.0
    %434 = vmatpush1.msra.mxu0 0.0
    %435 = vmatprep.subr.mxu0 0.0
    %436 = vmatpush1.msra.mxu0 0.0
    %437 = vmatprep.subr.mxu0 0.0
    %438 = vmatpush1.msra.mxu0 0.0
    %439 = vmatprep.subr.mxu0 0.0
    %440 = vmatpush1.msra.mxu0 0.0
    %441 = vmatprep.subr.mxu0 0.0
    %442 = vmatpush1.msra.mxu0 0.0
    %443 = vmatprep.subr.mxu0 0.0
    %444 = vmatpush1.msra.mxu0 0.0
    %445 = vmatprep.subr.mxu0 0.0
    %446 = vmatpush1.msra.mxu0 0.0
    %447 = vmatprep.mubr.f32.mxu0 0.0
    %448 = vmatmul.mubr.f32.gmra.mrb[0].mxu0 %v381
    %v449 = vpop.f32.mrb[0].mxu0
    %v450 = vadd.f32 0.0, %v449
    %v451 = vpop.f32.mrb[0].mxu0
    %452 = vdwg.mxu0
    %453 = vrot.lane.b32.xlu0 %v189, 64
    %v454 = vpop.permute.xlu0 %453
    %v457 = vsel %vm197, %v376, 0
    %459 = vmatprep.subr.mxu0 0.0
    %460 = vmatpush1.msra.mxu0 %v454
    %461 = vmatprep.subr.mxu0 0.0
    %462 = vmatpush1.msra.mxu0 0.0
    %463 = vmatprep.subr.mxu0 0.0
    %464 = vmatpush1.msra.mxu0 0.0
    %465 = vmatprep.subr.mxu0 0.0
    %466 = vmatpush1.msra.mxu0 0.0
    %467 = vmatprep.subr.mxu0 0.0
    %468 = vmatpush1.msra.mxu0 0.0
    %469 = vmatprep.subr.mxu0 0.0
    %470 = vmatpush1.msra.mxu0 0.0
    %471 = vmatprep.subr.mxu0 0.0
    %472 = vmatpush1.msra.mxu0 0.0
    %473 = vmatprep.subr.mxu0 0.0
    %474 = vmatpush1.msra.mxu0 0.0
    %475 = vmatprep.subr.mxu0 0.0
    %476 = vmatpush1.msra.mxu0 0.0
    %477 = vmatprep.subr.mxu0 0.0
    %478 = vmatpush1.msra.mxu0 0.0
    %479 = vmatprep.subr.mxu0 0.0
    %480 = vmatpush1.msra.mxu0 0.0
    %481 = vmatprep.subr.mxu0 0.0
    %482 = vmatpush1.msra.mxu0 0.0
    %483 = vmatprep.subr.mxu0 0.0
    %484 = vmatpush1.msra.mxu0 0.0
    %485 = vmatprep.subr.mxu0 0.0
    %486 = vmatpush1.msra.mxu0 0.0
    %487 = vmatprep.subr.mxu0 0.0
    %488 = vmatpush1.msra.mxu0 0.0
    %489 = vmatprep.subr.mxu0 0.0
    %490 = vmatpush1.msra.mxu0 0.0
    %491 = vmatprep.subr.mxu0 0.0
    %492 = vmatpush1.msra.mxu0 0.0
    %493 = vmatprep.subr.mxu0 0.0
    %494 = vmatpush1.msra.mxu0 0.0
    %495 = vmatprep.subr.mxu0 0.0
    %496 = vmatpush1.msra.mxu0 0.0
    %497 = vmatprep.subr.mxu0 0.0
    %498 = vmatpush1.msra.mxu0 0.0
    %499 = vmatprep.subr.mxu0 0.0
    %500 = vmatpush1.msra.mxu0 0.0
    %501 = vmatprep.subr.mxu0 0.0
    %502 = vmatpush1.msra.mxu0 0.0
    %503 = vmatprep.subr.mxu0 0.0
    %504 = vmatpush1.msra.mxu0 0.0
    %505 = vmatprep.subr.mxu0 0.0
    %506 = vmatpush1.msra.mxu0 0.0
    %507 = vmatprep.subr.mxu0 0.0
    %508 = vmatpush1.msra.mxu0 0.0
    %509 = vmatprep.subr.mxu0 0.0
    %510 = vmatpush1.msra.mxu0 0.0
    %511 = vmatprep.subr.mxu0 0.0
    %512 = vmatpush1.msra.mxu0 0.0
    %513 = vmatprep.subr.mxu0 0.0
    %514 = vmatpush1.msra.mxu0 0.0
    %515 = vmatprep.subr.mxu0 0.0
    %516 = vmatpush1.msra.mxu0 0.0
    %517 = vmatprep.subr.mxu0 0.0
    %518 = vmatpush1.msra.mxu0 0.0
    %519 = vmatprep.subr.mxu0 0.0
    %520 = vmatpush1.msra.mxu0 0.0
    %521 = vmatprep.subr.mxu0 0.0
    %522 = vmatpush1.msra.mxu0 0.0
    %523 = vmatprep.mubr.f32.mxu0 0.0
    %524 = vmatmul.mubr.f32.gmra.mrb[0].mxu0 %v457
    %v525 = vpop.f32.mrb[0].mxu0
    %v526 = vadd.f32 0.0, %v525
    %v527 = vpop.f32.mrb[0].mxu0
    %528 = vdwg.mxu0
    %529 = vrot.lane.b32.xlu0 %v192, 120
    %v530 = vpop.permute.xlu0 %529
    %531 = vrot.lane.b32.xlu0 %v184, 88
    %v532 = vpop.permute.xlu0 %531
    %v533 = vsel %vm197, %v530, 0
    %v535 = vsel %vm197, %v532, 0
    %537 = vmatprep.subr.mxu0 0.0
    %538 = vmatpush1.xpose.msra.mxu0 %v535
    %539 = vmatprep.subr.mxu0 0.0
    %540 = vmatpush1.xpose.msra.mxu0 0.0
    %541 = vmatprep.subr.mxu0 0.0
    %542 = vmatpush1.xpose.msra.mxu0 0.0
    %543 = vmatprep.subr.mxu0 0.0
    %544 = vmatpush1.xpose.msra.mxu0 0.0
    %545 = vmatprep.subr.mxu0 0.0
    %546 = vmatpush1.xpose.msra.mxu0 0.0
    %547 = vmatprep.subr.mxu0 0.0
    %548 = vmatpush1.xpose.msra.mxu0 0.0
    %549 = vmatprep.subr.mxu0 0.0
    %550 = vmatpush1.xpose.msra.mxu0 0.0
    %551 = vmatprep.subr.mxu0 0.0
    %552 = vmatpush1.xpose.msra.mxu0 0.0
    %553 = vmatprep.subr.mxu0 0.0
    %554 = vmatpush1.xpose.msra.mxu0 0.0
    %555 = vmatprep.subr.mxu0 0.0
    %556 = vmatpush1.xpose.msra.mxu0 0.0
    %557 = vmatprep.subr.mxu0 0.0
    %558 = vmatpush1.xpose.msra.mxu0 0.0
    %559 = vmatprep.subr.mxu0 0.0
    %560 = vmatpush1.xpose.msra.mxu0 0.0
    %561 = vmatprep.subr.mxu0 0.0
    %562 = vmatpush1.xpose.msra.mxu0 0.0
    %563 = vmatprep.subr.mxu0 0.0
    %564 = vmatpush1.xpose.msra.mxu0 0.0
    %565 = vmatprep.subr.mxu0 0.0
    %566 = vmatpush1.xpose.msra.mxu0 0.0
    %567 = vmatprep.subr.mxu0 0.0
    %568 = vmatpush1.xpose.msra.mxu0 0.0
    %569 = vmatprep.subr.mxu0 0.0
    %570 = vmatpush1.xpose.msra.mxu0 0.0
    %571 = vmatprep.subr.mxu0 0.0
    %572 = vmatpush1.xpose.msra.mxu0 0.0
    %573 = vmatprep.subr.mxu0 0.0
    %574 = vmatpush1.xpose.msra.mxu0 0.0
    %575 = vmatprep.subr.mxu0 0.0
    %576 = vmatpush1.xpose.msra.mxu0 0.0
    %577 = vmatprep.subr.mxu0 0.0
    %578 = vmatpush1.xpose.msra.mxu0 0.0
    %579 = vmatprep.subr.mxu0 0.0
    %580 = vmatpush1.xpose.msra.mxu0 0.0
    %581 = vmatprep.subr.mxu0 0.0
    %582 = vmatpush1.xpose.msra.mxu0 0.0
    %583 = vmatprep.subr.mxu0 0.0
    %584 = vmatpush1.xpose.msra.mxu0 0.0
    %585 = vmatprep.subr.mxu0 0.0
    %586 = vmatpush1.xpose.msra.mxu0 0.0
    %587 = vmatprep.subr.mxu0 0.0
    %588 = vmatpush1.xpose.msra.mxu0 0.0
    %589 = vmatprep.subr.mxu0 0.0
    %590 = vmatpush1.xpose.msra.mxu0 0.0
    %591 = vmatprep.subr.mxu0 0.0
    %592 = vmatpush1.xpose.msra.mxu0 0.0
    %593 = vmatprep.subr.mxu0 0.0
    %594 = vmatpush1.xpose.msra.mxu0 0.0
    %595 = vmatprep.subr.mxu0 0.0
    %596 = vmatpush1.xpose.msra.mxu0 0.0
    %597 = vmatprep.subr.mxu0 0.0
    %598 = vmatpush1.xpose.msra.mxu0 0.0
    %599 = vmatprep.subr.mxu0 0.0
    %600 = vmatpush1.xpose.msra.mxu0 0.0
    %601 = vmatprep.mubr.f32.mxu0 0.0
    %602 = vmatmul.mubr.f32.gmra.mrb[0].mxu0 %v533
    %v603 = vpop.f32.mrb[0].mxu0
    %v604 = vadd.f32 0.0, %v603
    %v605 = vpop.f32.mrb[0].mxu0
    %606 = vdwg.mxu0
    %607 = vrot.lane.b32.xlu0 %v193, 120
    %v608 = vpop.permute.xlu0 %607
    %609 = vrot.lane.b32.xlu0 %v189, 88
    %v610 = vpop.permute.xlu0 %609
    %v611 = vsel %vm197, %v608, 0
    %v613 = vsel %vm197, %v610, 0
    %615 = vmatprep.subr.mxu0 0.0
    %616 = vmatpush1.xpose.msra.mxu0 %v613
    %617 = vmatprep.subr.mxu0 0.0
    %618 = vmatpush1.xpose.msra.mxu0 0.0
    %619 = vmatprep.subr.mxu0 0.0
    %620 = vmatpush1.xpose.msra.mxu0 0.0
    %621 = vmatprep.subr.mxu0 0.0
    %622 = vmatpush1.xpose.msra.mxu0 0.0
    %623 = vmatprep.subr.mxu0 0.0
    %624 = vmatpush1.xpose.msra.mxu0 0.0
    %625 = vmatprep.subr.mxu0 0.0
    %626 = vmatpush1.xpose.msra.mxu0 0.0
    %627 = vmatprep.subr.mxu0 0.0
    %628 = vmatpush1.xpose.msra.mxu0 0.0
    %629 = vmatprep.subr.mxu0 0.0
    %630 = vmatpush1.xpose.msra.mxu0 0.0
    %631 = vmatprep.subr.mxu0 0.0
    %632 = vmatpush1.xpose.msra.mxu0 0.0
    %633 = vmatprep.subr.mxu0 0.0
    %634 = vmatpush1.xpose.msra.mxu0 0.0
    %635 = vmatprep.subr.mxu0 0.0
    %636 = vmatpush1.xpose.msra.mxu0 0.0
    %637 = vmatprep.subr.mxu0 0.0
    %638 = vmatpush1.xpose.msra.mxu0 0.0
    %639 = vmatprep.subr.mxu0 0.0
    %640 = vmatpush1.xpose.msra.mxu0 0.0
    %641 = vmatprep.subr.mxu0 0.0
    %642 = vmatpush1.xpose.msra.mxu0 0.0
    %643 = vmatprep.subr.mxu0 0.0
    %644 = vmatpush1.xpose.msra.mxu0 0.0
    %645 = vmatprep.subr.mxu0 0.0
    %646 = vmatpush1.xpose.msra.mxu0 0.0
    %647 = vmatprep.subr.mxu0 0.0
    %648 = vmatpush1.xpose.msra.mxu0 0.0
    %649 = vmatprep.subr.mxu0 0.0
    %650 = vmatpush1.xpose.msra.mxu0 0.0
    %651 = vmatprep.subr.mxu0 0.0
    %652 = vmatpush1.xpose.msra.mxu0 0.0
    %653 = vmatprep.subr.mxu0 0.0
    %654 = vmatpush1.xpose.msra.mxu0 0.0
    %655 = vmatprep.subr.mxu0 0.0
    %656 = vmatpush1.xpose.msra.mxu0 0.0
    %657 = vmatprep.subr.mxu0 0.0
    %658 = vmatpush1.xpose.msra.mxu0 0.0
    %659 = vmatprep.subr.mxu0 0.0
    %660 = vmatpush1.xpose.msra.mxu0 0.0
    %661 = vmatprep.subr.mxu0 0.0
    %662 = vmatpush1.xpose.msra.mxu0 0.0
    %663 = vmatprep.subr.mxu0 0.0
    %664 = vmatpush1.xpose.msra.mxu0 0.0
    %665 = vmatprep.subr.mxu0 0.0
    %666 = vmatpush1.xpose.msra.mxu0 0.0
    %667 = vmatprep.subr.mxu0 0.0
    %668 = vmatpush1.xpose.msra.mxu0 0.0
    %669 = vmatprep.subr.mxu0 0.0
    %670 = vmatpush1.xpose.msra.mxu0 0.0
    %671 = vmatprep.subr.mxu0 0.0
    %672 = vmatpush1.xpose.msra.mxu0 0.0
    %673 = vmatprep.subr.mxu0 0.0
    %674 = vmatpush1.xpose.msra.mxu0 0.0
    %675 = vmatprep.subr.mxu0 0.0
    %676 = vmatpush1.xpose.msra.mxu0 0.0
    %677 = vmatprep.subr.mxu0 0.0
    %678 = vmatpush1.xpose.msra.mxu0 0.0
    %679 = vmatprep.mubr.f32.mxu0 0.0
    %680 = vmatmul.mubr.f32.gmra.mrb[0].mxu0 %v611
    %v681 = vpop.f32.mrb[0].mxu0
    %v682 = vadd.f32 0.0, %v681
    %v683 = vpop.f32.mrb[0].mxu0
    %684 = vdwg.mxu0
    %v685 = vsel %vm352, %v604, -1e+30
    %v686 = vsel %vm352, %v682, -1e+30
    %v687 = vsel %vm197, %v685, -inf
    %688 = vmax.xlane.f32.xlu0 %v687
    %v689 = vpop.xlane.xlu0 %688
    %v690 = vsel %vm197, %v686, -inf
    %691 = vmax.xlane.f32.xlu0 %v690
    %v692 = vpop.xlane.xlu0 %691
    %v693 = vsub.f32 %v685, %v689
    %v694 = vsub.f32 %v686, %v692
    %v695 = vmul.f32 %v693, 1.442695
    %v696 = vpow.pop %v695
    %v697 = vmul.f32 %v694, 1.442695
    %v698 = vpow.pop %v697
    %v699 = vsel %vm197, %v696, 0.0
    %700 = vadd.xlane.f32.xlu0 %v699
    %v701 = vpop.xlane.xlu0 %700
    %v702 = vsel %vm197, %v698, 0.0
    %703 = vadd.xlane.f32.xlu0 %v702
    %v704 = vpop.xlane.xlu0 %703
    %v705 = vrcp.pop %v701
    %v706 = vrcp.pop %v704
    %v707 = vmul.f32 %v696, %v705
    %v708 = vmul.f32 %v698, %v706
    %709 = vrot.lane.b32.xlu0 %v184, 56
    %v710 = vpop.permute.xlu0 %709
    %v713 = vsel %vm197, %v707, 0
    %715 = vmatprep.subr.mxu0 0.0
    %716 = vmatpush1.msra.mxu0 %v710
    %717 = vmatprep.subr.mxu0 0.0
    %718 = vmatpush1.msra.mxu0 0.0
    %719 = vmatprep.subr.mxu0 0.0
    %720 = vmatpush1.msra.mxu0 0.0
    %721 = vmatprep.subr.mxu0 0.0
    %722 = vmatpush1.msra.mxu0 0.0
    %723 = vmatprep.subr.mxu0 0.0
    %724 = vmatpush1.msra.mxu0 0.0
    %725 = vmatprep.subr.mxu0 0.0
    %726 = vmatpush1.msra.mxu0 0.0
    %727 = vmatprep.subr.mxu0 0.0
    %728 = vmatpush1.msra.mxu0 0.0
    %729 = vmatprep.subr.mxu0 0.0
    %730 = vmatpush1.msra.mxu0 0.0
    %731 = vmatprep.subr.mxu0 0.0
    %732 = vmatpush1.msra.mxu0 0.0
    %733 = vmatprep.subr.mxu0 0.0
    %734 = vmatpush1.msra.mxu0 0.0
    %735 = vmatprep.subr.mxu0 0.0
    %736 = vmatpush1.msra.mxu0 0.0
    %737 = vmatprep.subr.mxu0 0.0
    %738 = vmatpush1.msra.mxu0 0.0
    %739 = vmatprep.subr.mxu0 0.0
    %740 = vmatpush1.msra.mxu0 0.0
    %741 = vmatprep.subr.mxu0 0.0
    %742 = vmatpush1.msra.mxu0 0.0
    %743 = vmatprep.subr.mxu0 0.0
    %744 = vmatpush1.msra.mxu0 0.0
    %745 = vmatprep.subr.mxu0 0.0
    %746 = vmatpush1.msra.mxu0 0.0
    %747 = vmatprep.subr.mxu0 0.0
    %748 = vmatpush1.msra.mxu0 0.0
    %749 = vmatprep.subr.mxu0 0.0
    %750 = vmatpush1.msra.mxu0 0.0
    %751 = vmatprep.subr.mxu0 0.0
    %752 = vmatpush1.msra.mxu0 0.0
    %753 = vmatprep.subr.mxu0 0.0
    %754 = vmatpush1.msra.mxu0 0.0
    %755 = vmatprep.subr.mxu0 0.0
    %756 = vmatpush1.msra.mxu0 0.0
    %757 = vmatprep.subr.mxu0 0.0
    %758 = vmatpush1.msra.mxu0 0.0
    %759 = vmatprep.subr.mxu0 0.0
    %760 = vmatpush1.msra.mxu0 0.0
    %761 = vmatprep.subr.mxu0 0.0
    %762 = vmatpush1.msra.mxu0 0.0
    %763 = vmatprep.subr.mxu0 0.0
    %764 = vmatpush1.msra.mxu0 0.0
    %765 = vmatprep.subr.mxu0 0.0
    %766 = vmatpush1.msra.mxu0 0.0
    %767 = vmatprep.subr.mxu0 0.0
    %768 = vmatpush1.msra.mxu0 0.0
    %769 = vmatprep.subr.mxu0 0.0
    %770 = vmatpush1.msra.mxu0 0.0
    %771 = vmatprep.subr.mxu0 0.0
    %772 = vmatpush1.msra.mxu0 0.0
    %773 = vmatprep.subr.mxu0 0.0
    %774 = vmatpush1.msra.mxu0 0.0
    %775 = vmatprep.subr.mxu0 0.0
    %776 = vmatpush1.msra.mxu0 0.0
    %777 = vmatprep.subr.mxu0 0.0
    %778 = vmatpush1.msra.mxu0 0.0
    %779 = vmatprep.mubr.f32.mxu0 0.0
    %780 = vmatmul.mubr.f32.gmra.mrb[0].mxu0 %v713
    %v781 = vpop.f32.mrb[0].mxu0
    %v782 = vadd.f32 0.0, %v781
    %v783 = vpop.f32.mrb[0].mxu0
    %784 = vdwg.mxu0
    %785 = vrot.lane.b32.xlu0 %v189, 56
    %v786 = vpop.permute.xlu0 %785
    %v789 = vsel %vm197, %v708, 0
    %791 = vmatprep.subr.mxu0 0.0
    %792 = vmatpush1.msra.mxu0 %v786
    %793 = vmatprep.subr.mxu0 0.0
    %794 = vmatpush1.msra.mxu0 0.0
    %795 = vmatprep.subr.mxu0 0.0
    %796 = vmatpush1.msra.mxu0 0.0
    %797 = vmatprep.subr.mxu0 0.0
    %798 = vmatpush1.msra.mxu0 0.0
    %799 = vmatprep.subr.mxu0 0.0
    %800 = vmatpush1.msra.mxu0 0.0
    %801 = vmatprep.subr.mxu0 0.0
    %802 = vmatpush1.msra.mxu0 0.0
    %803 = vmatprep.subr.mxu0 0.0
    %804 = vmatpush1.msra.mxu0 0.0
    %805 = vmatprep.subr.mxu0 0.0
    %806 = vmatpush1.msra.mxu0 0.0
    %807 = vmatprep.subr.mxu0 0.0
    %808 = vmatpush1.msra.mxu0 0.0
    %809 = vmatprep.subr.mxu0 0.0
    %810 = vmatpush1.msra.mxu0 0.0
    %811 = vmatprep.subr.mxu0 0.0
    %812 = vmatpush1.msra.mxu0 0.0
    %813 = vmatprep.subr.mxu0 0.0
    %814 = vmatpush1.msra.mxu0 0.0
    %815 = vmatprep.subr.mxu0 0.0
    %816 = vmatpush1.msra.mxu0 0.0
    %817 = vmatprep.subr.mxu0 0.0
    %818 = vmatpush1.msra.mxu0 0.0
    %819 = vmatprep.subr.mxu0 0.0
    %820 = vmatpush1.msra.mxu0 0.0
    %821 = vmatprep.subr.mxu0 0.0
    %822 = vmatpush1.msra.mxu0 0.0
    %823 = vmatprep.subr.mxu0 0.0
    %824 = vmatpush1.msra.mxu0 0.0
    %825 = vmatprep.subr.mxu0 0.0
    %826 = vmatpush1.msra.mxu0 0.0
    %827 = vmatprep.subr.mxu0 0.0
    %828 = vmatpush1.msra.mxu0 0.0
    %829 = vmatprep.subr.mxu0 0.0
    %830 = vmatpush1.msra.mxu0 0.0
    %831 = vmatprep.subr.mxu0 0.0
    %832 = vmatpush1.msra.mxu0 0.0
    %833 = vmatprep.subr.mxu0 0.0
    %834 = vmatpush1.msra.mxu0 0.0
    %835 = vmatprep.subr.mxu0 0.0
    %836 = vmatpush1.msra.mxu0 0.0
    %837 = vmatprep.subr.mxu0 0.0
    %838 = vmatpush1.msra.mxu0 0.0
    %839 = vmatprep.subr.mxu0 0.0
    %840 = vmatpush1.msra.mxu0 0.0
    %841 = vmatprep.subr.mxu0 0.0
    %842 = vmatpush1.msra.mxu0 0.0
    %843 = vmatprep.subr.mxu0 0.0
    %844 = vmatpush1.msra.mxu0 0.0
    %845 = vmatprep.subr.mxu0 0.0
    %846 = vmatpush1.msra.mxu0 0.0
    %847 = vmatprep.subr.mxu0 0.0
    %848 = vmatpush1.msra.mxu0 0.0
    %849 = vmatprep.subr.mxu0 0.0
    %850 = vmatpush1.msra.mxu0 0.0
    %851 = vmatprep.subr.mxu0 0.0
    %852 = vmatpush1.msra.mxu0 0.0
    %853 = vmatprep.subr.mxu0 0.0
    %854 = vmatpush1.msra.mxu0 0.0
    %855 = vmatprep.mubr.f32.mxu0 0.0
    %856 = vmatmul.mubr.f32.gmra.mrb[0].mxu0 %v789
    %v857 = vpop.f32.mrb[0].mxu0
    %v858 = vadd.f32 0.0, %v857
    %v859 = vpop.f32.mrb[0].mxu0
    %860 = vdwg.mxu0
    %861 = vrot.lane.b32.xlu0 %v192, 112
    %v862 = vpop.permute.xlu0 %861
    %863 = vrot.lane.b32.xlu0 %v184, 80
    %v864 = vpop.permute.xlu0 %863
    %v865 = vsel %vm197, %v862, 0
    %v867 = vsel %vm197, %v864, 0
    %869 = vmatprep.subr.mxu0 0.0
    %870 = vmatpush1.xpose.msra.mxu0 %v867
    %871 = vmatprep.subr.mxu0 0.0
    %872 = vmatpush1.xpose.msra.mxu0 0.0
    %873 = vmatprep.subr.mxu0 0.0
    %874 = vmatpush1.xpose.msra.mxu0 0.0
    %875 = vmatprep.subr.mxu0 0.0
    %876 = vmatpush1.xpose.msra.mxu0 0.0
    %877 = vmatprep.subr.mxu0 0.0
    %878 = vmatpush1.xpose.msra.mxu0 0.0
    %879 = vmatprep.subr.mxu0 0.0
    %880 = vmatpush1.xpose.msra.mxu0 0.0
    %881 = vmatprep.subr.mxu0 0.0
    %882 = vmatpush1.xpose.msra.mxu0 0.0
    %883 = vmatprep.subr.mxu0 0.0
    %884 = vmatpush1.xpose.msra.mxu0 0.0
    %885 = vmatprep.subr.mxu0 0.0
    %886 = vmatpush1.xpose.msra.mxu0 0.0
    %887 = vmatprep.subr.mxu0 0.0
    %888 = vmatpush1.xpose.msra.mxu0 0.0
    %889 = vmatprep.subr.mxu0 0.0
    %890 = vmatpush1.xpose.msra.mxu0 0.0
    %891 = vmatprep.subr.mxu0 0.0
    %892 = vmatpush1.xpose.msra.mxu0 0.0
    %893 = vmatprep.subr.mxu0 0.0
    %894 = vmatpush1.xpose.msra.mxu0 0.0
    %895 = vmatprep.subr.mxu0 0.0
    %896 = vmatpush1.xpose.msra.mxu0 0.0
    %897 = vmatprep.subr.mxu0 0.0
    %898 = vmatpush1.xpose.msra.mxu0 0.0
    %899 = vmatprep.subr.mxu0 0.0
    %900 = vmatpush1.xpose.msra.mxu0 0.0
    %901 = vmatprep.subr.mxu0 0.0
    %902 = vmatpush1.xpose.msra.mxu0 0.0
    %903 = vmatprep.subr.mxu0 0.0
    %904 = vmatpush1.xpose.msra.mxu0 0.0
    %905 = vmatprep.subr.mxu0 0.0
    %906 = vmatpush1.xpose.msra.mxu0 0.0
    %907 = vmatprep.subr.mxu0 0.0
    %908 = vmatpush1.xpose.msra.mxu0 0.0
    %909 = vmatprep.subr.mxu0 0.0
    %910 = vmatpush1.xpose.msra.mxu0 0.0
    %911 = vmatprep.subr.mxu0 0.0
    %912 = vmatpush1.xpose.msra.mxu0 0.0
    %913 = vmatprep.subr.mxu0 0.0
    %914 = vmatpush1.xpose.msra.mxu0 0.0
    %915 = vmatprep.subr.mxu0 0.0
    %916 = vmatpush1.xpose.msra.mxu0 0.0
    %917 = vmatprep.subr.mxu0 0.0
    %918 = vmatpush1.xpose.msra.mxu0 0.0
    %919 = vmatprep.subr.mxu0 0.0
    %920 = vmatpush1.xpose.msra.mxu0 0.0
    %921 = vmatprep.subr.mxu0 0.0
    %922 = vmatpush1.xpose.msra.mxu0 0.0
    %923 = vmatprep.subr.mxu0 0.0
    %924 = vmatpush1.xpose.msra.mxu0 0.0
    %925 = vmatprep.subr.mxu0 0.0
    %926 = vmatpush1.xpose.msra.mxu0 0.0
    %927 = vmatprep.subr.mxu0 0.0
    %928 = vmatpush1.xpose.msra.mxu0 0.0
    %929 = vmatprep.subr.mxu0 0.0
    %930 = vmatpush1.xpose.msra.mxu0 0.0
    %931 = vmatprep.subr.mxu0 0.0
    %932 = vmatpush1.xpose.msra.mxu0 0.0
    %933 = vmatprep.mubr.f32.mxu0 0.0
    %934 = vmatmul.mubr.f32.gmra.mrb[0].mxu0 %v865
    %v935 = vpop.f32.mrb[0].mxu0
    %v936 = vadd.f32 0.0, %v935
    %v937 = vpop.f32.mrb[0].mxu0
    %938 = vdwg.mxu0
    %939 = vrot.lane.b32.xlu0 %v193, 112
    %v940 = vpop.permute.xlu0 %939
    %941 = vrot.lane.b32.xlu0 %v189, 80
    %v942 = vpop.permute.xlu0 %941
    %v943 = vsel %vm197, %v940, 0
    %v945 = vsel %vm197, %v942, 0
    %947 = vmatprep.subr.mxu0 0.0
    %948 = vmatpush1.xpose.msra.mxu0 %v945
    %949 = vmatprep.subr.mxu0 0.0
    %950 = vmatpush1.xpose.msra.mxu0 0.0
    %951 = vmatprep.subr.mxu0 0.0
    %952 = vmatpush1.xpose.msra.mxu0 0.0
    %953 = vmatprep.subr.mxu0 0.0
    %954 = vmatpush1.xpose.msra.mxu0 0.0
    %955 = vmatprep.subr.mxu0 0.0
    %956 = vmatpush1.xpose.msra.mxu0 0.0
    %957 = vmatprep.subr.mxu0 0.0
    %958 = vmatpush1.xpose.msra.mxu0 0.0
    %959 = vmatprep.subr.mxu0 0.0
    %960 = vmatpush1.xpose.msra.mxu0 0.0
    %961 = vmatprep.subr.mxu0 0.0
    %962 = vmatpush1.xpose.msra.mxu0 0.0
    %963 = vmatprep.subr.mxu0 0.0
    %964 = vmatpush1.xpose.msra.mxu0 0.0
    %965 = vmatprep.subr.mxu0 0.0
    %966 = vmatpush1.xpose.msra.mxu0 0.0
    %967 = vmatprep.subr.mxu0 0.0
    %968 = vmatpush1.xpose.msra.mxu0 0.0
    %969 = vmatprep.subr.mxu0 0.0
    %970 = vmatpush1.xpose.msra.mxu0 0.0
    %971 = vmatprep.subr.mxu0 0.0
    %972 = vmatpush1.xpose.msra.mxu0 0.0
    %973 = vmatprep.subr.mxu0 0.0
    %974 = vmatpush1.xpose.msra.mxu0 0.0
    %975 = vmatprep.subr.mxu0 0.0
    %976 = vmatpush1.xpose.msra.mxu0 0.0
    %977 = vmatprep.subr.mxu0 0.0
    %978 = vmatpush1.xpose.msra.mxu0 0.0
    %979 = vmatprep.subr.mxu0 0.0
    %980 = vmatpush1.xpose.msra.mxu0 0.0
    %981 = vmatprep.subr.mxu0 0.0
    %982 = vmatpush1.xpose.msra.mxu0 0.0
    %983 = vmatprep.subr.mxu0 0.0
    %984 = vmatpush1.xpose.msra.mxu0 0.0
    %985 = vmatprep.subr.mxu0 0.0
    %986 = vmatpush1.xpose.msra.mxu0 0.0
    %987 = vmatprep.subr.mxu0 0.0
    %988 = vmatpush1.xpose.msra.mxu0 0.0
    %989 = vmatprep.subr.mxu0 0.0
    %990 = vmatpush1.xpose.msra.mxu0 0.0
    %991 = vmatprep.subr.mxu0 0.0
    %992 = vmatpush1.xpose.msra.mxu0 0.0
    %993 = vmatprep.subr.mxu0 0.0
    %994 = vmatpush1.xpose.msra.mxu0 0.0
    %995 = vmatprep.subr.mxu0 0.0
    %996 = vmatpush1.xpose.msra.mxu0 0.0
    %997 = vmatprep.subr.mxu0 0.0
    %998 = vmatpush1.xpose.msra.mxu0 0.0
    %999 = vmatprep.subr.mxu0 0.0
    %1000 = vmatpush1.xpose.msra.mxu0 0.0
    %1001 = vmatprep.subr.mxu0 0.0
    %1002 = vmatpush1.xpose.msra.mxu0 0.0
    %1003 = vmatprep.subr.mxu0 0.0
    %1004 = vmatpush1.xpose.msra.mxu0 0.0
    %1005 = vmatprep.subr.mxu0 0.0
    %1006 = vmatpush1.xpose.msra.mxu0 0.0
    %1007 = vmatprep.subr.mxu0 0.0
    %1008 = vmatpush1.xpose.msra.mxu0 0.0
    %1009 = vmatprep.subr.mxu0 0.0
    %1010 = vmatpush1.xpose.msra.mxu0 0.0
    %1011 = vmatprep.mubr.f32.mxu0 0.0
    %1012 = vmatmul.mubr.f32.gmra.mrb[0].mxu0 %v943
    %v1013 = vpop.f32.mrb[0].mxu0
    %v1014 = vadd.f32 0.0, %v1013
    %v1015 = vpop.f32.mrb[0].mxu0
    %1016 = vdwg.mxu0
    %v1017 = vsel %vm352, %v936, -1e+30
    %v1018 = vsel %vm352, %v1014, -1e+30
    %v1019 = vsel %vm197, %v1017, -inf
    %1020 = vmax.xlane.f32.xlu0 %v1019
    %v1021 = vpop.xlane.xlu0 %1020
    %v1022 = vsel %vm197, %v1018, -inf
    %1023 = vmax.xlane.f32.xlu0 %v1022
    %v1024 = vpop.xlane.xlu0 %1023
    %v1025 = vsub.f32 %v1017, %v1021
    %v1026 = vsub.f32 %v1018, %v1024
    %v1027 = vmul.f32 %v1025, 1.442695
    %v1028 = vpow.pop %v1027
    %v1029 = vmul.f32 %v1026, 1.442695
    %v1030 = vpow.pop %v1029
    %v1031 = vsel %vm197, %v1028, 0.0
    %1032 = vadd.xlane.f32.xlu0 %v1031
    %v1033 = vpop.xlane.xlu0 %1032
    %v1034 = vsel %vm197, %v1030, 0.0
    %1035 = vadd.xlane.f32.xlu0 %v1034
    %v1036 = vpop.xlane.xlu0 %1035
    %v1037 = vrcp.pop %v1033
    %v1038 = vrcp.pop %v1036
    %v1039 = vmul.f32 %v1028, %v1037
    %v1040 = vmul.f32 %v1030, %v1038
    %1041 = vrot.lane.b32.xlu0 %v184, 48
    %v1042 = vpop.permute.xlu0 %1041
    %v1045 = vsel %vm197, %v1039, 0
    %1047 = vmatprep.subr.mxu0 0.0
    %1048 = vmatpush1.msra.mxu0 %v1042
    %1049 = vmatprep.subr.mxu0 0.0
    %1050 = vmatpush1.msra.mxu0 0.0
    %1051 = vmatprep.subr.mxu0 0.0
    %1052 = vmatpush1.msra.mxu0 0.0
    %1053 = vmatprep.subr.mxu0 0.0
    %1054 = vmatpush1.msra.mxu0 0.0
    %1055 = vmatprep.subr.mxu0 0.0
    %1056 = vmatpush1.msra.mxu0 0.0
    %1057 = vmatprep.subr.mxu0 0.0
    %1058 = vmatpush1.msra.mxu0 0.0
    %1059 = vmatprep.subr.mxu0 0.0
    %1060 = vmatpush1.msra.mxu0 0.0
    %1061 = vmatprep.subr.mxu0 0.0
    %1062 = vmatpush1.msra.mxu0 0.0
    %1063 = vmatprep.subr.mxu0 0.0
    %1064 = vmatpush1.msra.mxu0 0.0
    %1065 = vmatprep.subr.mxu0 0.0
    %1066 = vmatpush1.msra.mxu0 0.0
    %1067 = vmatprep.subr.mxu0 0.0
    %1068 = vmatpush1.msra.mxu0 0.0
    %1069 = vmatprep.subr.mxu0 0.0
    %1070 = vmatpush1.msra.mxu0 0.0
    %1071 = vmatprep.subr.mxu0 0.0
    %1072 = vmatpush1.msra.mxu0 0.0
    %1073 = vmatprep.subr.mxu0 0.0
    %1074 = vmatpush1.msra.mxu0 0.0
    %1075 = vmatprep.subr.mxu0 0.0
    %1076 = vmatpush1.msra.mxu0 0.0
    %1077 = vmatprep.subr.mxu0 0.0
    %1078 = vmatpush1.msra.mxu0 0.0
    %1079 = vmatprep.subr.mxu0 0.0
    %1080 = vmatpush1.msra.mxu0 0.0
    %1081 = vmatprep.subr.mxu0 0.0
    %1082 = vmatpush1.msra.mxu0 0.0
    %1083 = vmatprep.subr.mxu0 0.0
    %1084 = vmatpush1.msra.mxu0 0.0
    %1085 = vmatprep.subr.mxu0 0.0
    %1086 = vmatpush1.msra.mxu0 0.0
    %1087 = vmatprep.subr.mxu0 0.0
    %1088 = vmatpush1.msra.mxu0 0.0
    %1089 = vmatprep.subr.mxu0 0.0
    %1090 = vmatpush1.msra.mxu0 0.0
    %1091 = vmatprep.subr.mxu0 0.0
    %1092 = vmatpush1.msra.mxu0 0.0
    %1093 = vmatprep.subr.mxu0 0.0
    %1094 = vmatpush1.msra.mxu0 0.0
    %1095 = vmatprep.subr.mxu0 0.0
    %1096 = vmatpush1.msra.mxu0 0.0
    %1097 = vmatprep.subr.mxu0 0.0
    %1098 = vmatpush1.msra.mxu0 0.0
    %1099 = vmatprep.subr.mxu0 0.0
    %1100 = vmatpush1.msra.mxu0 0.0
    %1101 = vmatprep.subr.mxu0 0.0
    %1102 = vmatpush1.msra.mxu0 0.0
    %1103 = vmatprep.subr.mxu0 0.0
    %1104 = vmatpush1.msra.mxu0 0.0
    %1105 = vmatprep.subr.mxu0 0.0
    %1106 = vmatpush1.msra.mxu0 0.0
    %1107 = vmatprep.subr.mxu0 0.0
    %1108 = vmatpush1.msra.mxu0 0.0
    %1109 = vmatprep.subr.mxu0 0.0
    %1110 = vmatpush1.msra.mxu0 0.0
    %1111 = vmatprep.mubr.f32.mxu0 0.0
    %1112 = vmatmul.mubr.f32.gmra.mrb[0].mxu0 %v1045
    %v1113 = vpop.f32.mrb[0].mxu0
    %v1114 = vadd.f32 0.0, %v1113
    %v1115 = vpop.f32.mrb[0].mxu0
    %1116 = vdwg.mxu0
    %1117 = vrot.lane.b32.xlu0 %v189, 48
    %v1118 = vpop.permute.xlu0 %1117
    %v1121 = vsel %vm197, %v1040, 0
    %1123 = vmatprep.subr.mxu0 0.0
    %1124 = vmatpush1.msra.mxu0 %v1118
    %1125 = vmatprep.subr.mxu0 0.0
    %1126 = vmatpush1.msra.mxu0 0.0
    %1127 = vmatprep.subr.mxu0 0.0
    %1128 = vmatpush1.msra.mxu0 0.0
    %1129 = vmatprep.subr.mxu0 0.0
    %1130 = vmatpush1.msra.mxu0 0.0
    %1131 = vmatprep.subr.mxu0 0.0
    %1132 = vmatpush1.msra.mxu0 0.0
    %1133 = vmatprep.subr.mxu0 0.0
    %1134 = vmatpush1.msra.mxu0 0.0
    %1135 = vmatprep.subr.mxu0 0.0
    %1136 = vmatpush1.msra.mxu0 0.0
    %1137 = vmatprep.subr.mxu0 0.0
    %1138 = vmatpush1.msra.mxu0 0.0
    %1139 = vmatprep.subr.mxu0 0.0
    %1140 = vmatpush1.msra.mxu0 0.0
    %1141 = vmatprep.subr.mxu0 0.0
    %1142 = vmatpush1.msra.mxu0 0.0
    %1143 = vmatprep.subr.mxu0 0.0
    %1144 = vmatpush1.msra.mxu0 0.0
    %1145 = vmatprep.subr.mxu0 0.0
    %1146 = vmatpush1.msra.mxu0 0.0
    %1147 = vmatprep.subr.mxu0 0.0
    %1148 = vmatpush1.msra.mxu0 0.0
    %1149 = vmatprep.subr.mxu0 0.0
    %1150 = vmatpush1.msra.mxu0 0.0
    %1151 = vmatprep.subr.mxu0 0.0
    %1152 = vmatpush1.msra.mxu0 0.0
    %1153 = vmatprep.subr.mxu0 0.0
    %1154 = vmatpush1.msra.mxu0 0.0
    %1155 = vmatprep.subr.mxu0 0.0
    %1156 = vmatpush1.msra.mxu0 0.0
    %1157 = vmatprep.subr.mxu0 0.0
    %1158 = vmatpush1.msra.mxu0 0.0
    %1159 = vmatprep.subr.mxu0 0.0
    %1160 = vmatpush1.msra.mxu0 0.0
    %1161 = vmatprep.subr.mxu0 0.0
    %1162 = vmatpush1.msra.mxu0 0.0
    %1163 = vmatprep.subr.mxu0 0.0
    %1164 = vmatpush1.msra.mxu0 0.0
    %1165 = vmatprep.subr.mxu0 0.0
    %1166 = vmatpush1.msra.mxu0 0.0
    %1167 = vmatprep.subr.mxu0 0.0
    %1168 = vmatpush1.msra.mxu0 0.0
    %1169 = vmatprep.subr.mxu0 0.0
    %1170 = vmatpush1.msra.mxu0 0.0
    %1171 = vmatprep.subr.mxu0 0.0
    %1172 = vmatpush1.msra.mxu0 0.0
    %1173 = vmatprep.subr.mxu0 0.0
    %1174 = vmatpush1.msra.mxu0 0.0
    %1175 = vmatprep.subr.mxu0 0.0
    %1176 = vmatpush1.msra.mxu0 0.0
    %1177 = vmatprep.subr.mxu0 0.0
    %1178 = vmatpush1.msra.mxu0 0.0
    %1179 = vmatprep.subr.mxu0 0.0
    %1180 = vmatpush1.msra.mxu0 0.0
    %1181 = vmatprep.subr.mxu0 0.0
    %1182 = vmatpush1.msra.mxu0 0.0
    %1183 = vmatprep.subr.mxu0 0.0
    %1184 = vmatpush1.msra.mxu0 0.0
    %1185 = vmatprep.subr.mxu0 0.0
    %1186 = vmatpush1.msra.mxu0 0.0
    %1187 = vmatprep.mubr.f32.mxu0 0.0
    %1188 = vmatmul.mubr.f32.gmra.mrb[0].mxu0 %v1121
    %v1189 = vpop.f32.mrb[0].mxu0
    %v1190 = vadd.f32 0.0, %v1189
    %v1191 = vpop.f32.mrb[0].mxu0
    %1192 = vdwg.mxu0
    %1193 = vrot.lane.b32.xlu0 %v192, 104
    %v1194 = vpop.permute.xlu0 %1193
    %1195 = vrot.lane.b32.xlu0 %v184, 72
    %v1196 = vpop.permute.xlu0 %1195
    %v1197 = vsel %vm197, %v1194, 0
    %v1199 = vsel %vm197, %v1196, 0
    %1201 = vmatprep.subr.mxu0 0.0
    %1202 = vmatpush1.xpose.msra.mxu0 %v1199
    %1203 = vmatprep.subr.mxu0 0.0
    %1204 = vmatpush1.xpose.msra.mxu0 0.0
    %1205 = vmatprep.subr.mxu0 0.0
    %1206 = vmatpush1.xpose.msra.mxu0 0.0
    %1207 = vmatprep.subr.mxu0 0.0
    %1208 = vmatpush1.xpose.msra.mxu0 0.0
    %1209 = vmatprep.subr.mxu0 0.0
    %1210 = vmatpush1.xpose.msra.mxu0 0.0
    %1211 = vmatprep.subr.mxu0 0.0
    %1212 = vmatpush1.xpose.msra.mxu0 0.0
    %1213 = vmatprep.subr.mxu0 0.0
    %1214 = vmatpush1.xpose.msra.mxu0 0.0
    %1215 = vmatprep.subr.mxu0 0.0
    %1216 = vmatpush1.xpose.msra.mxu0 0.0
    %1217 = vmatprep.subr.mxu0 0.0
    %1218 = vmatpush1.xpose.msra.mxu0 0.0
    %1219 = vmatprep.subr.mxu0 0.0
    %1220 = vmatpush1.xpose.msra.mxu0 0.0
    %1221 = vmatprep.subr.mxu0 0.0
    %1222 = vmatpush1.xpose.msra.mxu0 0.0
    %1223 = vmatprep.subr.mxu0 0.0
    %1224 = vmatpush1.xpose.msra.mxu0 0.0
    %1225 = vmatprep.subr.mxu0 0.0
    %1226 = vmatpush1.xpose.msra.mxu0 0.0
    %1227 = vmatprep.subr.mxu0 0.0
    %1228 = vmatpush1.xpose.msra.mxu0 0.0
    %1229 = vmatprep.subr.mxu0 0.0
    %1230 = vmatpush1.xpose.msra.mxu0 0.0
    %1231 = vmatprep.subr.mxu0 0.0
    %1232 = vmatpush1.xpose.msra.mxu0 0.0
    %1233 = vmatprep.subr.mxu0 0.0
    %1234 = vmatpush1.xpose.msra.mxu0 0.0
    %1235 = vmatprep.subr.mxu0 0.0
    %1236 = vmatpush1.xpose.msra.mxu0 0.0
    %1237 = vmatprep.subr.mxu0 0.0
    %1238 = vmatpush1.xpose.msra.mxu0 0.0
    %1239 = vmatprep.subr.mxu0 0.0
    %1240 = vmatpush1.xpose.msra.mxu0 0.0
    %1241 = vmatprep.subr.mxu0 0.0
    %1242 = vmatpush1.xpose.msra.mxu0 0.0
    %1243 = vmatprep.subr.mxu0 0.0
    %1244 = vmatpush1.xpose.msra.mxu0 0.0
    %1245 = vmatprep.subr.mxu0 0.0
    %1246 = vmatpush1.xpose.msra.mxu0 0.0
    %1247 = vmatprep.subr.mxu0 0.0
    %1248 = vmatpush1.xpose.msra.mxu0 0.0
    %1249 = vmatprep.subr.mxu0 0.0
    %1250 = vmatpush1.xpose.msra.mxu0 0.0
    %1251 = vmatprep.subr.mxu0 0.0
    %1252 = vmatpush1.xpose.msra.mxu0 0.0
    %1253 = vmatprep.subr.mxu0 0.0
    %1254 = vmatpush1.xpose.msra.mxu0 0.0
    %1255 = vmatprep.subr.mxu0 0.0
    %1256 = vmatpush1.xpose.msra.mxu0 0.0
    %1257 = vmatprep.subr.mxu0 0.0
    %1258 = vmatpush1.xpose.msra.mxu0 0.0
    %1259 = vmatprep.subr.mxu0 0.0
    %1260 = vmatpush1.xpose.msra.mxu0 0.0
    %1261 = vmatprep.subr.mxu0 0.0
    %1262 = vmatpush1.xpose.msra.mxu0 0.0
    %1263 = vmatprep.subr.mxu0 0.0
    %1264 = vmatpush1.xpose.msra.mxu0 0.0
    %1265 = vmatprep.mubr.f32.mxu0 0.0
    %1266 = vmatmul.mubr.f32.gmra.mrb[0].mxu0 %v1197
    %v1267 = vpop.f32.mrb[0].mxu0
    %v1268 = vadd.f32 0.0, %v1267
    %v1269 = vpop.f32.mrb[0].mxu0
    %1270 = vdwg.mxu0
    %1271 = vrot.lane.b32.xlu0 %v193, 104
    %v1272 = vpop.permute.xlu0 %1271
    %1273 = vrot.lane.b32.xlu0 %v189, 72
    %v1274 = vpop.permute.xlu0 %1273
    %v1275 = vsel %vm197, %v1272, 0
    %v1277 = vsel %vm197, %v1274, 0
    %1279 = vmatprep.subr.mxu0 0.0
    %1280 = vmatpush1.xpose.msra.mxu0 %v1277
    %1281 = vmatprep.subr.mxu0 0.0
    %1282 = vmatpush1.xpose.msra.mxu0 0.0
    %1283 = vmatprep.subr.mxu0 0.0
    %1284 = vmatpush1.xpose.msra.mxu0 0.0
    %1285 = vmatprep.subr.mxu0 0.0
    %1286 = vmatpush1.xpose.msra.mxu0 0.0
    %1287 = vmatprep.subr.mxu0 0.0
    %1288 = vmatpush1.xpose.msra.mxu0 0.0
    %1289 = vmatprep.subr.mxu0 0.0
    %1290 = vmatpush1.xpose.msra.mxu0 0.0
    %1291 = vmatprep.subr.mxu0 0.0
    %1292 = vmatpush1.xpose.msra.mxu0 0.0
    %1293 = vmatprep.subr.mxu0 0.0
    %1294 = vmatpush1.xpose.msra.mxu0 0.0
    %1295 = vmatprep.subr.mxu0 0.0
    %1296 = vmatpush1.xpose.msra.mxu0 0.0
    %1297 = vmatprep.subr.mxu0 0.0
    %1298 = vmatpush1.xpose.msra.mxu0 0.0
    %1299 = vmatprep.subr.mxu0 0.0
    %1300 = vmatpush1.xpose.msra.mxu0 0.0
    %1301 = vmatprep.subr.mxu0 0.0
    %1302 = vmatpush1.xpose.msra.mxu0 0.0
    %1303 = vmatprep.subr.mxu0 0.0
    %1304 = vmatpush1.xpose.msra.mxu0 0.0
    %1305 = vmatprep.subr.mxu0 0.0
    %1306 = vmatpush1.xpose.msra.mxu0 0.0
    %1307 = vmatprep.subr.mxu0 0.0
    %1308 = vmatpush1.xpose.msra.mxu0 0.0
    %1309 = vmatprep.subr.mxu0 0.0
    %1310 = vmatpush1.xpose.msra.mxu0 0.0
    %1311 = vmatprep.subr.mxu0 0.0
    %1312 = vmatpush1.xpose.msra.mxu0 0.0
    %1313 = vmatprep.subr.mxu0 0.0
    %1314 = vmatpush1.xpose.msra.mxu0 0.0
    %1315 = vmatprep.subr.mxu0 0.0
    %1316 = vmatpush1.xpose.msra.mxu0 0.0
    %1317 = vmatprep.subr.mxu0 0.0
    %1318 = vmatpush1.xpose.msra.mxu0 0.0
    %1319 = vmatprep.subr.mxu0 0.0
    %1320 = vmatpush1.xpose.msra.mxu0 0.0
    %1321 = vmatprep.subr.mxu0 0.0
    %1322 = vmatpush1.xpose.msra.mxu0 0.0
    %1323 = vmatprep.subr.mxu0 0.0
    %1324 = vmatpush1.xpose.msra.mxu0 0.0
    %1325 = vmatprep.subr.mxu0 0.0
    %1326 = vmatpush1.xpose.msra.mxu0 0.0
    %1327 = vmatprep.subr.mxu0 0.0
    %1328 = vmatpush1.xpose.msra.mxu0 0.0
    %1329 = vmatprep.subr.mxu0 0.0
    %1330 = vmatpush1.xpose.msra.mxu0 0.0
    %1331 = vmatprep.subr.mxu0 0.0
    %1332 = vmatpush1.xpose.msra.mxu0 0.0
    %1333 = vmatprep.subr.mxu0 0.0
    %1334 = vmatpush1.xpose.msra.mxu0 0.0
    %1335 = vmatprep.subr.mxu0 0.0
    %1336 = vmatpush1.xpose.msra.mxu0 0.0
    %1337 = vmatprep.subr.mxu0 0.0
    %1338 = vmatpush1.xpose.msra.mxu0 0.0
    %1339 = vmatprep.subr.mxu0 0.0
    %1340 = vmatpush1.xpose.msra.mxu0 0.0
    %1341 = vmatprep.subr.mxu0 0.0
    %1342 = vmatpush1.xpose.msra.mxu0 0.0
    %1343 = vmatprep.mubr.f32.mxu0 0.0
    %1344 = vmatmul.mubr.f32.gmra.mrb[0].mxu0 %v1275
    %v1345 = vpop.f32.mrb[0].mxu0
    %v1346 = vadd.f32 0.0, %v1345
    %v1347 = vpop.f32.mrb[0].mxu0
    %1348 = vdwg.mxu0
    %v1349 = vsel %vm352, %v1268, -1e+30
    %v1350 = vsel %vm352, %v1346, -1e+30
    %v1351 = vsel %vm197, %v1349, -inf
    %1352 = vmax.xlane.f32.xlu0 %v1351
    %v1353 = vpop.xlane.xlu0 %1352
    %v1354 = vsel %vm197, %v1350, -inf
    %1355 = vmax.xlane.f32.xlu0 %v1354
    %v1356 = vpop.xlane.xlu0 %1355
    %v1357 = vsub.f32 %v1349, %v1353
    %v1358 = vsub.f32 %v1350, %v1356
    %v1359 = vmul.f32 %v1357, 1.442695
    %v1360 = vpow.pop %v1359
    %v1361 = vmul.f32 %v1358, 1.442695
    %v1362 = vpow.pop %v1361
    %v1363 = vsel %vm197, %v1360, 0.0
    %1364 = vadd.xlane.f32.xlu0 %v1363
    %v1365 = vpop.xlane.xlu0 %1364
    %v1366 = vsel %vm197, %v1362, 0.0
    %1367 = vadd.xlane.f32.xlu0 %v1366
    %v1368 = vpop.xlane.xlu0 %1367
    %v1369 = vrcp.pop %v1365
    %v1370 = vrcp.pop %v1368
    %v1371 = vmul.f32 %v1360, %v1369
    %v1372 = vmul.f32 %v1362, %v1370
    %1373 = vrot.lane.b32.xlu0 %v184, 40
    %v1374 = vpop.permute.xlu0 %1373
    %v1377 = vsel %vm197, %v1371, 0
    %1379 = vmatprep.subr.mxu0 0.0
    %1380 = vmatpush1.msra.mxu0 %v1374
    %1381 = vmatprep.subr.mxu0 0.0
    %1382 = vmatpush1.msra.mxu0 0.0
    %1383 = vmatprep.subr.mxu0 0.0
    %1384 = vmatpush1.msra.mxu0 0.0
    %1385 = vmatprep.subr.mxu0 0.0
    %1386 = vmatpush1.msra.mxu0 0.0
    %1387 = vmatprep.subr.mxu0 0.0
    %1388 = vmatpush1.msra.mxu0 0.0
    %1389 = vmatprep.subr.mxu0 0.0
    %1390 = vmatpush1.msra.mxu0 0.0
    %1391 = vmatprep.subr.mxu0 0.0
    %1392 = vmatpush1.msra.mxu0 0.0
    %1393 = vmatprep.subr.mxu0 0.0
    %1394 = vmatpush1.msra.mxu0 0.0
    %1395 = vmatprep.subr.mxu0 0.0
    %1396 = vmatpush1.msra.mxu0 0.0
    %1397 = vmatprep.subr.mxu0 0.0
    %1398 = vmatpush1.msra.mxu0 0.0
    %1399 = vmatprep.subr.mxu0 0.0
    %1400 = vmatpush1.msra.mxu0 0.0
    %1401 = vmatprep.subr.mxu0 0.0
    %1402 = vmatpush1.msra.mxu0 0.0
    %1403 = vmatprep.subr.mxu0 0.0
    %1404 = vmatpush1.msra.mxu0 0.0
    %1405 = vmatprep.subr.mxu0 0.0
    %1406 = vmatpush1.msra.mxu0 0.0
    %1407 = vmatprep.subr.mxu0 0.0
    %1408 = vmatpush1.msra.mxu0 0.0
    %1409 = vmatprep.subr.mxu0 0.0
    %1410 = vmatpush1.msra.mxu0 0.0
    %1411 = vmatprep.subr.mxu0 0.0
    %1412 = vmatpush1.msra.mxu0 0.0
    %1413 = vmatprep.subr.mxu0 0.0
    %1414 = vmatpush1.msra.mxu0 0.0
    %1415 = vmatprep.subr.mxu0 0.0
    %1416 = vmatpush1.msra.mxu0 0.0
    %1417 = vmatprep.subr.mxu0 0.0
    %1418 = vmatpush1.msra.mxu0 0.0
    %1419 = vmatprep.subr.mxu0 0.0
    %1420 = vmatpush1.msra.mxu0 0.0
    %1421 = vmatprep.subr.mxu0 0.0
    %1422 = vmatpush1.msra.mxu0 0.0
    %1423 = vmatprep.subr.mxu0 0.0
    %1424 = vmatpush1.msra.mxu0 0.0
    %1425 = vmatprep.subr.mxu0 0.0
    %1426 = vmatpush1.msra.mxu0 0.0
    %1427 = vmatprep.subr.mxu0 0.0
    %1428 = vmatpush1.msra.mxu0 0.0
    %1429 = vmatprep.subr.mxu0 0.0
    %1430 = vmatpush1.msra.mxu0 0.0
    %1431 = vmatprep.subr.mxu0 0.0
    %1432 = vmatpush1.msra.mxu0 0.0
    %1433 = vmatprep.subr.mxu0 0.0
    %1434 = vmatpush1.msra.mxu0 0.0
    %1435 = vmatprep.subr.mxu0 0.0
    %1436 = vmatpush1.msra.mxu0 0.0
    %1437 = vmatprep.subr.mxu0 0.0
    %1438 = vmatpush1.msra.mxu0 0.0
    %1439 = vmatprep.subr.mxu0 0.0
    %1440 = vmatpush1.msra.mxu0 0.0
    %1441 = vmatprep.subr.mxu0 0.0
    %1442 = vmatpush1.msra.mxu0 0.0
    %1443 = vmatprep.mubr.f32.mxu0 0.0
    %1444 = vmatmul.mubr.f32.gmra.mrb[0].mxu0 %v1377
    %v1445 = vpop.f32.mrb[0].mxu0
    %v1446 = vadd.f32 0.0, %v1445
    %v1447 = vpop.f32.mrb[0].mxu0
    %1448 = vdwg.mxu0
    %1449 = vrot.lane.b32.xlu0 %v189, 40
    %v1450 = vpop.permute.xlu0 %1449
    %v1453 = vsel %vm197, %v1372, 0
    %1455 = vmatprep.subr.mxu0 0.0
    %1456 = vmatpush1.msra.mxu0 %v1450
    %1457 = vmatprep.subr.mxu0 0.0
    %1458 = vmatpush1.msra.mxu0 0.0
    %1459 = vmatprep.subr.mxu0 0.0
    %1460 = vmatpush1.msra.mxu0 0.0
    %1461 = vmatprep.subr.mxu0 0.0
    %1462 = vmatpush1.msra.mxu0 0.0
    %1463 = vmatprep.subr.mxu0 0.0
    %1464 = vmatpush1.msra.mxu0 0.0
    %1465 = vmatprep.subr.mxu0 0.0
    %1466 = vmatpush1.msra.mxu0 0.0
    %1467 = vmatprep.subr.mxu0 0.0
    %1468 = vmatpush1.msra.mxu0 0.0
    %1469 = vmatprep.subr.mxu0 0.0
    %1470 = vmatpush1.msra.mxu0 0.0
    %1471 = vmatprep.subr.mxu0 0.0
    %1472 = vmatpush1.msra.mxu0 0.0
    %1473 = vmatprep.subr.mxu0 0.0
    %1474 = vmatpush1.msra.mxu0 0.0
    %1475 = vmatprep.subr.mxu0 0.0
    %1476 = vmatpush1.msra.mxu0 0.0
    %1477 = vmatprep.subr.mxu0 0.0
    %1478 = vmatpush1.msra.mxu0 0.0
    %1479 = vmatprep.subr.mxu0 0.0
    %1480 = vmatpush1.msra.mxu0 0.0
    %1481 = vmatprep.subr.mxu0 0.0
    %1482 = vmatpush1.msra.mxu0 0.0
    %1483 = vmatprep.subr.mxu0 0.0
    %1484 = vmatpush1.msra.mxu0 0.0
    %1485 = vmatprep.subr.mxu0 0.0
    %1486 = vmatpush1.msra.mxu0 0.0
    %1487 = vmatprep.subr.mxu0 0.0
    %1488 = vmatpush1.msra.mxu0 0.0
    %1489 = vmatprep.subr.mxu0 0.0
    %1490 = vmatpush1.msra.mxu0 0.0
    %1491 = vmatprep.subr.mxu0 0.0
    %1492 = vmatpush1.msra.mxu0 0.0
    %1493 = vmatprep.subr.mxu0 0.0
    %1494 = vmatpush1.msra.mxu0 0.0
    %1495 = vmatprep.subr.mxu0 0.0
    %1496 = vmatpush1.msra.mxu0 0.0
    %1497 = vmatprep.subr.mxu0 0.0
    %1498 = vmatpush1.msra.mxu0 0.0
    %1499 = vmatprep.subr.mxu0 0.0
    %1500 = vmatpush1.msra.mxu0 0.0
    %1501 = vmatprep.subr.mxu0 0.0
    %1502 = vmatpush1.msra.mxu0 0.0
    %1503 = vmatprep.subr.mxu0 0.0
    %1504 = vmatpush1.msra.mxu0 0.0
    %1505 = vmatprep.subr.mxu0 0.0
    %1506 = vmatpush1.msra.mxu0 0.0
    %1507 = vmatprep.subr.mxu0 0.0
    %1508 = vmatpush1.msra.mxu0 0.0
    %1509 = vmatprep.subr.mxu0 0.0
    %1510 = vmatpush1.msra.mxu0 0.0
    %1511 = vmatprep.subr.mxu0 0.0
    %1512 = vmatpush1.msra.mxu0 0.0
    %1513 = vmatprep.subr.mxu0 0.0
    %1514 = vmatpush1.msra.mxu0 0.0
    %1515 = vmatprep.subr.mxu0 0.0
    %1516 = vmatpush1.msra.mxu0 0.0
    %1517 = vmatprep.subr.mxu0 0.0
    %1518 = vmatpush1.msra.mxu0 0.0
    %1519 = vmatprep.mubr.f32.mxu0 0.0
    %1520 = vmatmul.mubr.f32.gmra.mrb[0].mxu0 %v1453
    %v1521 = vpop.f32.mrb[0].mxu0
    %v1522 = vadd.f32 0.0, %v1521
    %v1523 = vpop.f32.mrb[0].mxu0
    %1524 = vdwg.mxu0
    %1527 = vrot.lane.b32.xlu0 %v782, 8
    %v1528 = vpop.permute.xlu0 %1527
    %1529 = vrot.lane.b32.xlu0 %v858, 8
    %v1530 = vpop.permute.xlu0 %1529
    %1535 = vrot.lane.b32.xlu0 %v1114, 16
    %v1536 = vpop.permute.xlu0 %1535
    %1537 = vrot.lane.b32.xlu0 %v1190, 16
    %v1538 = vpop.permute.xlu0 %1537
    %1543 = vrot.lane.b32.xlu0 %v1446, 24
    %v1544 = vpop.permute.xlu0 %1543
    %1545 = vrot.lane.b32.xlu0 %v1522, 24
    %v1546 = vpop.permute.xlu0 %1545
    %v1549 = vsel %vm197, %v450, %v1528
    %v1550 = vsel %vm197, %v526, %v1530
    %vm1551 = vcmask 130048
    %v1552 = vsel %vm1551, %v1549, %v1536
    %v1553 = vsel %vm1551, %v1550, %v1538
    %vm1554 = vcmask 195584
    %v1555 = vsel %vm1554, %v1552, %v1544
    %v1556 = vsel %vm1554, %v1553, %v1546
    %v1557 = vld [vmem:[%s4] sm:$0xff]
    %v1558 = vld [vmem:[%s4 + $0x8] sm:$0xff]
    %v1559 = vld [vmem:[%s4 + $0x10] sm:$0xff]
    %v1560 = vld [vmem:[%s4 + $0x18] sm:$0xff]
    %v1561 = vld [vmem:[%s5] sm:$0x1]
    %v1563 = vlaneseq
    %v1564 = vshrl.u32 %v1563, 7
    %v1565 = vsub.s32 0, %v1564
    %v1566 = vrot.slane %v1561, %v1565
    %v1569 = vsel %vm63, %v1555, 0
    %v1572 = vsel %vm63, %v1556, 0
    %1574 = vmatprep.subr.mxu0 0.0
    %1575 = vmatpush1.msra.mxu0 %v1557
    %1576 = vmatprep.subr.mxu0 0.0
    %1577 = vmatpush1.msra.mxu0 %v1558
    %1578 = vmatprep.subr.mxu0 0.0
    %1579 = vmatpush1.msra.mxu0 %v1559
    %1580 = vmatprep.subr.mxu0 0.0
    %1581 = vmatpush1.msra.mxu0 %v1560
    %1582 = vmatprep.subr.mxu0 0.0
    %1583 = vmatpush1.msra.mxu0 0.0
    %1584 = vmatprep.subr.mxu0 0.0
    %1585 = vmatpush1.msra.mxu0 0.0
    %1586 = vmatprep.subr.mxu0 0.0
    %1587 = vmatpush1.msra.mxu0 0.0
    %1588 = vmatprep.subr.mxu0 0.0
    %1589 = vmatpush1.msra.mxu0 0.0
    %1590 = vmatprep.subr.mxu0 0.0
    %1591 = vmatpush1.msra.mxu0 0.0
    %1592 = vmatprep.subr.mxu0 0.0
    %1593 = vmatpush1.msra.mxu0 0.0
    %1594 = vmatprep.subr.mxu0 0.0
    %1595 = vmatpush1.msra.mxu0 0.0
    %1596 = vmatprep.subr.mxu0 0.0
    %1597 = vmatpush1.msra.mxu0 0.0
    %1598 = vmatprep.subr.mxu0 0.0
    %1599 = vmatpush1.msra.mxu0 0.0
    %1600 = vmatprep.subr.mxu0 0.0
    %1601 = vmatpush1.msra.mxu0 0.0
    %1602 = vmatprep.subr.mxu0 0.0
    %1603 = vmatpush1.msra.mxu0 0.0
    %1604 = vmatprep.subr.mxu0 0.0
    %1605 = vmatpush1.msra.mxu0 0.0
    %1606 = vmatprep.subr.mxu0 0.0
    %1607 = vmatpush1.msra.mxu0 0.0
    %1608 = vmatprep.subr.mxu0 0.0
    %1609 = vmatpush1.msra.mxu0 0.0
    %1610 = vmatprep.subr.mxu0 0.0
    %1611 = vmatpush1.msra.mxu0 0.0
    %1612 = vmatprep.subr.mxu0 0.0
    %1613 = vmatpush1.msra.mxu0 0.0
    %1614 = vmatprep.subr.mxu0 0.0
    %1615 = vmatpush1.msra.mxu0 0.0
    %1616 = vmatprep.subr.mxu0 0.0
    %1617 = vmatpush1.msra.mxu0 0.0
    %1618 = vmatprep.subr.mxu0 0.0
    %1619 = vmatpush1.msra.mxu0 0.0
    %1620 = vmatprep.subr.mxu0 0.0
    %1621 = vmatpush1.msra.mxu0 0.0
    %1622 = vmatprep.subr.mxu0 0.0
    %1623 = vmatpush1.msra.mxu0 0.0
    %1624 = vmatprep.subr.mxu0 0.0
    %1625 = vmatpush1.msra.mxu0 0.0
    %1626 = vmatprep.subr.mxu0 0.0
    %1627 = vmatpush1.msra.mxu0 0.0
    %1628 = vmatprep.subr.mxu0 0.0
    %1629 = vmatpush1.msra.mxu0 0.0
    %1630 = vmatprep.subr.mxu0 0.0
    %1631 = vmatpush1.msra.mxu0 0.0
    %1632 = vmatprep.subr.mxu0 0.0
    %1633 = vmatpush1.msra.mxu0 0.0
    %1634 = vmatprep.subr.mxu0 0.0
    %1635 = vmatpush1.msra.mxu0 0.0
    %1636 = vmatprep.subr.mxu0 0.0
    %1637 = vmatpush1.msra.mxu0 0.0
    %1638 = vmatprep.mubr.f32.mxu0 0.0
    %1639 = vmatmul.mubr.f32.gmra.mrb[0].mxu0 %v1569
    %v1640 = vpop.f32.mrb[0].mxu0
    %v1641 = vadd.f32 %v1566, %v1640
    %v1642 = vpop.f32.mrb[0].mxu0
    %1643 = vmatprep.mubr.f32.mxu0 0.0
    %1644 = vmatmul.mubr.f32.gmra.mrb[0].mxu0 %v1572
    %v1645 = vpop.f32.mrb[0].mxu0
    %v1646 = vadd.f32 %v1566, %v1645
    %v1647 = vpop.f32.mrb[0].mxu0
    %1648 = vdwg.mxu0
    %v1649 = vadd.f32 %v54, %v1641
    %v1650 = vadd.f32 %v55, %v1646
    %v1651 = vld [vmem:[%s6] sm:$0x1]
    %v1652 = vld [vmem:[%s7] sm:$0x1]
    %v1653 = vsel %vm63, %v1649, 0.0
    %1654 = vadd.xlane.f32.xlu0 %v1653
    %v1655 = vpop.xlane.xlu0 %1654
    %v1656 = vsel %vm63, %v1650, 0.0
    %1657 = vadd.xlane.f32.xlu0 %v1656
    %v1658 = vpop.xlane.xlu0 %1657
    %v1659 = vmul.f32 %v1655, %v70
    %v1660 = vmul.f32 %v1658, %v70
    %v1661 = vsub.f32 %v1649, %v1659
    %v1662 = vsub.f32 %v1650, %v1660
    %v1663 = vmul.f32 %v1661, %v1661
    %v1664 = vmul.f32 %v1662, %v1662
    %v1665 = vsel %vm63, %v1663, 0.0
    %1666 = vadd.xlane.f32.xlu0 %v1665
    %v1667 = vpop.xlane.xlu0 %1666
    %v1668 = vsel %vm63, %v1664, 0.0
    %1669 = vadd.xlane.f32.xlu0 %v1668
    %v1670 = vpop.xlane.xlu0 %1669
    %v1671 = vmul.f32 %v1667, %v70
    %v1672 = vmul.f32 %v1670, %v70
    %v1673 = vadd.f32 %v1671, 1e-05
    %v1674 = vadd.f32 %v1672, 1e-05
    %v1675 = vrsqrt.pop %v1673
    %v1676 = vrsqrt.pop %v1674
    %v1677 = vmul.f32 %v1661, %v1675
    %v1678 = vmul.f32 %v1662, %v1676
    %v1680 = vlaneseq
    %v1681 = vshrl.u32 %v1680, 7
    %v1682 = vsub.s32 0, %v1681
    %v1683 = vrot.slane %v1651, %v1682
    %v1685 = vmul.f32 %v1677, %v1683
    %v1686 = vmul.f32 %v1678, %v1683
    %v1688 = vlaneseq
    %v1689 = vshrl.u32 %v1688, 7
    %v1690 = vsub.s32 0, %v1689
    %v1691 = vrot.slane %v1652, %v1690
    %v1693 = vadd.f32 %v1685, %v1691
    %v1694 = vadd.f32 %v1686, %v1691
    %v1695 = vld [vmem:[%s8] sm:$0xff]
    %v1696 = vld [vmem:[%s8 + $0x8] sm:$0xff]
    %v1697 = vld [vmem:[%s8 + $0x10] sm:$0xff]
    %v1698 = vld [vmem:[%s8 + $0x18] sm:$0xff]
    %v1699 = vld [vmem:[%s9] sm:$0x1]
    %v1701 = vlaneseq
    %v1702 = vshrl.u32 %v1701, 7
    %v1703 = vsub.s32 0, %v1702
    %v1704 = vrot.slane %v1699, %v1703
    %v1707 = vsel %vm63, %v1693, 0
    %v1710 = vsel %vm63, %v1694, 0
    %1712 = vmatprep.subr.mxu0 0.0
    %1713 = vmatpush1.msra.mxu0 %v1695
    %1714 = vmatprep.subr.mxu0 0.0
    %1715 = vmatpush1.msra.mxu0 %v1696
    %1716 = vmatprep.subr.mxu0 0.0
    %1717 = vmatpush1.msra.mxu0 %v1697
    %1718 = vmatprep.subr.mxu0 0.0
    %1719 = vmatpush1.msra.mxu0 %v1698
    %1720 = vmatprep.subr.mxu0 0.0
    %1721 = vmatpush1.msra.mxu0 0.0
    %1722 = vmatprep.subr.mxu0 0.0
    %1723 = vmatpush1.msra.mxu0 0.0
    %1724 = vmatprep.subr.mxu0 0.0
    %1725 = vmatpush1.msra.mxu0 0.0
    %1726 = vmatprep.subr.mxu0 0.0
    %1727 = vmatpush1.msra.mxu0 0.0
    %1728 = vmatprep.subr.mxu0 0.0
    %1729 = vmatpush1.msra.mxu0 0.0
    %1730 = vmatprep.subr.mxu0 0.0
    %1731 = vmatpush1.msra.mxu0 0.0
    %1732 = vmatprep.subr.mxu0 0.0
    %1733 = vmatpush1.msra.mxu0 0.0
    %1734 = vmatprep.subr.mxu0 0.0
    %1735 = vmatpush1.msra.mxu0 0.0
    %1736 = vmatprep.subr.mxu0 0.0
    %1737 = vmatpush1.msra.mxu0 0.0
    %1738 = vmatprep.subr.mxu0 0.0
    %1739 = vmatpush1.msra.mxu0 0.0
    %1740 = vmatprep.subr.mxu0 0.0
    %1741 = vmatpush1.msra.mxu0 0.0
    %1742 = vmatprep.subr.mxu0 0.0
    %1743 = vmatpush1.msra.mxu0 0.0
    %1744 = vmatprep.subr.mxu0 0.0
    %1745 = vmatpush1.msra.mxu0 0.0
    %1746 = vmatprep.subr.mxu0 0.0
    %1747 = vmatpush1.msra.mxu0 0.0
    %1748 = vmatprep.subr.mxu0 0.0
    %1749 = vmatpush1.msra.mxu0 0.0
    %1750 = vmatprep.subr.mxu0 0.0
    %1751 = vmatpush1.msra.mxu0 0.0
    %1752 = vmatprep.subr.mxu0 0.0
    %1753 = vmatpush1.msra.mxu0 0.0
    %1754 = vmatprep.subr.mxu0 0.0
    %1755 = vmatpush1.msra.mxu0 0.0
    %1756 = vmatprep.subr.mxu0 0.0
    %1757 = vmatpush1.msra.mxu0 0.0
    %1758 = vmatprep.subr.mxu0 0.0
    %1759 = vmatpush1.msra.mxu0 0.0
    %1760 = vmatprep.subr.mxu0 0.0
    %1761 = vmatpush1.msra.mxu0 0.0
    %1762 = vmatprep.subr.mxu0 0.0
    %1763 = vmatpush1.msra.mxu0 0.0
    %1764 = vmatprep.subr.mxu0 0.0
    %1765 = vmatpush1.msra.mxu0 0.0
    %1766 = vmatprep.subr.mxu0 0.0
    %1767 = vmatpush1.msra.mxu0 0.0
    %1768 = vmatprep.subr.mxu0 0.0
    %1769 = vmatpush1.msra.mxu0 0.0
    %1770 = vmatprep.subr.mxu0 0.0
    %1771 = vmatpush1.msra.mxu0 0.0
    %1772 = vmatprep.subr.mxu0 0.0
    %1773 = vmatpush1.msra.mxu0 0.0
    %1774 = vmatprep.subr.mxu0 0.0
    %1775 = vmatpush1.msra.mxu0 0.0
    %1776 = vmatprep.mubr.f32.mxu0 0.0
    %1777 = vmatmul.mubr.f32.gmra.mrb[0].mxu0 %v1707
    %v1778 = vpop.f32.mrb[0].mxu0
    %v1779 = vadd.f32 %v1704, %v1778
    %v1780 = vpop.f32.mrb[0].mxu0
    %1781 = vmatprep.mubr.f32.mxu0 0.0
    %1782 = vmatmul.mubr.f32.gmra.mrb[0].mxu0 %v1710
    %v1783 = vpop.f32.mrb[0].mxu0
    %v1784 = vadd.f32 %v1704, %v1783
    %v1785 = vpop.f32.mrb[0].mxu0
    %1786 = vdwg.mxu0
    %v1787 = vmax.f32 %v1779, 0.0
    %v1788 = vmax.f32 %v1784, 0.0
    %v1789 = vld [vmem:[%s10] sm:$0xff]
    %v1790 = vld [vmem:[%s10 + $0x8] sm:$0xff]
    %v1791 = vld [vmem:[%s10 + $0x10] sm:$0xff]
    %v1792 = vld [vmem:[%s10 + $0x18] sm:$0xff]
    %v1793 = vld [vmem:[%s10 + $0x20] sm:$0xff]
    %v1794 = vld [vmem:[%s10 + $0x28] sm:$0xff]
    %v1795 = vld [vmem:[%s10 + $0x30] sm:$0xff]
    %v1796 = vld [vmem:[%s10 + $0x38] sm:$0xff]
    %v1797 = vld [vmem:[%s10 + $0x40] sm:$0xff]
    %v1798 = vld [vmem:[%s10 + $0x48] sm:$0xff]
    %v1799 = vld [vmem:[%s10 + $0x50] sm:$0xff]
    %v1800 = vld [vmem:[%s10 + $0x58] sm:$0xff]
    %v1801 = vld [vmem:[%s10 + $0x60] sm:$0xff]
    %v1802 = vld [vmem:[%s10 + $0x68] sm:$0xff]
    %v1803 = vld [vmem:[%s10 + $0x70] sm:$0xff]
    %v1804 = vld [vmem:[%s10 + $0x78] sm:$0xff]
    %v1805 = vld [vmem:[%s11] sm:$0x1]
    %v1807 = vlaneseq
    %v1808 = vshrl.u32 %v1807, 7
    %v1809 = vsub.s32 0, %v1808
    %v1810 = vrot.slane %v1805, %v1809
    %1812 = vmatprep.subr.mxu0 0.0
    %1813 = vmatpush1.msra.mxu0 %v1789
    %1814 = vmatprep.subr.mxu0 0.0
    %1815 = vmatpush1.msra.mxu0 %v1790
    %1816 = vmatprep.subr.mxu0 0.0
    %1817 = vmatpush1.msra.mxu0 %v1791
    %1818 = vmatprep.subr.mxu0 0.0
    %1819 = vmatpush1.msra.mxu0 %v1792
    %1820 = vmatprep.subr.mxu0 0.0
    %1821 = vmatpush1.msra.mxu0 %v1793
    %1822 = vmatprep.subr.mxu0 0.0
    %1823 = vmatpush1.msra.mxu0 %v1794
    %1824 = vmatprep.subr.mxu0 0.0
    %1825 = vmatpush1.msra.mxu0 %v1795
    %1826 = vmatprep.subr.mxu0 0.0
    %1827 = vmatpush1.msra.mxu0 %v1796
    %1828 = vmatprep.subr.mxu0 0.0
    %1829 = vmatpush1.msra.mxu0 %v1797
    %1830 = vmatprep.subr.mxu0 0.0
    %1831 = vmatpush1.msra.mxu0 %v1798
    %1832 = vmatprep.subr.mxu0 0.0
    %1833 = vmatpush1.msra.mxu0 %v1799
    %1834 = vmatprep.subr.mxu0 0.0
    %1835 = vmatpush1.msra.mxu0 %v1800
    %1836 = vmatprep.subr.mxu0 0.0
    %1837 = vmatpush1.msra.mxu0 %v1801
    %1838 = vmatprep.subr.mxu0 0.0
    %1839 = vmatpush1.msra.mxu0 %v1802
    %1840 = vmatprep.subr.mxu0 0.0
    %1841 = vmatpush1.msra.mxu0 %v1803
    %1842 = vmatprep.subr.mxu0 0.0
    %1843 = vmatpush1.msra.mxu0 %v1804
    %1844 = vmatprep.subr.mxu0 0.0
    %1845 = vmatpush1.msra.mxu0 0.0
    %1846 = vmatprep.subr.mxu0 0.0
    %1847 = vmatpush1.msra.mxu0 0.0
    %1848 = vmatprep.subr.mxu0 0.0
    %1849 = vmatpush1.msra.mxu0 0.0
    %1850 = vmatprep.subr.mxu0 0.0
    %1851 = vmatpush1.msra.mxu0 0.0
    %1852 = vmatprep.subr.mxu0 0.0
    %1853 = vmatpush1.msra.mxu0 0.0
    %1854 = vmatprep.subr.mxu0 0.0
    %1855 = vmatpush1.msra.mxu0 0.0
    %1856 = vmatprep.subr.mxu0 0.0
    %1857 = vmatpush1.msra.mxu0 0.0
    %1858 = vmatprep.subr.mxu0 0.0
    %1859 = vmatpush1.msra.mxu0 0.0
    %1860 = vmatprep.subr.mxu0 0.0
    %1861 = vmatpush1.msra.mxu0 0.0
    %1862 = vmatprep.subr.mxu0 0.0
    %1863 = vmatpush1.msra.mxu0 0.0
    %1864 = vmatprep.subr.mxu0 0.0
    %1865 = vmatpush1.msra.mxu0 0.0
    %1866 = vmatprep.subr.mxu0 0.0
    %1867 = vmatpush1.msra.mxu0 0.0
    %1868 = vmatprep.subr.mxu0 0.0
    %1869 = vmatpush1.msra.mxu0 0.0
    %1870 = vmatprep.subr.mxu0 0.0
    %1871 = vmatpush1.msra.mxu0 0.0
    %1872 = vmatprep.subr.mxu0 0.0
    %1873 = vmatpush1.msra.mxu0 0.0
    %1874 = vmatprep.subr.mxu0 0.0
    %1875 = vmatpush1.msra.mxu0 0.0
    %1876 = vmatprep.mubr.f32.mxu0 0.0
    %1877 = vmatmul.mubr.f32.gmra.mrb[0].mxu0 %v1787
    %v1878 = vpop.f32.mrb[0].mxu0
    %v1879 = vadd.f32 %v1810, %v1878
    %v1880 = vpop.f32.mrb[0].mxu0
    %1881 = vmatprep.mubr.f32.mxu0 0.0
    %1882 = vmatmul.mubr.f32.gmra.mrb[0].mxu0 %v1788
    %v1883 = vpop.f32.mrb[0].mxu0
    %v1884 = vadd.f32 %v1810, %v1883
    %v1885 = vpop.f32.mrb[0].mxu0
    %1886 = vdwg.mxu0
    %v1887 = vadd.f32 %v1649, %v1879
    %v1888 = vadd.f32 %v1650, %v1884
    %s1889 = scalar_lea.vmem %s1, 1
    %v1890 = vld [vmem:[%s1889] sm:$0x1]
    %s1891 = scalar_lea.vmem %s2, 1
    %v1892 = vld [vmem:[%s1891] sm:$0x1]
    %v1893 = vsel %vm63, %v1887, 0.0
    %1894 = vadd.xlane.f32.xlu0 %v1893
    %v1895 = vpop.xlane.xlu0 %1894
    %v1896 = vsel %vm63, %v1888, 0.0
    %1897 = vadd.xlane.f32.xlu0 %v1896
    %v1898 = vpop.xlane.xlu0 %1897
    %v1899 = vmul.f32 %v1895, %v70
    %v1900 = vmul.f32 %v1898, %v70
    %v1901 = vsub.f32 %v1887, %v1899
    %v1902 = vsub.f32 %v1888, %v1900
    %v1903 = vmul.f32 %v1901, %v1901
    %v1904 = vmul.f32 %v1902, %v1902
    %v1905 = vsel %vm63, %v1903, 0.0
    %1906 = vadd.xlane.f32.xlu0 %v1905
    %v1907 = vpop.xlane.xlu0 %1906
    %v1908 = vsel %vm63, %v1904, 0.0
    %1909 = vadd.xlane.f32.xlu0 %v1908
    %v1910 = vpop.xlane.xlu0 %1909
    %v1911 = vmul.f32 %v1907, %v70
    %v1912 = vmul.f32 %v1910, %v70
    %v1913 = vadd.f32 %v1911, 1e-05
    %v1914 = vadd.f32 %v1912, 1e-05
    %v1915 = vrsqrt.pop %v1913
    %v1916 = vrsqrt.pop %v1914
    %v1917 = vmul.f32 %v1901, %v1915
    %v1918 = vmul.f32 %v1902, %v1916
    %v1920 = vlaneseq
    %v1921 = vshrl.u32 %v1920, 7
    %v1922 = vsub.s32 0, %v1921
    %v1923 = vrot.slane %v1890, %v1922
    %v1925 = vmul.f32 %v1917, %v1923
    %v1926 = vmul.f32 %v1918, %v1923
    %v1928 = vlaneseq
    %v1929 = vshrl.u32 %v1928, 7
    %v1930 = vsub.s32 0, %v1929
    %v1931 = vrot.slane %v1892, %v1930
    %v1933 = vadd.f32 %v1925, %v1931
    %v1934 = vadd.f32 %v1926, %v1931
    %s1935 = scalar_lea.vmem %s3, 32
    %v1936 = vld [vmem:[%s1935] sm:$0xff]
    %v1937 = vld [vmem:[%s1935 + $0x8] sm:$0xff]
    %v1938 = vld [vmem:[%s1935 + $0x10] sm:$0xff]
    %v1939 = vld [vmem:[%s1935 + $0x18] sm:$0xff]
    %v1941 = vsel %vm63, %v1933, 0
    %v1944 = vsel %vm63, %v1934, 0
    %1946 = vmatprep.subr.mxu0 0.0
    %1947 = vmatpush1.msra.mxu0 %v1936
    %1948 = vmatprep.subr.mxu0 0.0
    %1949 = vmatpush1.msra.mxu0 %v1937
    %1950 = vmatprep.subr.mxu0 0.0
    %1951 = vmatpush1.msra.mxu0 %v1938
    %1952 = vmatprep.subr.mxu0 0.0
    %1953 = vmatpush1.msra.mxu0 %v1939
    %1954 = vmatprep.subr.mxu0 0.0
    %1955 = vmatpush1.msra.mxu0 0.0
    %1956 = vmatprep.subr.mxu0 0.0
    %1957 = vmatpush1.msra.mxu0 0.0
    %1958 = vmatprep.subr.mxu0 0.0
    %1959 = vmatpush1.msra.mxu0 0.0
    %1960 = vmatprep.subr.mxu0 0.0
    %1961 = vmatpush1.msra.mxu0 0.0
    %1962 = vmatprep.subr.mxu0 0.0
    %1963 = vmatpush1.msra.mxu0 0.0
    %1964 = vmatprep.subr.mxu0 0.0
    %1965 = vmatpush1.msra.mxu0 0.0
    %1966 = vmatprep.subr.mxu0 0.0
    %1967 = vmatpush1.msra.mxu0 0.0
    %1968 = vmatprep.subr.mxu0 0.0
    %1969 = vmatpush1.msra.mxu0 0.0
    %1970 = vmatprep.subr.mxu0 0.0
    %1971 = vmatpush1.msra.mxu0 0.0
    %1972 = vmatprep.subr.mxu0 0.0
    %1973 = vmatpush1.msra.mxu0 0.0
    %1974 = vmatprep.subr.mxu0 0.0
    %1975 = vmatpush1.msra.mxu0 0.0
    %1976 = vmatprep.subr.mxu0 0.0
    %1977 = vmatpush1.msra.mxu0 0.0
    %1978 = vmatprep.subr.mxu0 0.0
    %1979 = vmatpush1.msra.mxu0 0.0
    %1980 = vmatprep.subr.mxu0 0.0
    %1981 = vmatpush1.msra.mxu0 0.0
    %1982 = vmatprep.subr.mxu0 0.0
    %1983 = vmatpush1.msra.mxu0 0.0
    %1984 = vmatprep.subr.mxu0 0.0
    %1985 = vmatpush1.msra.mxu0 0.0
    %1986 = vmatprep.subr.mxu0 0.0
    %1987 = vmatpush1.msra.mxu0 0.0
    %1988 = vmatprep.subr.mxu0 0.0
    %1989 = vmatpush1.msra.mxu0 0.0
    %1990 = vmatprep.subr.mxu0 0.0
    %1991 = vmatpush1.msra.mxu0 0.0
    %1992 = vmatprep.subr.mxu0 0.0
    %1993 = vmatpush1.msra.mxu0 0.0
    %1994 = vmatprep.subr.mxu0 0.0
    %1995 = vmatpush1.msra.mxu0 0.0
    %1996 = vmatprep.subr.mxu0 0.0
    %1997 = vmatpush1.msra.mxu0 0.0
    %1998 = vmatprep.subr.mxu0 0.0
    %1999 = vmatpush1.msra.mxu0 0.0
    %2000 = vmatprep.subr.mxu0 0.0
    %2001 = vmatpush1.msra.mxu0 0.0
    %2002 = vmatprep.subr.mxu0 0.0
    %2003 = vmatpush1.msra.mxu0 0.0
    %2004 = vmatprep.subr.mxu0 0.0
    %2005 = vmatpush1.msra.mxu0 0.0
    %2006 = vmatprep.subr.mxu0 0.0
    %2007 = vmatpush1.msra.mxu0 0.0
    %2008 = vmatprep.subr.mxu0 0.0
    %2009 = vmatpush1.msra.mxu0 0.0
    %2010 = vmatprep.mubr.f32.mxu0 0.0
    %2011 = vmatmul.mubr.f32.gmra.mrb[0].mxu0 %v1941
    %v2012 = vpop.f32.mrb[0].mxu0
    %v2013 = vadd.f32 0.0, %v2012
    %v2014 = vpop.f32.mrb[0].mxu0
    %2015 = vmatprep.mubr.f32.mxu0 0.0
    %2016 = vmatmul.mubr.f32.gmra.mrb[0].mxu0 %v1944
    %v2017 = vpop.f32.mrb[0].mxu0
    %v2018 = vadd.f32 0.0, %v2017
    %v2019 = vpop.f32.mrb[0].mxu0
    %2020 = vdwg.mxu0
    %v2021 = vmul.f32 %v2013, 0.35355338
    %v2022 = vmul.f32 %v2018, 0.35355338
    %2024 = vrot.lane.b32.xlu0 %v2013, 96
    %v2025 = vpop.permute.xlu0 %2024
    %v2027 = vsel %vm197, %v2021, 0
    %v2029 = vsel %vm197, %v2025, 0
    %2031 = vmatprep.subr.mxu0 0.0
    %2032 = vmatpush1.xpose.msra.mxu0 %v2029
    %2033 = vmatprep.subr.mxu0 0.0
    %2034 = vmatpush1.xpose.msra.mxu0 0.0
    %2035 = vmatprep.subr.mxu0 0.0
    %2036 = vmatpush1.xpose.msra.mxu0 0.0
    %2037 = vmatprep.subr.mxu0 0.0
    %2038 = vmatpush1.xpose.msra.mxu0 0.0
    %2039 = vmatprep.subr.mxu0 0.0
    %2040 = vmatpush1.xpose.msra.mxu0 0.0
    %2041 = vmatprep.subr.mxu0 0.0
    %2042 = vmatpush1.xpose.msra.mxu0 0.0
    %2043 = vmatprep.subr.mxu0 0.0
    %2044 = vmatpush1.xpose.msra.mxu0 0.0
    %2045 = vmatprep.subr.mxu0 0.0
    %2046 = vmatpush1.xpose.msra.mxu0 0.0
    %2047 = vmatprep.subr.mxu0 0.0
    %2048 = vmatpush1.xpose.msra.mxu0 0.0
    %2049 = vmatprep.subr.mxu0 0.0
    %2050 = vmatpush1.xpose.msra.mxu0 0.0
    %2051 = vmatprep.subr.mxu0 0.0
    %2052 = vmatpush1.xpose.msra.mxu0 0.0
    %2053 = vmatprep.subr.mxu0 0.0
    %2054 = vmatpush1.xpose.msra.mxu0 0.0
    %2055 = vmatprep.subr.mxu0 0.0
    %2056 = vmatpush1.xpose.msra.mxu0 0.0
    %2057 = vmatprep.subr.mxu0 0.0
    %2058 = vmatpush1.xpose.msra.mxu0 0.0
    %2059 = vmatprep.subr.mxu0 0.0
    %2060 = vmatpush1.xpose.msra.mxu0 0.0
    %2061 = vmatprep.subr.mxu0 0.0
    %2062 = vmatpush1.xpose.msra.mxu0 0.0
    %2063 = vmatprep.subr.mxu0 0.0
    %2064 = vmatpush1.xpose.msra.mxu0 0.0
    %2065 = vmatprep.subr.mxu0 0.0
    %2066 = vmatpush1.xpose.msra.mxu0 0.0
    %2067 = vmatprep.subr.mxu0 0.0
    %2068 = vmatpush1.xpose.msra.mxu0 0.0
    %2069 = vmatprep.subr.mxu0 0.0
    %2070 = vmatpush1.xpose.msra.mxu0 0.0
    %2071 = vmatprep.subr.mxu0 0.0
    %2072 = vmatpush1.xpose.msra.mxu0 0.0
    %2073 = vmatprep.subr.mxu0 0.0
    %2074 = vmatpush1.xpose.msra.mxu0 0.0
    %2075 = vmatprep.subr.mxu0 0.0
    %2076 = vmatpush1.xpose.msra.mxu0 0.0
    %2077 = vmatprep.subr.mxu0 0.0
    %2078 = vmatpush1.xpose.msra.mxu0 0.0
    %2079 = vmatprep.subr.mxu0 0.0
    %2080 = vmatpush1.xpose.msra.mxu0 0.0
    %2081 = vmatprep.subr.mxu0 0.0
    %2082 = vmatpush1.xpose.msra.mxu0 0.0
    %2083 = vmatprep.subr.mxu0 0.0
    %2084 = vmatpush1.xpose.msra.mxu0 0.0
    %2085 = vmatprep.subr.mxu0 0.0
    %2086 = vmatpush1.xpose.msra.mxu0 0.0
    %2087 = vmatprep.subr.mxu0 0.0
    %2088 = vmatpush1.xpose.msra.mxu0 0.0
    %2089 = vmatprep.subr.mxu0 0.0
    %2090 = vmatpush1.xpose.msra.mxu0 0.0
    %2091 = vmatprep.subr.mxu0 0.0
    %2092 = vmatpush1.xpose.msra.mxu0 0.0
    %2093 = vmatprep.subr.mxu0 0.0
    %2094 = vmatpush1.xpose.msra.mxu0 0.0
    %2095 = vmatprep.mubr.f32.mxu0 0.0
    %2096 = vmatmul.mubr.f32.gmra.mrb[0].mxu0 %v2027
    %v2097 = vpop.f32.mrb[0].mxu0
    %v2098 = vadd.f32 0.0, %v2097
    %v2099 = vpop.f32.mrb[0].mxu0
    %2100 = vdwg.mxu0
    %2102 = vrot.lane.b32.xlu0 %v2018, 96
    %v2103 = vpop.permute.xlu0 %2102
    %v2105 = vsel %vm197, %v2022, 0
    %v2107 = vsel %vm197, %v2103, 0
    %2109 = vmatprep.subr.mxu0 0.0
    %2110 = vmatpush1.xpose.msra.mxu0 %v2107
    %2111 = vmatprep.subr.mxu0 0.0
    %2112 = vmatpush1.xpose.msra.mxu0 0.0
    %2113 = vmatprep.subr.mxu0 0.0
    %2114 = vmatpush1.xpose.msra.mxu0 0.0
    %2115 = vmatprep.subr.mxu0 0.0
    %2116 = vmatpush1.xpose.msra.mxu0 0.0
    %2117 = vmatprep.subr.mxu0 0.0
    %2118 = vmatpush1.xpose.msra.mxu0 0.0
    %2119 = vmatprep.subr.mxu0 0.0
    %2120 = vmatpush1.xpose.msra.mxu0 0.0
    %2121 = vmatprep.subr.mxu0 0.0
    %2122 = vmatpush1.xpose.msra.mxu0 0.0
    %2123 = vmatprep.subr.mxu0 0.0
    %2124 = vmatpush1.xpose.msra.mxu0 0.0
    %2125 = vmatprep.subr.mxu0 0.0
    %2126 = vmatpush1.xpose.msra.mxu0 0.0
    %2127 = vmatprep.subr.mxu0 0.0
    %2128 = vmatpush1.xpose.msra.mxu0 0.0
    %2129 = vmatprep.subr.mxu0 0.0
    %2130 = vmatpush1.xpose.msra.mxu0 0.0
    %2131 = vmatprep.subr.mxu0 0.0
    %2132 = vmatpush1.xpose.msra.mxu0 0.0
    %2133 = vmatprep.subr.mxu0 0.0
    %2134 = vmatpush1.xpose.msra.mxu0 0.0
    %2135 = vmatprep.subr.mxu0 0.0
    %2136 = vmatpush1.xpose.msra.mxu0 0.0
    %2137 = vmatprep.subr.mxu0 0.0
    %2138 = vmatpush1.xpose.msra.mxu0 0.0
    %2139 = vmatprep.subr.mxu0 0.0
    %2140 = vmatpush1.xpose.msra.mxu0 0.0
    %2141 = vmatprep.subr.mxu0 0.0
    %2142 = vmatpush1.xpose.msra.mxu0 0.0
    %2143 = vmatprep.subr.mxu0 0.0
    %2144 = vmatpush1.xpose.msra.mxu0 0.0
    %2145 = vmatprep.subr.mxu0 0.0
    %2146 = vmatpush1.xpose.msra.mxu0 0.0
    %2147 = vmatprep.subr.mxu0 0.0
    %2148 = vmatpush1.xpose.msra.mxu0 0.0
    %2149 = vmatprep.subr.mxu0 0.0
    %2150 = vmatpush1.xpose.msra.mxu0 0.0
    %2151 = vmatprep.subr.mxu0 0.0
    %2152 = vmatpush1.xpose.msra.mxu0 0.0
    %2153 = vmatprep.subr.mxu0 0.0
    %2154 = vmatpush1.xpose.msra.mxu0 0.0
    %2155 = vmatprep.subr.mxu0 0.0
    %2156 = vmatpush1.xpose.msra.mxu0 0.0
    %2157 = vmatprep.subr.mxu0 0.0
    %2158 = vmatpush1.xpose.msra.mxu0 0.0
    %2159 = vmatprep.subr.mxu0 0.0
    %2160 = vmatpush1.xpose.msra.mxu0 0.0
    %2161 = vmatprep.subr.mxu0 0.0
    %2162 = vmatpush1.xpose.msra.mxu0 0.0
    %2163 = vmatprep.subr.mxu0 0.0
    %2164 = vmatpush1.xpose.msra.mxu0 0.0
    %2165 = vmatprep.subr.mxu0 0.0
    %2166 = vmatpush1.xpose.msra.mxu0 0.0
    %2167 = vmatprep.subr.mxu0 0.0
    %2168 = vmatpush1.xpose.msra.mxu0 0.0
    %2169 = vmatprep.subr.mxu0 0.0
    %2170 = vmatpush1.xpose.msra.mxu0 0.0
    %2171 = vmatprep.subr.mxu0 0.0
    %2172 = vmatpush1.xpose.msra.mxu0 0.0
    %2173 = vmatprep.mubr.f32.mxu0 0.0
    %2174 = vmatmul.mubr.f32.gmra.mrb[0].mxu0 %v2105
    %v2175 = vpop.f32.mrb[0].mxu0
    %v2176 = vadd.f32 0.0, %v2175
    %v2177 = vpop.f32.mrb[0].mxu0
    %2178 = vdwg.mxu0
    %v2179 = vsel %vm352, %v2098, -1e+30
    %v2180 = vsel %vm352, %v2176, -1e+30
    %v2181 = vsel %vm197, %v2179, -inf
    %2182 = vmax.xlane.f32.xlu0 %v2181
    %v2183 = vpop.xlane.xlu0 %2182
    %v2184 = vsel %vm197, %v2180, -inf
    %2185 = vmax.xlane.f32.xlu0 %v2184
    %v2186 = vpop.xlane.xlu0 %2185
    %v2187 = vsub.f32 %v2179, %v2183
    %v2188 = vsub.f32 %v2180, %v2186
    %v2189 = vmul.f32 %v2187, 1.442695
    %v2190 = vpow.pop %v2189
    %v2191 = vmul.f32 %v2188, 1.442695
    %v2192 = vpow.pop %v2191
    %v2193 = vsel %vm197, %v2190, 0.0
    %2194 = vadd.xlane.f32.xlu0 %v2193
    %v2195 = vpop.xlane.xlu0 %2194
    %v2196 = vsel %vm197, %v2192, 0.0
    %2197 = vadd.xlane.f32.xlu0 %v2196
    %v2198 = vpop.xlane.xlu0 %2197
    %v2199 = vrcp.pop %v2195
    %v2200 = vrcp.pop %v2198
    %v2201 = vmul.f32 %v2190, %v2199
    %v2202 = vmul.f32 %v2192, %v2200
    %2203 = vrot.lane.b32.xlu0 %v2013, 64
    %v2204 = vpop.permute.xlu0 %2203
    %v2207 = vsel %vm197, %v2201, 0
    %2209 = vmatprep.subr.mxu0 0.0
    %2210 = vmatpush1.msra.mxu0 %v2204
    %2211 = vmatprep.subr.mxu0 0.0
    %2212 = vmatpush1.msra.mxu0 0.0
    %2213 = vmatprep.subr.mxu0 0.0
    %2214 = vmatpush1.msra.mxu0 0.0
    %2215 = vmatprep.subr.mxu0 0.0
    %2216 = vmatpush1.msra.mxu0 0.0
    %2217 = vmatprep.subr.mxu0 0.0
    %2218 = vmatpush1.msra.mxu0 0.0
    %2219 = vmatprep.subr.mxu0 0.0
    %2220 = vmatpush1.msra.mxu0 0.0
    %2221 = vmatprep.subr.mxu0 0.0
    %2222 = vmatpush1.msra.mxu0 0.0
    %2223 = vmatprep.subr.mxu0 0.0
    %2224 = vmatpush1.msra.mxu0 0.0
    %2225 = vmatprep.subr.mxu0 0.0
    %2226 = vmatpush1.msra.mxu0 0.0
    %2227 = vmatprep.subr.mxu0 0.0
    %2228 = vmatpush1.msra.mxu0 0.0
    %2229 = vmatprep.subr.mxu0 0.0
    %2230 = vmatpush1.msra.mxu0 0.0
    %2231 = vmatprep.subr.mxu0 0.0
    %2232 = vmatpush1.msra.mxu0 0.0
    %2233 = vmatprep.subr.mxu0 0.0
    %2234 = vmatpush1.msra.mxu0 0.0
    %2235 = vmatprep.subr.mxu0 0.0
    %2236 = vmatpush1.msra.mxu0 0.0
    %2237 = vmatprep.subr.mxu0 0.0
    %2238 = vmatpush1.msra.mxu0 0.0
    %2239 = vmatprep.subr.mxu0 0.0
    %2240 = vmatpush1.msra.mxu0 0.0
    %2241 = vmatprep.subr.mxu0 0.0
    %2242 = vmatpush1.msra.mxu0 0.0
    %2243 = vmatprep.subr.mxu0 0.0
    %2244 = vmatpush1.msra.mxu0 0.0
    %2245 = vmatprep.subr.mxu0 0.0
    %2246 = vmatpush1.msra.mxu0 0.0
    %2247 = vmatprep.subr.mxu0 0.0
    %2248 = vmatpush1.msra.mxu0 0.0
    %2249 = vmatprep.subr.mxu0 0.0
    %2250 = vmatpush1.msra.mxu0 0.0
    %2251 = vmatprep.subr.mxu0 0.0
    %2252 = vmatpush1.msra.mxu0 0.0
    %2253 = vmatprep.subr.mxu0 0.0
    %2254 = vmatpush1.msra.mxu0 0.0
    %2255 = vmatprep.subr.mxu0 0.0
    %2256 = vmatpush1.msra.mxu0 0.0
    %2257 = vmatprep.subr.mxu0 0.0
    %2258 = vmatpush1.msra.mxu0 0.0
    %2259 = vmatprep.subr.mxu0 0.0
    %2260 = vmatpush1.msra.mxu0 0.0
    %2261 = vmatprep.subr.mxu0 0.0
    %2262 = vmatpush1.msra.mxu0 0.0
    %2263 = vmatprep.subr.mxu0 0.0
    %2264 = vmatpush1.msra.mxu0 0.0
    %2265 = vmatprep.subr.mxu0 0.0
    %2266 = vmatpush1.msra.mxu0 0.0
    %2267 = vmatprep.subr.mxu0 0.0
    %2268 = vmatpush1.msra.mxu0 0.0
    %2269 = vmatprep.subr.mxu0 0.0
    %2270 = vmatpush1.msra.mxu0 0.0
    %2271 = vmatprep.subr.mxu0 0.0
    %2272 = vmatpush1.msra.mxu0 0.0
    %2273 = vmatprep.mubr.f32.mxu0 0.0
    %2274 = vmatmul.mubr.f32.gmra.mrb[0].mxu0 %v2207
    %v2275 = vpop.f32.mrb[0].mxu0
    %v2276 = vadd.f32 0.0, %v2275
    %v2277 = vpop.f32.mrb[0].mxu0
    %2278 = vdwg.mxu0
    %2279 = vrot.lane.b32.xlu0 %v2018, 64
    %v2280 = vpop.permute.xlu0 %2279
    %v2283 = vsel %vm197, %v2202, 0
    %2285 = vmatprep.subr.mxu0 0.0
    %2286 = vmatpush1.msra.mxu0 %v2280
    %2287 = vmatprep.subr.mxu0 0.0
    %2288 = vmatpush1.msra.mxu0 0.0
    %2289 = vmatprep.subr.mxu0 0.0
    %2290 = vmatpush1.msra.mxu0 0.0
    %2291 = vmatprep.subr.mxu0 0.0
    %2292 = vmatpush1.msra.mxu0 0.0
    %2293 = vmatprep.subr.mxu0 0.0
    %2294 = vmatpush1.msra.mxu0 0.0
    %2295 = vmatprep.subr.mxu0 0.0
    %2296 = vmatpush1.msra.mxu0 0.0
    %2297 = vmatprep.subr.mxu0 0.0
    %2298 = vmatpush1.msra.mxu0 0.0
    %2299 = vmatprep.subr.mxu0 0.0
    %2300 = vmatpush1.msra.mxu0 0.0
    %2301 = vmatprep.subr.mxu0 0.0
    %2302 = vmatpush1.msra.mxu0 0.0
    %2303 = vmatprep.subr.mxu0 0.0
    %2304 = vmatpush1.msra.mxu0 0.0
    %2305 = vmatprep.subr.mxu0 0.0
    %2306 = vmatpush1.msra.mxu0 0.0
    %2307 = vmatprep.subr.mxu0 0.0
    %2308 = vmatpush1.msra.mxu0 0.0
    %2309 = vmatprep.subr.mxu0 0.0
    %2310 = vmatpush1.msra.mxu0 0.0
    %2311 = vmatprep.subr.mxu0 0.0
    %2312 = vmatpush1.msra.mxu0 0.0
    %2313 = vmatprep.subr.mxu0 0.0
    %2314 = vmatpush1.msra.mxu0 0.0
    %2315 = vmatprep.subr.mxu0 0.0
    %2316 = vmatpush1.msra.mxu0 0.0
    %2317 = vmatprep.subr.mxu0 0.0
    %2318 = vmatpush1.msra.mxu0 0.0
    %2319 = vmatprep.subr.mxu0 0.0
    %2320 = vmatpush1.msra.mxu0 0.0
    %2321 = vmatprep.subr.mxu0 0.0
    %2322 = vmatpush1.msra.mxu0 0.0
    %2323 = vmatprep.subr.mxu0 0.0
    %2324 = vmatpush1.msra.mxu0 0.0
    %2325 = vmatprep.subr.mxu0 0.0
    %2326 = vmatpush1.msra.mxu0 0.0
    %2327 = vmatprep.subr.mxu0 0.0
    %2328 = vmatpush1.msra.mxu0 0.0
    %2329 = vmatprep.subr.mxu0 0.0
    %2330 = vmatpush1.msra.mxu0 0.0
    %2331 = vmatprep.subr.mxu0 0.0
    %2332 = vmatpush1.msra.mxu0 0.0
    %2333 = vmatprep.subr.mxu0 0.0
    %2334 = vmatpush1.msra.mxu0 0.0
    %2335 = vmatprep.subr.mxu0 0.0
    %2336 = vmatpush1.msra.mxu0 0.0
    %2337 = vmatprep.subr.mxu0 0.0
    %2338 = vmatpush1.msra.mxu0 0.0
    %2339 = vmatprep.subr.mxu0 0.0
    %2340 = vmatpush1.msra.mxu0 0.0
    %2341 = vmatprep.subr.mxu0 0.0
    %2342 = vmatpush1.msra.mxu0 0.0
    %2343 = vmatprep.subr.mxu0 0.0
    %2344 = vmatpush1.msra.mxu0 0.0
    %2345 = vmatprep.subr.mxu0 0.0
    %2346 = vmatpush1.msra.mxu0 0.0
    %2347 = vmatprep.subr.mxu0 0.0
    %2348 = vmatpush1.msra.mxu0 0.0
    %2349 = vmatprep.mubr.f32.mxu0 0.0
    %2350 = vmatmul.mubr.f32.gmra.mrb[0].mxu0 %v2283
    %v2351 = vpop.f32.mrb[0].mxu0
    %v2352 = vadd.f32 0.0, %v2351
    %v2353 = vpop.f32.mrb[0].mxu0
    %2354 = vdwg.mxu0
    %2355 = vrot.lane.b32.xlu0 %v2021, 120
    %v2356 = vpop.permute.xlu0 %2355
    %2357 = vrot.lane.b32.xlu0 %v2013, 88
    %v2358 = vpop.permute.xlu0 %2357
    %v2359 = vsel %vm197, %v2356, 0
    %v2361 = vsel %vm197, %v2358, 0
    %2363 = vmatprep.subr.mxu0 0.0
    %2364 = vmatpush1.xpose.msra.mxu0 %v2361
    %2365 = vmatprep.subr.mxu0 0.0
    %2366 = vmatpush1.xpose.msra.mxu0 0.0
    %2367 = vmatprep.subr.mxu0 0.0
    %2368 = vmatpush1.xpose.msra.mxu0 0.0
    %2369 = vmatprep.subr.mxu0 0.0
    %2370 = vmatpush1.xpose.msra.mxu0 0.0
    %2371 = vmatprep.subr.mxu0 0.0
    %2372 = vmatpush1.xpose.msra.mxu0 0.0
    %2373 = vmatprep.subr.mxu0 0.0
    %2374 = vmatpush1.xpose.msra.mxu0 0.0
    %2375 = vmatprep.subr.mxu0 0.0
    %2376 = vmatpush1.xpose.msra.mxu0 0.0
    %2377 = vmatprep.subr.mxu0 0.0
    %2378 = vmatpush1.xpose.msra.mxu0 0.0
    %2379 = vmatprep.subr.mxu0 0.0
    %2380 = vmatpush1.xpose.msra.mxu0 0.0
    %2381 = vmatprep.subr.mxu0 0.0
    %2382 = vmatpush1.xpose.msra.mxu0 0.0
    %2383 = vmatprep.subr.mxu0 0.0
    %2384 = vmatpush1.xpose.msra.mxu0 0.0
    %2385 = vmatprep.subr.mxu0 0.0
    %2386 = vmatpush1.xpose.msra.mxu0 0.0
    %2387 = vmatprep.subr.mxu0 0.0
    %2388 = vmatpush1.xpose.msra.mxu0 0.0
    %2389 = vmatprep.subr.mxu0 0.0
    %2390 = vmatpush1.xpose.msra.mxu0 0.0
    %2391 = vmatprep.subr.mxu0 0.0
    %2392 = vmatpush1.xpose.msra.mxu0 0.0
    %2393 = vmatprep.subr.mxu0 0.0
    %2394 = vmatpush1.xpose.msra.mxu0 0.0
    %2395 = vmatprep.subr.mxu0 0.0
    %2396 = vmatpush1.xpose.msra.mxu0 0.0
    %2397 = vmatprep.subr.mxu0 0.0
    %2398 = vmatpush1.xpose.msra.mxu0 0.0
    %2399 = vmatprep.subr.mxu0 0.0
    %2400 = vmatpush1.xpose.msra.mxu0 0.0
    %2401 = vmatprep.subr.mxu0 0.0
    %2402 = vmatpush1.xpose.msra.mxu0 0.0
    %2403 = vmatprep.subr.mxu0 0.0
    %2404 = vmatpush1.xpose.msra.mxu0 0.0
    %2405 = vmatprep.subr.mxu0 0.0
    %2406 = vmatpush1.xpose.msra.mxu0 0.0
    %2407 = vmatprep.subr.mxu0 0.0
    %2408 = vmatpush1.xpose.msra.mxu0 0.0
    %2409 = vmatprep.subr.mxu0 0.0
    %2410 = vmatpush1.xpose.msra.mxu0 0.0
    %2411 = vmatprep.subr.mxu0 0.0
    %2412 = vmatpush1.xpose.msra.mxu0 0.0
    %2413 = vmatprep.subr.mxu0 0.0
    %2414 = vmatpush1.xpose.msra.mxu0 0.0
    %2415 = vmatprep.subr.mxu0 0.0
    %2416 = vmatpush1.xpose.msra.mxu0 0.0
    %2417 = vmatprep.subr.mxu0 0.0
    %2418 = vmatpush1.xpose.msra.mxu0 0.0
    %2419 = vmatprep.subr.mxu0 0.0
    %2420 = vmatpush1.xpose.msra.mxu0 0.0
    %2421 = vmatprep.subr.mxu0 0.0
    %2422 = vmatpush1.xpose.msra.mxu0 0.0
    %2423 = vmatprep.subr.mxu0 0.0
    %2424 = vmatpush1.xpose.msra.mxu0 0.0
    %2425 = vmatprep.subr.mxu0 0.0
    %2426 = vmatpush1.xpose.msra.mxu0 0.0
    %2427 = vmatprep.mubr.f32.mxu0 0.0
    %2428 = vmatmul.mubr.f32.gmra.mrb[0].mxu0 %v2359
    %v2429 = vpop.f32.mrb[0].mxu0
    %v2430 = vadd.f32 0.0, %v2429
    %v2431 = vpop.f32.mrb[0].mxu0
    %2432 = vdwg.mxu0
    %2433 = vrot.lane.b32.xlu0 %v2022, 120
    %v2434 = vpop.permute.xlu0 %2433
    %2435 = vrot.lane.b32.xlu0 %v2018, 88
    %v2436 = vpop.permute.xlu0 %2435
    %v2437 = vsel %vm197, %v2434, 0
    %v2439 = vsel %vm197, %v2436, 0
    %2441 = vmatprep.subr.mxu0 0.0
    %2442 = vmatpush1.xpose.msra.mxu0 %v2439
    %2443 = vmatprep.subr.mxu0 0.0
    %2444 = vmatpush1.xpose.msra.mxu0 0.0
    %2445 = vmatprep.subr.mxu0 0.0
    %2446 = vmatpush1.xpose.msra.mxu0 0.0
    %2447 = vmatprep.subr.mxu0 0.0
    %2448 = vmatpush1.xpose.msra.mxu0 0.0
    %2449 = vmatprep.subr.mxu0 0.0
    %2450 = vmatpush1.xpose.msra.mxu0 0.0
    %2451 = vmatprep.subr.mxu0 0.0
    %2452 = vmatpush1.xpose.msra.mxu0 0.0
    %2453 = vmatprep.subr.mxu0 0.0
    %2454 = vmatpush1.xpose.msra.mxu0 0.0
    %2455 = vmatprep.subr.mxu0 0.0
    %2456 = vmatpush1.xpose.msra.mxu0 0.0
    %2457 = vmatprep.subr.mxu0 0.0
    %2458 = vmatpush1.xpose.msra.mxu0 0.0
    %2459 = vmatprep.subr.mxu0 0.0
    %2460 = vmatpush1.xpose.msra.mxu0 0.0
    %2461 = vmatprep.subr.mxu0 0.0
    %2462 = vmatpush1.xpose.msra.mxu0 0.0
    %2463 = vmatprep.subr.mxu0 0.0
    %2464 = vmatpush1.xpose.msra.mxu0 0.0
    %2465 = vmatprep.subr.mxu0 0.0
    %2466 = vmatpush1.xpose.msra.mxu0 0.0
    %2467 = vmatprep.subr.mxu0 0.0
    %2468 = vmatpush1.xpose.msra.mxu0 0.0
    %2469 = vmatprep.subr.mxu0 0.0
    %2470 = vmatpush1.xpose.msra.mxu0 0.0
    %2471 = vmatprep.subr.mxu0 0.0
    %2472 = vmatpush1.xpose.msra.mxu0 0.0
    %2473 = vmatprep.subr.mxu0 0.0
    %2474 = vmatpush1.xpose.msra.mxu0 0.0
    %2475 = vmatprep.subr.mxu0 0.0
    %2476 = vmatpush1.xpose.msra.mxu0 0.0
    %2477 = vmatprep.subr.mxu0 0.0
    %2478 = vmatpush1.xpose.msra.mxu0 0.0
    %2479 = vmatprep.subr.mxu0 0.0
    %2480 = vmatpush1.xpose.msra.mxu0 0.0
    %2481 = vmatprep.subr.mxu0 0.0
    %2482 = vmatpush1.xpose.msra.mxu0 0.0
    %2483 = vmatprep.subr.mxu0 0.0
    %2484 = vmatpush1.xpose.msra.mxu0 0.0
    %2485 = vmatprep.subr.mxu0 0.0
    %2486 = vmatpush1.xpose.msra.mxu0 0.0
    %2487 = vmatprep.subr.mxu0 0.0
    %2488 = vmatpush1.xpose.msra.mxu0 0.0
    %2489 = vmatprep.subr.mxu0 0.0
    %2490 = vmatpush1.xpose.msra.mxu0 0.0
    %2491 = vmatprep.subr.mxu0 0.0
    %2492 = vmatpush1.xpose.msra.mxu0 0.0
    %2493 = vmatprep.subr.mxu0 0.0
    %2494 = vmatpush1.xpose.msra.mxu0 0.0
    %2495 = vmatprep.subr.mxu0 0.0
    %2496 = vmatpush1.xpose.msra.mxu0 0.0
    %2497 = vmatprep.subr.mxu0 0.0
    %2498 = vmatpush1.xpose.msra.mxu0 0.0
    %2499 = vmatprep.subr.mxu0 0.0
    %2500 = vmatpush1.xpose.msra.mxu0 0.0
    %2501 = vmatprep.subr.mxu0 0.0
    %2502 = vmatpush1.xpose.msra.mxu0 0.0
    %2503 = vmatprep.subr.mxu0 0.0
    %2504 = vmatpush1.xpose.msra.mxu0 0.0
    %2505 = vmatprep.mubr.f32.mxu0 0.0
    %2506 = vmatmul.mubr.f32.gmra.mrb[0].mxu0 %v2437
    %v2507 = vpop.f32.mrb[0].mxu0
    %v2508 = vadd.f32 0.0, %v2507
    %v2509 = vpop.f32.mrb[0].mxu0
    %2510 = vdwg.mxu0
    %v2511 = vsel %vm352, %v2430, -1e+30
    %v2512 = vsel %vm352, %v2508, -1e+30
    %v2513 = vsel %vm197, %v2511, -inf
    %2514 = vmax.xlane.f32.xlu0 %v2513
    %v2515 = vpop.xlane.xlu0 %2514
    %v2516 = vsel %vm197, %v2512, -inf
    %2517 = vmax.xlane.f32.xlu0 %v2516
    %v2518 = vpop.xlane.xlu0 %2517
    %v2519 = vsub.f32 %v2511, %v2515
    %v2520 = vsub.f32 %v2512, %v2518
    %v2521 = vmul.f32 %v2519, 1.442695
    %v2522 = vpow.pop %v2521
    %v2523 = vmul.f32 %v2520, 1.442695
    %v2524 = vpow.pop %v2523
    %v2525 = vsel %vm197, %v2522, 0.0
    %2526 = vadd.xlane.f32.xlu0 %v2525
    %v2527 = vpop.xlane.xlu0 %2526
    %v2528 = vsel %vm197, %v2524, 0.0
    %2529 = vadd.xlane.f32.xlu0 %v2528
    %v2530 = vpop.xlane.xlu0 %2529
    %v2531 = vrcp.pop %v2527
    %v2532 = vrcp.pop %v2530
    %v2533 = vmul.f32 %v2522, %v2531
    %v2534 = vmul.f32 %v2524, %v2532
    %2535 = vrot.lane.b32.xlu0 %v2013, 56
    %v2536 = vpop.permute.xlu0 %2535
    %v2539 = vsel %vm197, %v2533, 0
    %2541 = vmatprep.subr.mxu0 0.0
    %2542 = vmatpush1.msra.mxu0 %v2536
    %2543 = vmatprep.subr.mxu0 0.0
    %2544 = vmatpush1.msra.mxu0 0.0
    %2545 = vmatprep.subr.mxu0 0.0
    %2546 = vmatpush1.msra.mxu0 0.0
    %2547 = vmatprep.subr.mxu0 0.0
    %2548 = vmatpush1.msra.mxu0 0.0
    %2549 = vmatprep.subr.mxu0 0.0
    %2550 = vmatpush1.msra.mxu0 0.0
    %2551 = vmatprep.subr.mxu0 0.0
    %2552 = vmatpush1.msra.mxu0 0.0
    %2553 = vmatprep.subr.mxu0 0.0
    %2554 = vmatpush1.msra.mxu0 0.0
    %2555 = vmatprep.subr.mxu0 0.0
    %2556 = vmatpush1.msra.mxu0 0.0
    %2557 = vmatprep.subr.mxu0 0.0
    %2558 = vmatpush1.msra.mxu0 0.0
    %2559 = vmatprep.subr.mxu0 0.0
    %2560 = vmatpush1.msra.mxu0 0.0
    %2561 = vmatprep.subr.mxu0 0.0
    %2562 = vmatpush1.msra.mxu0 0.0
    %2563 = vmatprep.subr.mxu0 0.0
    %2564 = vmatpush1.msra.mxu0 0.0
    %2565 = vmatprep.subr.mxu0 0.0
    %2566 = vmatpush1.msra.mxu0 0.0
    %2567 = vmatprep.subr.mxu0 0.0
    %2568 = vmatpush1.msra.mxu0 0.0
    %2569 = vmatprep.subr.mxu0 0.0
    %2570 = vmatpush1.msra.mxu0 0.0
    %2571 = vmatprep.subr.mxu0 0.0
    %2572 = vmatpush1.msra.mxu0 0.0
    %2573 = vmatprep.subr.mxu0 0.0
    %2574 = vmatpush1.msra.mxu0 0.0
    %2575 = vmatprep.subr.mxu0 0.0
    %2576 = vmatpush1.msra.mxu0 0.0
    %2577 = vmatprep.subr.mxu0 0.0
    %2578 = vmatpush1.msra.mxu0 0.0
    %2579 = vmatprep.subr.mxu0 0.0
    %2580 = vmatpush1.msra.mxu0 0.0
    %2581 = vmatprep.subr.mxu0 0.0
    %2582 = vmatpush1.msra.mxu0 0.0
    %2583 = vmatprep.subr.mxu0 0.0
    %2584 = vmatpush1.msra.mxu0 0.0
    %2585 = vmatprep.subr.mxu0 0.0
    %2586 = vmatpush1.msra.mxu0 0.0
    %2587 = vmatprep.subr.mxu0 0.0
    %2588 = vmatpush1.msra.mxu0 0.0
    %2589 = vmatprep.subr.mxu0 0.0
    %2590 = vmatpush1.msra.mxu0 0.0
    %2591 = vmatprep.subr.mxu0 0.0
    %2592 = vmatpush1.msra.mxu0 0.0
    %2593 = vmatprep.subr.mxu0 0.0
    %2594 = vmatpush1.msra.mxu0 0.0
    %2595 = vmatprep.subr.mxu0 0.0
    %2596 = vmatpush1.msra.mxu0 0.0
    %2597 = vmatprep.subr.mxu0 0.0
    %2598 = vmatpush1.msra.mxu0 0.0
    %2599 = vmatprep.subr.mxu0 0.0
    %2600 = vmatpush1.msra.mxu0 0.0
    %2601 = vmatprep.subr.mxu0 0.0
    %2602 = vmatpush1.msra.mxu0 0.0
    %2603 = vmatprep.subr.mxu0 0.0
    %2604 = vmatpush1.msra.mxu0 0.0
    %2605 = vmatprep.mubr.f32.mxu0 0.0
    %2606 = vmatmul.mubr.f32.gmra.mrb[0].mxu0 %v2539
    %v2607 = vpop.f32.mrb[0].mxu0
    %v2608 = vadd.f32 0.0, %v2607
    %v2609 = vpop.f32.mrb[0].mxu0
    %2610 = vdwg.mxu0
    %2611 = vrot.lane.b32.xlu0 %v2018, 56
    %v2612 = vpop.permute.xlu0 %2611
    %v2615 = vsel %vm197, %v2534, 0
    %2617 = vmatprep.subr.mxu0 0.0
    %2618 = vmatpush1.msra.mxu0 %v2612
    %2619 = vmatprep.subr.mxu0 0.0
    %2620 = vmatpush1.msra.mxu0 0.0
    %2621 = vmatprep.subr.mxu0 0.0
    %2622 = vmatpush1.msra.mxu0 0.0
    %2623 = vmatprep.subr.mxu0 0.0
    %2624 = vmatpush1.msra.mxu0 0.0
    %2625 = vmatprep.subr.mxu0 0.0
    %2626 = vmatpush1.msra.mxu0 0.0
    %2627 = vmatprep.subr.mxu0 0.0
    %2628 = vmatpush1.msra.mxu0 0.0
    %2629 = vmatprep.subr.mxu0 0.0
    %2630 = vmatpush1.msra.mxu0 0.0
    %2631 = vmatprep.subr.mxu0 0.0
    %2632 = vmatpush1.msra.mxu0 0.0
    %2633 = vmatprep.subr.mxu0 0.0
    %2634 = vmatpush1.msra.mxu0 0.0
    %2635 = vmatprep.subr.mxu0 0.0
    %2636 = vmatpush1.msra.mxu0 0.0
    %2637 = vmatprep.subr.mxu0 0.0
    %2638 = vmatpush1.msra.mxu0 0.0
    %2639 = vmatprep.subr.mxu0 0.0
    %2640 = vmatpush1.msra.mxu0 0.0
    %2641 = vmatprep.subr.mxu0 0.0
    %2642 = vmatpush1.msra.mxu0 0.0
    %2643 = vmatprep.subr.mxu0 0.0
    %2644 = vmatpush1.msra.mxu0 0.0
    %2645 = vmatprep.subr.mxu0 0.0
    %2646 = vmatpush1.msra.mxu0 0.0
    %2647 = vmatprep.subr.mxu0 0.0
    %2648 = vmatpush1.msra.mxu0 0.0
    %2649 = vmatprep.subr.mxu0 0.0
    %2650 = vmatpush1.msra.mxu0 0.0
    %2651 = vmatprep.subr.mxu0 0.0
    %2652 = vmatpush1.msra.mxu0 0.0
    %2653 = vmatprep.subr.mxu0 0.0
    %2654 = vmatpush1.msra.mxu0 0.0
    %2655 = vmatprep.subr.mxu0 0.0
    %2656 = vmatpush1.msra.mxu0 0.0
    %2657 = vmatprep.subr.mxu0 0.0
    %2658 = vmatpush1.msra.mxu0 0.0
    %2659 = vmatprep.subr.mxu0 0.0
    %2660 = vmatpush1.msra.mxu0 0.0
    %2661 = vmatprep.subr.mxu0 0.0
    %2662 = vmatpush1.msra.mxu0 0.0
    %2663 = vmatprep.subr.mxu0 0.0
    %2664 = vmatpush1.msra.mxu0 0.0
    %2665 = vmatprep.subr.mxu0 0.0
    %2666 = vmatpush1.msra.mxu0 0.0
    %2667 = vmatprep.subr.mxu0 0.0
    %2668 = vmatpush1.msra.mxu0 0.0
    %2669 = vmatprep.subr.mxu0 0.0
    %2670 = vmatpush1.msra.mxu0 0.0
    %2671 = vmatprep.subr.mxu0 0.0
    %2672 = vmatpush1.msra.mxu0 0.0
    %2673 = vmatprep.subr.mxu0 0.0
    %2674 = vmatpush1.msra.mxu0 0.0
    %2675 = vmatprep.subr.mxu0 0.0
    %2676 = vmatpush1.msra.mxu0 0.0
    %2677 = vmatprep.subr.mxu0 0.0
    %2678 = vmatpush1.msra.mxu0 0.0
    %2679 = vmatprep.subr.mxu0 0.0
    %2680 = vmatpush1.msra.mxu0 0.0
    %2681 = vmatprep.mubr.f32.mxu0 0.0
    %2682 = vmatmul.mubr.f32.gmra.mrb[0].mxu0 %v2615
    %v2683 = vpop.f32.mrb[0].mxu0
    %v2684 = vadd.f32 0.0, %v2683
    %v2685 = vpop.f32.mrb[0].mxu0
    %2686 = vdwg.mxu0
    %2687 = vrot.lane.b32.xlu0 %v2021, 112
    %v2688 = vpop.permute.xlu0 %2687
    %2689 = vrot.lane.b32.xlu0 %v2013, 80
    %v2690 = vpop.permute.xlu0 %2689
    %v2691 = vsel %vm197, %v2688, 0
    %v2693 = vsel %vm197, %v2690, 0
    %2695 = vmatprep.subr.mxu0 0.0
    %2696 = vmatpush1.xpose.msra.mxu0 %v2693
    %2697 = vmatprep.subr.mxu0 0.0
    %2698 = vmatpush1.xpose.msra.mxu0 0.0
    %2699 = vmatprep.subr.mxu0 0.0
    %2700 = vmatpush1.xpose.msra.mxu0 0.0
    %2701 = vmatprep.subr.mxu0 0.0
    %2702 = vmatpush1.xpose.msra.mxu0 0.0
    %2703 = vmatprep.subr.mxu0 0.0
    %2704 = vmatpush1.xpose.msra.mxu0 0.0
    %2705 = vmatprep.subr.mxu0 0.0
    %2706 = vmatpush1.xpose.msra.mxu0 0.0
    %2707 = vmatprep.subr.mxu0 0.0
    %2708 = vmatpush1.xpose.msra.mxu0 0.0
    %2709 = vmatprep.subr.mxu0 0.0
    %2710 = vmatpush1.xpose.msra.mxu0 0.0
    %2711 = vmatprep.subr.mxu0 0.0
    %2712 = vmatpush1.xpose.msra.mxu0 0.0
    %2713 = vmatprep.subr.mxu0 0.0
    %2714 = vmatpush1.xpose.msra.mxu0 0.0
    %2715 = vmatprep.subr.mxu0 0.0
    %2716 = vmatpush1.xpose.msra.mxu0 0.0
    %2717 = vmatprep.subr.mxu0 0.0
    %2718 = vmatpush1.xpose.msra.mxu0 0.0
    %2719 = vmatprep.subr.mxu0 0.0
    %2720 = vmatpush1.xpose.msra.mxu0 0.0
    %2721 = vmatprep.subr.mxu0 0.0
    %2722 = vmatpush1.xpose.msra.mxu0 0.0
    %2723 = vmatprep.subr.mxu0 0.0
    %2724 = vmatpush1.xpose.msra.mxu0 0.0
    %2725 = vmatprep.subr.mxu0 0.0
    %2726 = vmatpush1.xpose.msra.mxu0 0.0
    %2727 = vmatprep.subr.mxu0 0.0
    %2728 = vmatpush1.xpose.msra.mxu0 0.0
    %2729 = vmatprep.subr.mxu0 0.0
    %2730 = vmatpush1.xpose.msra.mxu0 0.0
    %2731 = vmatprep.subr.mxu0 0.0
    %2732 = vmatpush1.xpose.msra.mxu0 0.0
    %2733 = vmatprep.subr.mxu0 0.0
    %2734 = vmatpush1.xpose.msra.mxu0 0.0
    %2735 = vmatprep.subr.mxu0 0.0
    %2736 = vmatpush1.xpose.msra.mxu0 0.0
    %2737 = vmatprep.subr.mxu0 0.0
    %2738 = vmatpush1.xpose.msra.mxu0 0.0
    %2739 = vmatprep.subr.mxu0 0.0
    %2740 = vmatpush1.xpose.msra.mxu0 0.0
    %2741 = vmatprep.subr.mxu0 0.0
    %2742 = vmatpush1.xpose.msra.mxu0 0.0
    %2743 = vmatprep.subr.mxu0 0.0
    %2744 = vmatpush1.xpose.msra.mxu0 0.0
    %2745 = vmatprep.subr.mxu0 0.0
    %2746 = vmatpush1.xpose.msra.mxu0 0.0
    %2747 = vmatprep.subr.mxu0 0.0
    %2748 = vmatpush1.xpose.msra.mxu0 0.0
    %2749 = vmatprep.subr.mxu0 0.0
    %2750 = vmatpush1.xpose.msra.mxu0 0.0
    %2751 = vmatprep.subr.mxu0 0.0
    %2752 = vmatpush1.xpose.msra.mxu0 0.0
    %2753 = vmatprep.subr.mxu0 0.0
    %2754 = vmatpush1.xpose.msra.mxu0 0.0
    %2755 = vmatprep.subr.mxu0 0.0
    %2756 = vmatpush1.xpose.msra.mxu0 0.0
    %2757 = vmatprep.subr.mxu0 0.0
    %2758 = vmatpush1.xpose.msra.mxu0 0.0
    %2759 = vmatprep.mubr.f32.mxu0 0.0
    %2760 = vmatmul.mubr.f32.gmra.mrb[0].mxu0 %v2691
    %v2761 = vpop.f32.mrb[0].mxu0
    %v2762 = vadd.f32 0.0, %v2761
    %v2763 = vpop.f32.mrb[0].mxu0
    %2764 = vdwg.mxu0
    %2765 = vrot.lane.b32.xlu0 %v2022, 112
    %v2766 = vpop.permute.xlu0 %2765
    %2767 = vrot.lane.b32.xlu0 %v2018, 80
    %v2768 = vpop.permute.xlu0 %2767
    %v2769 = vsel %vm197, %v2766, 0
    %v2771 = vsel %vm197, %v2768, 0
    %2773 = vmatprep.subr.mxu0 0.0
    %2774 = vmatpush1.xpose.msra.mxu0 %v2771
    %2775 = vmatprep.subr.mxu0 0.0
    %2776 = vmatpush1.xpose.msra.mxu0 0.0
    %2777 = vmatprep.subr.mxu0 0.0
    %2778 = vmatpush1.xpose.msra.mxu0 0.0
    %2779 = vmatprep.subr.mxu0 0.0
    %2780 = vmatpush1.xpose.msra.mxu0 0.0
    %2781 = vmatprep.subr.mxu0 0.0
    %2782 = vmatpush1.xpose.msra.mxu0 0.0
    %2783 = vmatprep.subr.mxu0 0.0
    %2784 = vmatpush1.xpose.msra.mxu0 0.0
    %2785 = vmatprep.subr.mxu0 0.0
    %2786 = vmatpush1.xpose.msra.mxu0 0.0
    %2787 = vmatprep.subr.mxu0 0.0
    %2788 = vmatpush1.xpose.msra.mxu0 0.0
    %2789 = vmatprep.subr.mxu0 0.0
    %2790 = vmatpush1.xpose.msra.mxu0 0.0
    %2791 = vmatprep.subr.mxu0 0.0
    %2792 = vmatpush1.xpose.msra.mxu0 0.0
    %2793 = vmatprep.subr.mxu0 0.0
    %2794 = vmatpush1.xpose.msra.mxu0 0.0
    %2795 = vmatprep.subr.mxu0 0.0
    %2796 = vmatpush1.xpose.msra.mxu0 0.0
    %2797 = vmatprep.subr.mxu0 0.0
    %2798 = vmatpush1.xpose.msra.mxu0 0.0
    %2799 = vmatprep.subr.mxu0 0.0
    %2800 = vmatpush1.xpose.msra.mxu0 0.0
    %2801 = vmatprep.subr.mxu0 0.0
    %2802 = vmatpush1.xpose.msra.mxu0 0.0
    %2803 = vmatprep.subr.mxu0 0.0
    %2804 = vmatpush1.xpose.msra.mxu0 0.0
    %2805 = vmatprep.subr.mxu0 0.0
    %2806 = vmatpush1.xpose.msra.mxu0 0.0
    %2807 = vmatprep.subr.mxu0 0.0
    %2808 = vmatpush1.xpose.msra.mxu0 0.0
    %2809 = vmatprep.subr.mxu0 0.0
    %2810 = vmatpush1.xpose.msra.mxu0 0.0
    %2811 = vmatprep.subr.mxu0 0.0
    %2812 = vmatpush1.xpose.msra.mxu0 0.0
    %2813 = vmatprep.subr.mxu0 0.0
    %2814 = vmatpush1.xpose.msra.mxu0 0.0
    %2815 = vmatprep.subr.mxu0 0.0
    %2816 = vmatpush1.xpose.msra.mxu0 0.0
    %2817 = vmatprep.subr.mxu0 0.0
    %2818 = vmatpush1.xpose.msra.mxu0 0.0
    %2819 = vmatprep.subr.mxu0 0.0
    %2820 = vmatpush1.xpose.msra.mxu0 0.0
    %2821 = vmatprep.subr.mxu0 0.0
    %2822 = vmatpush1.xpose.msra.mxu0 0.0
    %2823 = vmatprep.subr.mxu0 0.0
    %2824 = vmatpush1.xpose.msra.mxu0 0.0
    %2825 = vmatprep.subr.mxu0 0.0
    %2826 = vmatpush1.xpose.msra.mxu0 0.0
    %2827 = vmatprep.subr.mxu0 0.0
    %2828 = vmatpush1.xpose.msra.mxu0 0.0
    %2829 = vmatprep.subr.mxu0 0.0
    %2830 = vmatpush1.xpose.msra.mxu0 0.0
    %2831 = vmatprep.subr.mxu0 0.0
    %2832 = vmatpush1.xpose.msra.mxu0 0.0
    %2833 = vmatprep.subr.mxu0 0.0
    %2834 = vmatpush1.xpose.msra.mxu0 0.0
    %2835 = vmatprep.subr.mxu0 0.0
    %2836 = vmatpush1.xpose.msra.mxu0 0.0
    %2837 = vmatprep.mubr.f32.mxu0 0.0
    %2838 = vmatmul.mubr.f32.gmra.mrb[0].mxu0 %v2769
    %v2839 = vpop.f32.mrb[0].mxu0
    %v2840 = vadd.f32 0.0, %v2839
    %v2841 = vpop.f32.mrb[0].mxu0
    %2842 = vdwg.mxu0
    %v2843 = vsel %vm352, %v2762, -1e+30
    %v2844 = vsel %vm352, %v2840, -1e+30
    %v2845 = vsel %vm197, %v2843, -inf
    %2846 = vmax.xlane.f32.xlu0 %v2845
    %v2847 = vpop.xlane.xlu0 %2846
    %v2848 = vsel %vm197, %v2844, -inf
    %2849 = vmax.xlane.f32.xlu0 %v2848
    %v2850 = vpop.xlane.xlu0 %2849
    %v2851 = vsub.f32 %v2843, %v2847
    %v2852 = vsub.f32 %v2844, %v2850
    %v2853 = vmul.f32 %v2851, 1.442695
    %v2854 = vpow.pop %v2853
    %v2855 = vmul.f32 %v2852, 1.442695
    %v2856 = vpow.pop %v2855
    %v2857 = vsel %vm197, %v2854, 0.0
    %2858 = vadd.xlane.f32.xlu0 %v2857
    %v2859 = vpop.xlane.xlu0 %2858
    %v2860 = vsel %vm197, %v2856, 0.0
    %2861 = vadd.xlane.f32.xlu0 %v2860
    %v2862 = vpop.xlane.xlu0 %2861
    %v2863 = vrcp.pop %v2859
    %v2864 = vrcp.pop %v2862
    %v2865 = vmul.f32 %v2854, %v2863
    %v2866 = vmul.f32 %v2856, %v2864
    %2867 = vrot.lane.b32.xlu0 %v2013, 48
    %v2868 = vpop.permute.xlu0 %2867
    %v2871 = vsel %vm197, %v2865, 0
    %2873 = vmatprep.subr.mxu0 0.0
    %2874 = vmatpush1.msra.mxu0 %v2868
    %2875 = vmatprep.subr.mxu0 0.0
    %2876 = vmatpush1.msra.mxu0 0.0
    %2877 = vmatprep.subr.mxu0 0.0
    %2878 = vmatpush1.msra.mxu0 0.0
    %2879 = vmatprep.subr.mxu0 0.0
    %2880 = vmatpush1.msra.mxu0 0.0
    %2881 = vmatprep.subr.mxu0 0.0
    %2882 = vmatpush1.msra.mxu0 0.0
    %2883 = vmatprep.subr.mxu0 0.0
    %2884 = vmatpush1.msra.mxu0 0.0
    %2885 = vmatprep.subr.mxu0 0.0
    %2886 = vmatpush1.msra.mxu0 0.0
    %2887 = vmatprep.subr.mxu0 0.0
    %2888 = vmatpush1.msra.mxu0 0.0
    %2889 = vmatprep.subr.mxu0 0.0
    %2890 = vmatpush1.msra.mxu0 0.0
    %2891 = vmatprep.subr.mxu0 0.0
    %2892 = vmatpush1.msra.mxu0 0.0
    %2893 = vmatprep.subr.mxu0 0.0
    %2894 = vmatpush1.msra.mxu0 0.0
    %2895 = vmatprep.subr.mxu0 0.0
    %2896 = vmatpush1.msra.mxu0 0.0
    %2897 = vmatprep.subr.mxu0 0.0
    %2898 = vmatpush1.msra.mxu0 0.0
    %2899 = vmatprep.subr.mxu0 0.0
    %2900 = vmatpush1.msra.mxu0 0.0
    %2901 = vmatprep.subr.mxu0 0.0
    %2902 = vmatpush1.msra.mxu0 0.0
    %2903 = vmatprep.subr.mxu0 0.0
    %2904 = vmatpush1.msra.mxu0 0.0
    %2905 = vmatprep.subr.mxu0 0.0
    %2906 = vmatpush1.msra.mxu0 0.0
    %2907 = vmatprep.subr.mxu0 0.0
    %2908 = vmatpush1.msra.mxu0 0.0
    %2909 = vmatprep.subr.mxu0 0.0
    %2910 = vmatpush1.msra.mxu0 0.0
    %2911 = vmatprep.subr.mxu0 0.0
    %2912 = vmatpush1.msra.mxu0 0.0
    %2913 = vmatprep.subr.mxu0 0.0
    %2914 = vmatpush1.msra.mxu0 0.0
    %2915 = vmatprep.subr.mxu0 0.0
    %2916 = vmatpush1.msra.mxu0 0.0
    %2917 = vmatprep.subr.mxu0 0.0
    %2918 = vmatpush1.msra.mxu0 0.0
    %2919 = vmatprep.subr.mxu0 0.0
    %2920 = vmatpush1.msra.mxu0 0.0
    %2921 = vmatprep.subr.mxu0 0.0
    %2922 = vmatpush1.msra.mxu0 0.0
    %2923 = vmatprep.subr.mxu0 0.0
    %2924 = vmatpush1.msra.mxu0 0.0
    %2925 = vmatprep.subr.mxu0 0.0
    %2926 = vmatpush1.msra.mxu0 0.0
    %2927 = vmatprep.subr.mxu0 0.0
    %2928 = vmatpush1.msra.mxu0 0.0
    %2929 = vmatprep.subr.mxu0 0.0
    %2930 = vmatpush1.msra.mxu0 0.0
    %2931 = vmatprep.subr.mxu0 0.0
    %2932 = vmatpush1.msra.mxu0 0.0
    %2933 = vmatprep.subr.mxu0 0.0
    %2934 = vmatpush1.msra.mxu0 0.0
    %2935 = vmatprep.subr.mxu0 0.0
    %2936 = vmatpush1.msra.mxu0 0.0
    %2937 = vmatprep.mubr.f32.mxu0 0.0
    %2938 = vmatmul.mubr.f32.gmra.mrb[0].mxu0 %v2871
    %v2939 = vpop.f32.mrb[0].mxu0
    %v2940 = vadd.f32 0.0, %v2939
    %v2941 = vpop.f32.mrb[0].mxu0
    %2942 = vdwg.mxu0
    %2943 = vrot.lane.b32.xlu0 %v2018, 48
    %v2944 = vpop.permute.xlu0 %2943
    %v2947 = vsel %vm197, %v2866, 0
    %2949 = vmatprep.subr.mxu0 0.0
    %2950 = vmatpush1.msra.mxu0 %v2944
    %2951 = vmatprep.subr.mxu0 0.0
    %2952 = vmatpush1.msra.mxu0 0.0
    %2953 = vmatprep.subr.mxu0 0.0
    %2954 = vmatpush1.msra.mxu0 0.0
    %2955 = vmatprep.subr.mxu0 0.0
    %2956 = vmatpush1.msra.mxu0 0.0
    %2957 = vmatprep.subr.mxu0 0.0
    %2958 = vmatpush1.msra.mxu0 0.0
    %2959 = vmatprep.subr.mxu0 0.0
    %2960 = vmatpush1.msra.mxu0 0.0
    %2961 = vmatprep.subr.mxu0 0.0
    %2962 = vmatpush1.msra.mxu0 0.0
    %2963 = vmatprep.subr.mxu0 0.0
    %2964 = vmatpush1.msra.mxu0 0.0
    %2965 = vmatprep.subr.mxu0 0.0
    %2966 = vmatpush1.msra.mxu0 0.0
    %2967 = vmatprep.subr.mxu0 0.0
    %2968 = vmatpush1.msra.mxu0 0.0
    %2969 = vmatprep.subr.mxu0 0.0
    %2970 = vmatpush1.msra.mxu0 0.0
    %2971 = vmatprep.subr.mxu0 0.0
    %2972 = vmatpush1.msra.mxu0 0.0
    %2973 = vmatprep.subr.mxu0 0.0
    %2974 = vmatpush1.msra.mxu0 0.0
    %2975 = vmatprep.subr.mxu0 0.0
    %2976 = vmatpush1.msra.mxu0 0.0
    %2977 = vmatprep.subr.mxu0 0.0
    %2978 = vmatpush1.msra.mxu0 0.0
    %2979 = vmatprep.subr.mxu0 0.0
    %2980 = vmatpush1.msra.mxu0 0.0
    %2981 = vmatprep.subr.mxu0 0.0
    %2982 = vmatpush1.msra.mxu0 0.0
    %2983 = vmatprep.subr.mxu0 0.0
    %2984 = vmatpush1.msra.mxu0 0.0
    %2985 = vmatprep.subr.mxu0 0.0
    %2986 = vmatpush1.msra.mxu0 0.0
    %2987 = vmatprep.subr.mxu0 0.0
    %2988 = vmatpush1.msra.mxu0 0.0
    %2989 = vmatprep.subr.mxu0 0.0
    %2990 = vmatpush1.msra.mxu0 0.0
    %2991 = vmatprep.subr.mxu0 0.0
    %2992 = vmatpush1.msra.mxu0 0.0
    %2993 = vmatprep.subr.mxu0 0.0
    %2994 = vmatpush1.msra.mxu0 0.0
    %2995 = vmatprep.subr.mxu0 0.0
    %2996 = vmatpush1.msra.mxu0 0.0
    %2997 = vmatprep.subr.mxu0 0.0
    %2998 = vmatpush1.msra.mxu0 0.0
    %2999 = vmatprep.subr.mxu0 0.0
    %3000 = vmatpush1.msra.mxu0 0.0
    %3001 = vmatprep.subr.mxu0 0.0
    %3002 = vmatpush1.msra.mxu0 0.0
    %3003 = vmatprep.subr.mxu0 0.0
    %3004 = vmatpush1.msra.mxu0 0.0
    %3005 = vmatprep.subr.mxu0 0.0
    %3006 = vmatpush1.msra.mxu0 0.0
    %3007 = vmatprep.subr.mxu0 0.0
    %3008 = vmatpush1.msra.mxu0 0.0
    %3009 = vmatprep.subr.mxu0 0.0
    %3010 = vmatpush1.msra.mxu0 0.0
    %3011 = vmatprep.subr.mxu0 0.0
    %3012 = vmatpush1.msra.mxu0 0.0
    %3013 = vmatprep.mubr.f32.mxu0 0.0
    %3014 = vmatmul.mubr.f32.gmra.mrb[0].mxu0 %v2947
    %v3015 = vpop.f32.mrb[0].mxu0
    %v3016 = vadd.f32 0.0, %v3015
    %v3017 = vpop.f32.mrb[0].mxu0
    %3018 = vdwg.mxu0
    %3019 = vrot.lane.b32.xlu0 %v2021, 104
    %v3020 = vpop.permute.xlu0 %3019
    %3021 = vrot.lane.b32.xlu0 %v2013, 72
    %v3022 = vpop.permute.xlu0 %3021
    %v3023 = vsel %vm197, %v3020, 0
    %v3025 = vsel %vm197, %v3022, 0
    %3027 = vmatprep.subr.mxu0 0.0
    %3028 = vmatpush1.xpose.msra.mxu0 %v3025
    %3029 = vmatprep.subr.mxu0 0.0
    %3030 = vmatpush1.xpose.msra.mxu0 0.0
    %3031 = vmatprep.subr.mxu0 0.0
    %3032 = vmatpush1.xpose.msra.mxu0 0.0
    %3033 = vmatprep.subr.mxu0 0.0
    %3034 = vmatpush1.xpose.msra.mxu0 0.0
    %3035 = vmatprep.subr.mxu0 0.0
    %3036 = vmatpush1.xpose.msra.mxu0 0.0
    %3037 = vmatprep.subr.mxu0 0.0
    %3038 = vmatpush1.xpose.msra.mxu0 0.0
    %3039 = vmatprep.subr.mxu0 0.0
    %3040 = vmatpush1.xpose.msra.mxu0 0.0
    %3041 = vmatprep.subr.mxu0 0.0
    %3042 = vmatpush1.xpose.msra.mxu0 0.0
    %3043 = vmatprep.subr.mxu0 0.0
    %3044 = vmatpush1.xpose.msra.mxu0 0.0
    %3045 = vmatprep.subr.mxu0 0.0
    %3046 = vmatpush1.xpose.msra.mxu0 0.0
    %3047 = vmatprep.subr.mxu0 0.0
    %3048 = vmatpush1.xpose.msra.mxu0 0.0
    %3049 = vmatprep.subr.mxu0 0.0
    %3050 = vmatpush1.xpose.msra.mxu0 0.0
    %3051 = vmatprep.subr.mxu0 0.0
    %3052 = vmatpush1.xpose.msra.mxu0 0.0
    %3053 = vmatprep.subr.mxu0 0.0
    %3054 = vmatpush1.xpose.msra.mxu0 0.0
    %3055 = vmatprep.subr.mxu0 0.0
    %3056 = vmatpush1.xpose.msra.mxu0 0.0
    %3057 = vmatprep.subr.mxu0 0.0
    %3058 = vmatpush1.xpose.msra.mxu0 0.0
    %3059 = vmatprep.subr.mxu0 0.0
    %3060 = vmatpush1.xpose.msra.mxu0 0.0
    %3061 = vmatprep.subr.mxu0 0.0
    %3062 = vmatpush1.xpose.msra.mxu0 0.0
    %3063 = vmatprep.subr.mxu0 0.0
    %3064 = vmatpush1.xpose.msra.mxu0 0.0
    %3065 = vmatprep.subr.mxu0 0.0
    %3066 = vmatpush1.xpose.msra.mxu0 0.0
    %3067 = vmatprep.subr.mxu0 0.0
    %3068 = vmatpush1.xpose.msra.mxu0 0.0
    %3069 = vmatprep.subr.mxu0 0.0
    %3070 = vmatpush1.xpose.msra.mxu0 0.0
    %3071 = vmatprep.subr.mxu0 0.0
    %3072 = vmatpush1.xpose.msra.mxu0 0.0
    %3073 = vmatprep.subr.mxu0 0.0
    %3074 = vmatpush1.xpose.msra.mxu0 0.0
    %3075 = vmatprep.subr.mxu0 0.0
    %3076 = vmatpush1.xpose.msra.mxu0 0.0
    %3077 = vmatprep.subr.mxu0 0.0
    %3078 = vmatpush1.xpose.msra.mxu0 0.0
    %3079 = vmatprep.subr.mxu0 0.0
    %3080 = vmatpush1.xpose.msra.mxu0 0.0
    %3081 = vmatprep.subr.mxu0 0.0
    %3082 = vmatpush1.xpose.msra.mxu0 0.0
    %3083 = vmatprep.subr.mxu0 0.0
    %3084 = vmatpush1.xpose.msra.mxu0 0.0
    %3085 = vmatprep.subr.mxu0 0.0
    %3086 = vmatpush1.xpose.msra.mxu0 0.0
    %3087 = vmatprep.subr.mxu0 0.0
    %3088 = vmatpush1.xpose.msra.mxu0 0.0
    %3089 = vmatprep.subr.mxu0 0.0
    %3090 = vmatpush1.xpose.msra.mxu0 0.0
    %3091 = vmatprep.mubr.f32.mxu0 0.0
    %3092 = vmatmul.mubr.f32.gmra.mrb[0].mxu0 %v3023
    %v3093 = vpop.f32.mrb[0].mxu0
    %v3094 = vadd.f32 0.0, %v3093
    %v3095 = vpop.f32.mrb[0].mxu0
    %3096 = vdwg.mxu0
    %3097 = vrot.lane.b32.xlu0 %v2022, 104
    %v3098 = vpop.permute.xlu0 %3097
    %3099 = vrot.lane.b32.xlu0 %v2018, 72
    %v3100 = vpop.permute.xlu0 %3099
    %v3101 = vsel %vm197, %v3098, 0
    %v3103 = vsel %vm197, %v3100, 0
    %3105 = vmatprep.subr.mxu0 0.0
    %3106 = vmatpush1.xpose.msra.mxu0 %v3103
    %3107 = vmatprep.subr.mxu0 0.0
    %3108 = vmatpush1.xpose.msra.mxu0 0.0
    %3109 = vmatprep.subr.mxu0 0.0
    %3110 = vmatpush1.xpose.msra.mxu0 0.0
    %3111 = vmatprep.subr.mxu0 0.0
    %3112 = vmatpush1.xpose.msra.mxu0 0.0
    %3113 = vmatprep.subr.mxu0 0.0
    %3114 = vmatpush1.xpose.msra.mxu0 0.0
    %3115 = vmatprep.subr.mxu0 0.0
    %3116 = vmatpush1.xpose.msra.mxu0 0.0
    %3117 = vmatprep.subr.mxu0 0.0
    %3118 = vmatpush1.xpose.msra.mxu0 0.0
    %3119 = vmatprep.subr.mxu0 0.0
    %3120 = vmatpush1.xpose.msra.mxu0 0.0
    %3121 = vmatprep.subr.mxu0 0.0
    %3122 = vmatpush1.xpose.msra.mxu0 0.0
    %3123 = vmatprep.subr.mxu0 0.0
    %3124 = vmatpush1.xpose.msra.mxu0 0.0
    %3125 = vmatprep.subr.mxu0 0.0
    %3126 = vmatpush1.xpose.msra.mxu0 0.0
    %3127 = vmatprep.subr.mxu0 0.0
    %3128 = vmatpush1.xpose.msra.mxu0 0.0
    %3129 = vmatprep.subr.mxu0 0.0
    %3130 = vmatpush1.xpose.msra.mxu0 0.0
    %3131 = vmatprep.subr.mxu0 0.0
    %3132 = vmatpush1.xpose.msra.mxu0 0.0
    %3133 = vmatprep.subr.mxu0 0.0
    %3134 = vmatpush1.xpose.msra.mxu0 0.0
    %3135 = vmatprep.subr.mxu0 0.0
    %3136 = vmatpush1.xpose.msra.mxu0 0.0
    %3137 = vmatprep.subr.mxu0 0.0
    %3138 = vmatpush1.xpose.msra.mxu0 0.0
    %3139 = vmatprep.subr.mxu0 0.0
    %3140 = vmatpush1.xpose.msra.mxu0 0.0
    %3141 = vmatprep.subr.mxu0 0.0
    %3142 = vmatpush1.xpose.msra.mxu0 0.0
    %3143 = vmatprep.subr.mxu0 0.0
    %3144 = vmatpush1.xpose.msra.mxu0 0.0
    %3145 = vmatprep.subr.mxu0 0.0
    %3146 = vmatpush1.xpose.msra.mxu0 0.0
    %3147 = vmatprep.subr.mxu0 0.0
    %3148 = vmatpush1.xpose.msra.mxu0 0.0
    %3149 = vmatprep.subr.mxu0 0.0
    %3150 = vmatpush1.xpose.msra.mxu0 0.0
    %3151 = vmatprep.subr.mxu0 0.0
    %3152 = vmatpush1.xpose.msra.mxu0 0.0
    %3153 = vmatprep.subr.mxu0 0.0
    %3154 = vmatpush1.xpose.msra.mxu0 0.0
    %3155 = vmatprep.subr.mxu0 0.0
    %3156 = vmatpush1.xpose.msra.mxu0 0.0
    %3157 = vmatprep.subr.mxu0 0.0
    %3158 = vmatpush1.xpose.msra.mxu0 0.0
    %3159 = vmatprep.subr.mxu0 0.0
    %3160 = vmatpush1.xpose.msra.mxu0 0.0
    %3161 = vmatprep.subr.mxu0 0.0
    %3162 = vmatpush1.xpose.msra.mxu0 0.0
    %3163 = vmatprep.subr.mxu0 0.0
    %3164 = vmatpush1.xpose.msra.mxu0 0.0
    %3165 = vmatprep.subr.mxu0 0.0
    %3166 = vmatpush1.xpose.msra.mxu0 0.0
    %3167 = vmatprep.subr.mxu0 0.0
    %3168 = vmatpush1.xpose.msra.mxu0 0.0
    %3169 = vmatprep.mubr.f32.mxu0 0.0
    %3170 = vmatmul.mubr.f32.gmra.mrb[0].mxu0 %v3101
    %v3171 = vpop.f32.mrb[0].mxu0
    %v3172 = vadd.f32 0.0, %v3171
    %v3173 = vpop.f32.mrb[0].mxu0
    %3174 = vdwg.mxu0
    %v3175 = vsel %vm352, %v3094, -1e+30
    %v3176 = vsel %vm352, %v3172, -1e+30
    %v3177 = vsel %vm197, %v3175, -inf
    %3178 = vmax.xlane.f32.xlu0 %v3177
    %v3179 = vpop.xlane.xlu0 %3178
    %v3180 = vsel %vm197, %v3176, -inf
    %3181 = vmax.xlane.f32.xlu0 %v3180
    %v3182 = vpop.xlane.xlu0 %3181
    %v3183 = vsub.f32 %v3175, %v3179
    %v3184 = vsub.f32 %v3176, %v3182
    %v3185 = vmul.f32 %v3183, 1.442695
    %v3186 = vpow.pop %v3185
    %v3187 = vmul.f32 %v3184, 1.442695
    %v3188 = vpow.pop %v3187
    %v3189 = vsel %vm197, %v3186, 0.0
    %3190 = vadd.xlane.f32.xlu0 %v3189
    %v3191 = vpop.xlane.xlu0 %3190
    %v3192 = vsel %vm197, %v3188, 0.0
    %3193 = vadd.xlane.f32.xlu0 %v3192
    %v3194 = vpop.xlane.xlu0 %3193
    %v3195 = vrcp.pop %v3191
    %v3196 = vrcp.pop %v3194
    %v3197 = vmul.f32 %v3186, %v3195
    %v3198 = vmul.f32 %v3188, %v3196
    %3199 = vrot.lane.b32.xlu0 %v2013, 40
    %v3200 = vpop.permute.xlu0 %3199
    %v3203 = vsel %vm197, %v3197, 0
    %3205 = vmatprep.subr.mxu0 0.0
    %3206 = vmatpush1.msra.mxu0 %v3200
    %3207 = vmatprep.subr.mxu0 0.0
    %3208 = vmatpush1.msra.mxu0 0.0
    %3209 = vmatprep.subr.mxu0 0.0
    %3210 = vmatpush1.msra.mxu0 0.0
    %3211 = vmatprep.subr.mxu0 0.0
    %3212 = vmatpush1.msra.mxu0 0.0
    %3213 = vmatprep.subr.mxu0 0.0
    %3214 = vmatpush1.msra.mxu0 0.0
    %3215 = vmatprep.subr.mxu0 0.0
    %3216 = vmatpush1.msra.mxu0 0.0
    %3217 = vmatprep.subr.mxu0 0.0
    %3218 = vmatpush1.msra.mxu0 0.0
    %3219 = vmatprep.subr.mxu0 0.0
    %3220 = vmatpush1.msra.mxu0 0.0
    %3221 = vmatprep.subr.mxu0 0.0
    %3222 = vmatpush1.msra.mxu0 0.0
    %3223 = vmatprep.subr.mxu0 0.0
    %3224 = vmatpush1.msra.mxu0 0.0
    %3225 = vmatprep.subr.mxu0 0.0
    %3226 = vmatpush1.msra.mxu0 0.0
    %3227 = vmatprep.subr.mxu0 0.0
    %3228 = vmatpush1.msra.mxu0 0.0
    %3229 = vmatprep.subr.mxu0 0.0
    %3230 = vmatpush1.msra.mxu0 0.0
    %3231 = vmatprep.subr.mxu0 0.0
    %3232 = vmatpush1.msra.mxu0 0.0
    %3233 = vmatprep.subr.mxu0 0.0
    %3234 = vmatpush1.msra.mxu0 0.0
    %3235 = vmatprep.subr.mxu0 0.0
    %3236 = vmatpush1.msra.mxu0 0.0
    %3237 = vmatprep.subr.mxu0 0.0
    %3238 = vmatpush1.msra.mxu0 0.0
    %3239 = vmatprep.subr.mxu0 0.0
    %3240 = vmatpush1.msra.mxu0 0.0
    %3241 = vmatprep.subr.mxu0 0.0
    %3242 = vmatpush1.msra.mxu0 0.0
    %3243 = vmatprep.subr.mxu0 0.0
    %3244 = vmatpush1.msra.mxu0 0.0
    %3245 = vmatprep.subr.mxu0 0.0
    %3246 = vmatpush1.msra.mxu0 0.0
    %3247 = vmatprep.subr.mxu0 0.0
    %3248 = vmatpush1.msra.mxu0 0.0
    %3249 = vmatprep.subr.mxu0 0.0
    %3250 = vmatpush1.msra.mxu0 0.0
    %3251 = vmatprep.subr.mxu0 0.0
    %3252 = vmatpush1.msra.mxu0 0.0
    %3253 = vmatprep.subr.mxu0 0.0
    %3254 = vmatpush1.msra.mxu0 0.0
    %3255 = vmatprep.subr.mxu0 0.0
    %3256 = vmatpush1.msra.mxu0 0.0
    %3257 = vmatprep.subr.mxu0 0.0
    %3258 = vmatpush1.msra.mxu0 0.0
    %3259 = vmatprep.subr.mxu0 0.0
    %3260 = vmatpush1.msra.mxu0 0.0
    %3261 = vmatprep.subr.mxu0 0.0
    %3262 = vmatpush1.msra.mxu0 0.0
    %3263 = vmatprep.subr.mxu0 0.0
    %3264 = vmatpush1.msra.mxu0 0.0
    %3265 = vmatprep.subr.mxu0 0.0
    %3266 = vmatpush1.msra.mxu0 0.0
    %3267 = vmatprep.subr.mxu0 0.0
    %3268 = vmatpush1.msra.mxu0 0.0
    %3269 = vmatprep.mubr.f32.mxu0 0.0
    %3270 = vmatmul.mubr.f32.gmra.mrb[0].mxu0 %v3203
    %v3271 = vpop.f32.mrb[0].mxu0
    %v3272 = vadd.f32 0.0, %v3271
    %v3273 = vpop.f32.mrb[0].mxu0
    %3274 = vdwg.mxu0
    %3275 = vrot.lane.b32.xlu0 %v2018, 40
    %v3276 = vpop.permute.xlu0 %3275
    %v3279 = vsel %vm197, %v3198, 0
    %3281 = vmatprep.subr.mxu0 0.0
    %3282 = vmatpush1.msra.mxu0 %v3276
    %3283 = vmatprep.subr.mxu0 0.0
    %3284 = vmatpush1.msra.mxu0 0.0
    %3285 = vmatprep.subr.mxu0 0.0
    %3286 = vmatpush1.msra.mxu0 0.0
    %3287 = vmatprep.subr.mxu0 0.0
    %3288 = vmatpush1.msra.mxu0 0.0
    %3289 = vmatprep.subr.mxu0 0.0
    %3290 = vmatpush1.msra.mxu0 0.0
    %3291 = vmatprep.subr.mxu0 0.0
    %3292 = vmatpush1.msra.mxu0 0.0
    %3293 = vmatprep.subr.mxu0 0.0
    %3294 = vmatpush1.msra.mxu0 0.0
    %3295 = vmatprep.subr.mxu0 0.0
    %3296 = vmatpush1.msra.mxu0 0.0
    %3297 = vmatprep.subr.mxu0 0.0
    %3298 = vmatpush1.msra.mxu0 0.0
    %3299 = vmatprep.subr.mxu0 0.0
    %3300 = vmatpush1.msra.mxu0 0.0
    %3301 = vmatprep.subr.mxu0 0.0
    %3302 = vmatpush1.msra.mxu0 0.0
    %3303 = vmatprep.subr.mxu0 0.0
    %3304 = vmatpush1.msra.mxu0 0.0
    %3305 = vmatprep.subr.mxu0 0.0
    %3306 = vmatpush1.msra.mxu0 0.0
    %3307 = vmatprep.subr.mxu0 0.0
    %3308 = vmatpush1.msra.mxu0 0.0
    %3309 = vmatprep.subr.mxu0 0.0
    %3310 = vmatpush1.msra.mxu0 0.0
    %3311 = vmatprep.subr.mxu0 0.0
    %3312 = vmatpush1.msra.mxu0 0.0
    %3313 = vmatprep.subr.mxu0 0.0
    %3314 = vmatpush1.msra.mxu0 0.0
    %3315 = vmatprep.subr.mxu0 0.0
    %3316 = vmatpush1.msra.mxu0 0.0
    %3317 = vmatprep.subr.mxu0 0.0
    %3318 = vmatpush1.msra.mxu0 0.0
    %3319 = vmatprep.subr.mxu0 0.0
    %3320 = vmatpush1.msra.mxu0 0.0
    %3321 = vmatprep.subr.mxu0 0.0
    %3322 = vmatpush1.msra.mxu0 0.0
    %3323 = vmatprep.subr.mxu0 0.0
    %3324 = vmatpush1.msra.mxu0 0.0
    %3325 = vmatprep.subr.mxu0 0.0
    %3326 = vmatpush1.msra.mxu0 0.0
    %3327 = vmatprep.subr.mxu0 0.0
    %3328 = vmatpush1.msra.mxu0 0.0
    %3329 = vmatprep.subr.mxu0 0.0
    %3330 = vmatpush1.msra.mxu0 0.0
    %3331 = vmatprep.subr.mxu0 0.0
    %3332 = vmatpush1.msra.mxu0 0.0
    %3333 = vmatprep.subr.mxu0 0.0
    %3334 = vmatpush1.msra.mxu0 0.0
    %3335 = vmatprep.subr.mxu0 0.0
    %3336 = vmatpush1.msra.mxu0 0.0
    %3337 = vmatprep.subr.mxu0 0.0
    %3338 = vmatpush1.msra.mxu0 0.0
    %3339 = vmatprep.subr.mxu0 0.0
    %3340 = vmatpush1.msra.mxu0 0.0
    %3341 = vmatprep.subr.mxu0 0.0
    %3342 = vmatpush1.msra.mxu0 0.0
    %3343 = vmatprep.subr.mxu0 0.0
    %3344 = vmatpush1.msra.mxu0 0.0
    %3345 = vmatprep.mubr.f32.mxu0 0.0
    %3346 = vmatmul.mubr.f32.gmra.mrb[0].mxu0 %v3279
    %v3347 = vpop.f32.mrb[0].mxu0
    %v3348 = vadd.f32 0.0, %v3347
    %v3349 = vpop.f32.mrb[0].mxu0
    %3350 = vdwg.mxu0
    %3353 = vrot.lane.b32.xlu0 %v2608, 8
    %v3354 = vpop.permute.xlu0 %3353
    %3355 = vrot.lane.b32.xlu0 %v2684, 8
    %v3356 = vpop.permute.xlu0 %3355
    %3361 = vrot.lane.b32.xlu0 %v2940, 16
    %v3362 = vpop.permute.xlu0 %3361
    %3363 = vrot.lane.b32.xlu0 %v3016, 16
    %v3364 = vpop.permute.xlu0 %3363
    %3369 = vrot.lane.b32.xlu0 %v3272, 24
    %v3370 = vpop.permute.xlu0 %3369
    %3371 = vrot.lane.b32.xlu0 %v3348, 24
    %v3372 = vpop.permute.xlu0 %3371
    %v3375 = vsel %vm197, %v2276, %v3354
    %v3376 = vsel %vm197, %v2352, %v3356
    %v3377 = vsel %vm1551, %v3375, %v3362
    %v3378 = vsel %vm1551, %v3376, %v3364
    %v3379 = vsel %vm1554, %v3377, %v3370
    %v3380 = vsel %vm1554, %v3378, %v3372
    %s3381 = scalar_lea.vmem %s4, 32
    %v3382 = vld [vmem:[%s3381] sm:$0xff]
    %v3383 = vld [vmem:[%s3381 + $0x8] sm:$0xff]
    %v3384 = vld [vmem:[%s3381 + $0x10] sm:$0xff]
    %v3385 = vld [vmem:[%s3381 + $0x18] sm:$0xff]
    %s3386 = scalar_lea.vmem %s5, 1
    %v3387 = vld [vmem:[%s3386] sm:$0x1]
    %v3389 = vlaneseq
    %v3390 = vshrl.u32 %v3389, 7
    %v3391 = vsub.s32 0, %v3390
    %v3392 = vrot.slane %v3387, %v3391
    %v3395 = vsel %vm63, %v3379, 0
    %v3398 = vsel %vm63, %v3380, 0
    %3400 = vmatprep.subr.mxu0 0.0
    %3401 = vmatpush1.msra.mxu0 %v3382
    %3402 = vmatprep.subr.mxu0 0.0
    %3403 = vmatpush1.msra.mxu0 %v3383
    %3404 = vmatprep.subr.mxu0 0.0
    %3405 = vmatpush1.msra.mxu0 %v3384
    %3406 = vmatprep.subr.mxu0 0.0
    %3407 = vmatpush1.msra.mxu0 %v3385
    %3408 = vmatprep.subr.mxu0 0.0
    %3409 = vmatpush1.msra.mxu0 0.0
    %3410 = vmatprep.subr.mxu0 0.0
    %3411 = vmatpush1.msra.mxu0 0.0
    %3412 = vmatprep.subr.mxu0 0.0
    %3413 = vmatpush1.msra.mxu0 0.0
    %3414 = vmatprep.subr.mxu0 0.0
    %3415 = vmatpush1.msra.mxu0 0.0
    %3416 = vmatprep.subr.mxu0 0.0
    %3417 = vmatpush1.msra.mxu0 0.0
    %3418 = vmatprep.subr.mxu0 0.0
    %3419 = vmatpush1.msra.mxu0 0.0
    %3420 = vmatprep.subr.mxu0 0.0
    %3421 = vmatpush1.msra.mxu0 0.0
    %3422 = vmatprep.subr.mxu0 0.0
    %3423 = vmatpush1.msra.mxu0 0.0
    %3424 = vmatprep.subr.mxu0 0.0
    %3425 = vmatpush1.msra.mxu0 0.0
    %3426 = vmatprep.subr.mxu0 0.0
    %3427 = vmatpush1.msra.mxu0 0.0
    %3428 = vmatprep.subr.mxu0 0.0
    %3429 = vmatpush1.msra.mxu0 0.0
    %3430 = vmatprep.subr.mxu0 0.0
    %3431 = vmatpush1.msra.mxu0 0.0
    %3432 = vmatprep.subr.mxu0 0.0
    %3433 = vmatpush1.msra.mxu0 0.0
    %3434 = vmatprep.subr.mxu0 0.0
    %3435 = vmatpush1.msra.mxu0 0.0
    %3436 = vmatprep.subr.mxu0 0.0
    %3437 = vmatpush1.msra.mxu0 0.0
    %3438 = vmatprep.subr.mxu0 0.0
    %3439 = vmatpush1.msra.mxu0 0.0
    %3440 = vmatprep.subr.mxu0 0.0
    %3441 = vmatpush1.msra.mxu0 0.0
    %3442 = vmatprep.subr.mxu0 0.0
    %3443 = vmatpush1.msra.mxu0 0.0
    %3444 = vmatprep.subr.mxu0 0.0
    %3445 = vmatpush1.msra.mxu0 0.0
    %3446 = vmatprep.subr.mxu0 0.0
    %3447 = vmatpush1.msra.mxu0 0.0
    %3448 = vmatprep.subr.mxu0 0.0
    %3449 = vmatpush1.msra.mxu0 0.0
    %3450 = vmatprep.subr.mxu0 0.0
    %3451 = vmatpush1.msra.mxu0 0.0
    %3452 = vmatprep.subr.mxu0 0.0
    %3453 = vmatpush1.msra.mxu0 0.0
    %3454 = vmatprep.subr.mxu0 0.0
    %3455 = vmatpush1.msra.mxu0 0.0
    %3456 = vmatprep.subr.mxu0 0.0
    %3457 = vmatpush1.msra.mxu0 0.0
    %3458 = vmatprep.subr.mxu0 0.0
    %3459 = vmatpush1.msra.mxu0 0.0
    %3460 = vmatprep.subr.mxu0 0.0
    %3461 = vmatpush1.msra.mxu0 0.0
    %3462 = vmatprep.subr.mxu0 0.0
    %3463 = vmatpush1.msra.mxu0 0.0
    %3464 = vmatprep.mubr.f32.mxu0 0.0
    %3465 = vmatmul.mubr.f32.gmra.mrb[0].mxu0 %v3395
    %v3466 = vpop.f32.mrb[0].mxu0
    %v3467 = vadd.f32 %v3392, %v3466
    %v3468 = vpop.f32.mrb[0].mxu0
    %3469 = vmatprep.mubr.f32.mxu0 0.0
    %3470 = vmatmul.mubr.f32.gmra.mrb[0].mxu0 %v3398
    %v3471 = vpop.f32.mrb[0].mxu0
    %v3472 = vadd.f32 %v3392, %v3471
    %v3473 = vpop.f32.mrb[0].mxu0
    %3474 = vdwg.mxu0
    %v3475 = vadd.f32 %v1887, %v3467
    %v3476 = vadd.f32 %v1888, %v3472
    %s3477 = scalar_lea.vmem %s6, 1
    %v3478 = vld [vmem:[%s3477] sm:$0x1]
    %s3479 = scalar_lea.vmem %s7, 1
    %v3480 = vld [vmem:[%s3479] sm:$0x1]
    %v3481 = vsel %vm63, %v3475, 0.0
    %3482 = vadd.xlane.f32.xlu0 %v3481
    %v3483 = vpop.xlane.xlu0 %3482
    %v3484 = vsel %vm63, %v3476, 0.0
    %3485 = vadd.xlane.f32.xlu0 %v3484
    %v3486 = vpop.xlane.xlu0 %3485
    %v3487 = vmul.f32 %v3483, %v70
    %v3488 = vmul.f32 %v3486, %v70
    %v3489 = vsub.f32 %v3475, %v3487
    %v3490 = vsub.f32 %v3476, %v3488
    %v3491 = vmul.f32 %v3489, %v3489
    %v3492 = vmul.f32 %v3490, %v3490
    %v3493 = vsel %vm63, %v3491, 0.0
    %3494 = vadd.xlane.f32.xlu0 %v3493
    %v3495 = vpop.xlane.xlu0 %3494
    %v3496 = vsel %vm63, %v3492, 0.0
    %3497 = vadd.xlane.f32.xlu0 %v3496
    %v3498 = vpop.xlane.xlu0 %3497
    %v3499 = vmul.f32 %v3495, %v70
    %v3500 = vmul.f32 %v3498, %v70
    %v3501 = vadd.f32 %v3499, 1e-05
    %v3502 = vadd.f32 %v3500, 1e-05
    %v3503 = vrsqrt.pop %v3501
    %v3504 = vrsqrt.pop %v3502
    %v3505 = vmul.f32 %v3489, %v3503
    %v3506 = vmul.f32 %v3490, %v3504
    %v3508 = vlaneseq
    %v3509 = vshrl.u32 %v3508, 7
    %v3510 = vsub.s32 0, %v3509
    %v3511 = vrot.slane %v3478, %v3510
    %v3513 = vmul.f32 %v3505, %v3511
    %v3514 = vmul.f32 %v3506, %v3511
    %v3516 = vlaneseq
    %v3517 = vshrl.u32 %v3516, 7
    %v3518 = vsub.s32 0, %v3517
    %v3519 = vrot.slane %v3480, %v3518
    %v3521 = vadd.f32 %v3513, %v3519
    %v3522 = vadd.f32 %v3514, %v3519
    %s3523 = scalar_lea.vmem %s8, 32
    %v3524 = vld [vmem:[%s3523] sm:$0xff]
    %v3525 = vld [vmem:[%s3523 + $0x8] sm:$0xff]
    %v3526 = vld [vmem:[%s3523 + $0x10] sm:$0xff]
    %v3527 = vld [vmem:[%s3523 + $0x18] sm:$0xff]
    %s3528 = scalar_lea.vmem %s9, 1
    %v3529 = vld [vmem:[%s3528] sm:$0x1]
    %v3531 = vlaneseq
    %v3532 = vshrl.u32 %v3531, 7
    %v3533 = vsub.s32 0, %v3532
    %v3534 = vrot.slane %v3529, %v3533
    %v3537 = vsel %vm63, %v3521, 0
    %v3540 = vsel %vm63, %v3522, 0
    %3542 = vmatprep.subr.mxu0 0.0
    %3543 = vmatpush1.msra.mxu0 %v3524
    %3544 = vmatprep.subr.mxu0 0.0
    %3545 = vmatpush1.msra.mxu0 %v3525
    %3546 = vmatprep.subr.mxu0 0.0
    %3547 = vmatpush1.msra.mxu0 %v3526
    %3548 = vmatprep.subr.mxu0 0.0
    %3549 = vmatpush1.msra.mxu0 %v3527
    %3550 = vmatprep.subr.mxu0 0.0
    %3551 = vmatpush1.msra.mxu0 0.0
    %3552 = vmatprep.subr.mxu0 0.0
    %3553 = vmatpush1.msra.mxu0 0.0
    %3554 = vmatprep.subr.mxu0 0.0
    %3555 = vmatpush1.msra.mxu0 0.0
    %3556 = vmatprep.subr.mxu0 0.0
    %3557 = vmatpush1.msra.mxu0 0.0
    %3558 = vmatprep.subr.mxu0 0.0
    %3559 = vmatpush1.msra.mxu0 0.0
    %3560 = vmatprep.subr.mxu0 0.0
    %3561 = vmatpush1.msra.mxu0 0.0
    %3562 = vmatprep.subr.mxu0 0.0
    %3563 = vmatpush1.msra.mxu0 0.0
    %3564 = vmatprep.subr.mxu0 0.0
    %3565 = vmatpush1.msra.mxu0 0.0
    %3566 = vmatprep.subr.mxu0 0.0
    %3567 = vmatpush1.msra.mxu0 0.0
    %3568 = vmatprep.subr.mxu0 0.0
    %3569 = vmatpush1.msra.mxu0 0.0
    %3570 = vmatprep.subr.mxu0 0.0
    %3571 = vmatpush1.msra.mxu0 0.0
    %3572 = vmatprep.subr.mxu0 0.0
    %3573 = vmatpush1.msra.mxu0 0.0
    %3574 = vmatprep.subr.mxu0 0.0
    %3575 = vmatpush1.msra.mxu0 0.0
    %3576 = vmatprep.subr.mxu0 0.0
    %3577 = vmatpush1.msra.mxu0 0.0
    %3578 = vmatprep.subr.mxu0 0.0
    %3579 = vmatpush1.msra.mxu0 0.0
    %3580 = vmatprep.subr.mxu0 0.0
    %3581 = vmatpush1.msra.mxu0 0.0
    %3582 = vmatprep.subr.mxu0 0.0
    %3583 = vmatpush1.msra.mxu0 0.0
    %3584 = vmatprep.subr.mxu0 0.0
    %3585 = vmatpush1.msra.mxu0 0.0
    %3586 = vmatprep.subr.mxu0 0.0
    %3587 = vmatpush1.msra.mxu0 0.0
    %3588 = vmatprep.subr.mxu0 0.0
    %3589 = vmatpush1.msra.mxu0 0.0
    %3590 = vmatprep.subr.mxu0 0.0
    %3591 = vmatpush1.msra.mxu0 0.0
    %3592 = vmatprep.subr.mxu0 0.0
    %3593 = vmatpush1.msra.mxu0 0.0
    %3594 = vmatprep.subr.mxu0 0.0
    %3595 = vmatpush1.msra.mxu0 0.0
    %3596 = vmatprep.subr.mxu0 0.0
    %3597 = vmatpush1.msra.mxu0 0.0
    %3598 = vmatprep.subr.mxu0 0.0
    %3599 = vmatpush1.msra.mxu0 0.0
    %3600 = vmatprep.subr.mxu0 0.0
    %3601 = vmatpush1.msra.mxu0 0.0
    %3602 = vmatprep.subr.mxu0 0.0
    %3603 = vmatpush1.msra.mxu0 0.0
    %3604 = vmatprep.subr.mxu0 0.0
    %3605 = vmatpush1.msra.mxu0 0.0
    %3606 = vmatprep.mubr.f32.mxu0 0.0
    %3607 = vmatmul.mubr.f32.gmra.mrb[0].mxu0 %v3537
    %v3608 = vpop.f32.mrb[0].mxu0
    %v3609 = vadd.f32 %v3534, %v3608
    %v3610 = vpop.f32.mrb[0].mxu0
    %3611 = vmatprep.mubr.f32.mxu0 0.0
    %3612 = vmatmul.mubr.f32.gmra.mrb[0].mxu0 %v3540
    %v3613 = vpop.f32.mrb[0].mxu0
    %v3614 = vadd.f32 %v3534, %v3613
    %v3615 = vpop.f32.mrb[0].mxu0
    %3616 = vdwg.mxu0
    %v3617 = vmax.f32 %v3609, 0.0
    %v3618 = vmax.f32 %v3614, 0.0
    %s3619 = scalar_lea.vmem %s10, 128
    %v3620 = vld [vmem:[%s3619] sm:$0xff]
    %v3621 = vld [vmem:[%s3619 + $0x8] sm:$0xff]
    %v3622 = vld [vmem:[%s3619 + $0x10] sm:$0xff]
    %v3623 = vld [vmem:[%s3619 + $0x18] sm:$0xff]
    %v3624 = vld [vmem:[%s3619 + $0x20] sm:$0xff]
    %v3625 = vld [vmem:[%s3619 + $0x28] sm:$0xff]
    %v3626 = vld [vmem:[%s3619 + $0x30] sm:$0xff]
    %v3627 = vld [vmem:[%s3619 + $0x38] sm:$0xff]
    %v3628 = vld [vmem:[%s3619 + $0x40] sm:$0xff]
    %v3629 = vld [vmem:[%s3619 + $0x48] sm:$0xff]
    %v3630 = vld [vmem:[%s3619 + $0x50] sm:$0xff]
    %v3631 = vld [vmem:[%s3619 + $0x58] sm:$0xff]
    %v3632 = vld [vmem:[%s3619 + $0x60] sm:$0xff]
    %v3633 = vld [vmem:[%s3619 + $0x68] sm:$0xff]
    %v3634 = vld [vmem:[%s3619 + $0x70] sm:$0xff]
    %v3635 = vld [vmem:[%s3619 + $0x78] sm:$0xff]
    %s3636 = scalar_lea.vmem %s11, 1
    %v3637 = vld [vmem:[%s3636] sm:$0x1]
    %v3639 = vlaneseq
    %v3640 = vshrl.u32 %v3639, 7
    %v3641 = vsub.s32 0, %v3640
    %v3642 = vrot.slane %v3637, %v3641
    %3644 = vmatprep.subr.mxu0 0.0
    %3645 = vmatpush1.msra.mxu0 %v3620
    %3646 = vmatprep.subr.mxu0 0.0
    %3647 = vmatpush1.msra.mxu0 %v3621
    %3648 = vmatprep.subr.mxu0 0.0
    %3649 = vmatpush1.msra.mxu0 %v3622
    %3650 = vmatprep.subr.mxu0 0.0
    %3651 = vmatpush1.msra.mxu0 %v3623
    %3652 = vmatprep.subr.mxu0 0.0
    %3653 = vmatpush1.msra.mxu0 %v3624
    %3654 = vmatprep.subr.mxu0 0.0
    %3655 = vmatpush1.msra.mxu0 %v3625
    %3656 = vmatprep.subr.mxu0 0.0
    %3657 = vmatpush1.msra.mxu0 %v3626
    %3658 = vmatprep.subr.mxu0 0.0
    %3659 = vmatpush1.msra.mxu0 %v3627
    %3660 = vmatprep.subr.mxu0 0.0
    %3661 = vmatpush1.msra.mxu0 %v3628
    %3662 = vmatprep.subr.mxu0 0.0
    %3663 = vmatpush1.msra.mxu0 %v3629
    %3664 = vmatprep.subr.mxu0 0.0
    %3665 = vmatpush1.msra.mxu0 %v3630
    %3666 = vmatprep.subr.mxu0 0.0
    %3667 = vmatpush1.msra.mxu0 %v3631
    %3668 = vmatprep.subr.mxu0 0.0
    %3669 = vmatpush1.msra.mxu0 %v3632
    %3670 = vmatprep.subr.mxu0 0.0
    %3671 = vmatpush1.msra.mxu0 %v3633
    %3672 = vmatprep.subr.mxu0 0.0
    %3673 = vmatpush1.msra.mxu0 %v3634
    %3674 = vmatprep.subr.mxu0 0.0
    %3675 = vmatpush1.msra.mxu0 %v3635
    %3676 = vmatprep.subr.mxu0 0.0
    %3677 = vmatpush1.msra.mxu0 0.0
    %3678 = vmatprep.subr.mxu0 0.0
    %3679 = vmatpush1.msra.mxu0 0.0
    %3680 = vmatprep.subr.mxu0 0.0
    %3681 = vmatpush1.msra.mxu0 0.0
    %3682 = vmatprep.subr.mxu0 0.0
    %3683 = vmatpush1.msra.mxu0 0.0
    %3684 = vmatprep.subr.mxu0 0.0
    %3685 = vmatpush1.msra.mxu0 0.0
    %3686 = vmatprep.subr.mxu0 0.0
    %3687 = vmatpush1.msra.mxu0 0.0
    %3688 = vmatprep.subr.mxu0 0.0
    %3689 = vmatpush1.msra.mxu0 0.0
    %3690 = vmatprep.subr.mxu0 0.0
    %3691 = vmatpush1.msra.mxu0 0.0
    %3692 = vmatprep.subr.mxu0 0.0
    %3693 = vmatpush1.msra.mxu0 0.0
    %3694 = vmatprep.subr.mxu0 0.0
    %3695 = vmatpush1.msra.mxu0 0.0
    %3696 = vmatprep.subr.mxu0 0.0
    %3697 = vmatpush1.msra.mxu0 0.0
    %3698 = vmatprep.subr.mxu0 0.0
    %3699 = vmatpush1.msra.mxu0 0.0
    %3700 = vmatprep.subr.mxu0 0.0
    %3701 = vmatpush1.msra.mxu0 0.0
    %3702 = vmatprep.subr.mxu0 0.0
    %3703 = vmatpush1.msra.mxu0 0.0
    %3704 = vmatprep.subr.mxu0 0.0
    %3705 = vmatpush1.msra.mxu0 0.0
    %3706 = vmatprep.subr.mxu0 0.0
    %3707 = vmatpush1.msra.mxu0 0.0
    %3708 = vmatprep.mubr.f32.mxu0 0.0
    %3709 = vmatmul.mubr.f32.gmra.mrb[0].mxu0 %v3617
    %v3710 = vpop.f32.mrb[0].mxu0
    %v3711 = vadd.f32 %v3642, %v3710
    %v3712 = vpop.f32.mrb[0].mxu0
    %3713 = vmatprep.mubr.f32.mxu0 0.0
    %3714 = vmatmul.mubr.f32.gmra.mrb[0].mxu0 %v3618
    %v3715 = vpop.f32.mrb[0].mxu0
    %v3716 = vadd.f32 %v3642, %v3715
    %v3717 = vpop.f32.mrb[0].mxu0
    %3718 = vdwg.mxu0
    %v3719 = vadd.f32 %v3475, %v3711
    %v3720 = vadd.f32 %v3476, %v3716
    %v3721 = vld [vmem:[%s12] sm:$0x1]
    %v3722 = vld [vmem:[%s13] sm:$0x1]
    %v3723 = vsel %vm63, %v3719, 0.0
    %3724 = vadd.xlane.f32.xlu0 %v3723
    %v3725 = vpop.xlane.xlu0 %3724
    %v3726 = vsel %vm63, %v3720, 0.0
    %3727 = vadd.xlane.f32.xlu0 %v3726
    %v3728 = vpop.xlane.xlu0 %3727
    %v3729 = vmul.f32 %v3725, %v70
    %v3730 = vmul.f32 %v3728, %v70
    %v3731 = vsub.f32 %v3719, %v3729
    %v3732 = vsub.f32 %v3720, %v3730
    %v3733 = vmul.f32 %v3731, %v3731
    %v3734 = vmul.f32 %v3732, %v3732
    %v3735 = vsel %vm63, %v3733, 0.0
    %3736 = vadd.xlane.f32.xlu0 %v3735
    %v3737 = vpop.xlane.xlu0 %3736
    %v3738 = vsel %vm63, %v3734, 0.0
    %3739 = vadd.xlane.f32.xlu0 %v3738
    %v3740 = vpop.xlane.xlu0 %3739
    %v3741 = vmul.f32 %v3737, %v70
    %v3742 = vmul.f32 %v3740, %v70
    %v3743 = vadd.f32 %v3741, 1e-05
    %v3744 = vadd.f32 %v3742, 1e-05
    %v3745 = vrsqrt.pop %v3743
    %v3746 = vrsqrt.pop %v3744
    %v3747 = vmul.f32 %v3731, %v3745
    %v3748 = vmul.f32 %v3732, %v3746
    %v3750 = vlaneseq
    %v3751 = vshrl.u32 %v3750, 7
    %v3752 = vsub.s32 0, %v3751
    %v3753 = vrot.slane %v3721, %v3752
    %v3755 = vmul.f32 %v3747, %v3753
    %v3756 = vmul.f32 %v3748, %v3753
    %v3758 = vlaneseq
    %v3759 = vshrl.u32 %v3758, 7
    %v3760 = vsub.s32 0, %v3759
    %v3761 = vrot.slane %v3722, %v3760
    %v3763 = vadd.f32 %v3755, %v3761
    %v3764 = vadd.f32 %v3756, %v3761
    %v3765 = vld [vmem:[%s14] sm:$0xff]
    %v3766 = vld [vmem:[%s14 + $0x8] sm:$0xff]
    %v3767 = vld [vmem:[%s14 + $0x10] sm:$0xff]
    %v3768 = vld [vmem:[%s14 + $0x18] sm:$0xff]
    %v3769 = vld [vmem:[%s15] sm:$0x1]
    %v3771 = vlaneseq
    %v3772 = vshrl.u32 %v3771, 7
    %v3773 = vsub.s32 0, %v3772
    %v3774 = vrot.slane %v3769, %v3773
    %v3777 = vsel %vm63, %v3763, 0
    %v3780 = vsel %vm63, %v3764, 0
    %3782 = vmatprep.subr.mxu0 0.0
    %3783 = vmatpush1.msra.mxu0 %v3765
    %3784 = vmatprep.subr.mxu0 0.0
    %3785 = vmatpush1.msra.mxu0 %v3766
    %3786 = vmatprep.subr.mxu0 0.0
    %3787 = vmatpush1.msra.mxu0 %v3767
    %3788 = vmatprep.subr.mxu0 0.0
    %3789 = vmatpush1.msra.mxu0 %v3768
    %3790 = vmatprep.subr.mxu0 0.0
    %3791 = vmatpush1.msra.mxu0 0.0
    %3792 = vmatprep.subr.mxu0 0.0
    %3793 = vmatpush1.msra.mxu0 0.0
    %3794 = vmatprep.subr.mxu0 0.0
    %3795 = vmatpush1.msra.mxu0 0.0
    %3796 = vmatprep.subr.mxu0 0.0
    %3797 = vmatpush1.msra.mxu0 0.0
    %3798 = vmatprep.subr.mxu0 0.0
    %3799 = vmatpush1.msra.mxu0 0.0
    %3800 = vmatprep.subr.mxu0 0.0
    %3801 = vmatpush1.msra.mxu0 0.0
    %3802 = vmatprep.subr.mxu0 0.0
    %3803 = vmatpush1.msra.mxu0 0.0
    %3804 = vmatprep.subr.mxu0 0.0
    %3805 = vmatpush1.msra.mxu0 0.0
    %3806 = vmatprep.subr.mxu0 0.0
    %3807 = vmatpush1.msra.mxu0 0.0
    %3808 = vmatprep.subr.mxu0 0.0
    %3809 = vmatpush1.msra.mxu0 0.0
    %3810 = vmatprep.subr.mxu0 0.0
    %3811 = vmatpush1.msra.mxu0 0.0
    %3812 = vmatprep.subr.mxu0 0.0
    %3813 = vmatpush1.msra.mxu0 0.0
    %3814 = vmatprep.subr.mxu0 0.0
    %3815 = vmatpush1.msra.mxu0 0.0
    %3816 = vmatprep.subr.mxu0 0.0
    %3817 = vmatpush1.msra.mxu0 0.0
    %3818 = vmatprep.subr.mxu0 0.0
    %3819 = vmatpush1.msra.mxu0 0.0
    %3820 = vmatprep.subr.mxu0 0.0
    %3821 = vmatpush1.msra.mxu0 0.0
    %3822 = vmatprep.subr.mxu0 0.0
    %3823 = vmatpush1.msra.mxu0 0.0
    %3824 = vmatprep.subr.mxu0 0.0
    %3825 = vmatpush1.msra.mxu0 0.0
    %3826 = vmatprep.subr.mxu0 0.0
    %3827 = vmatpush1.msra.mxu0 0.0
    %3828 = vmatprep.subr.mxu0 0.0
    %3829 = vmatpush1.msra.mxu0 0.0
    %3830 = vmatprep.subr.mxu0 0.0
    %3831 = vmatpush1.msra.mxu0 0.0
    %3832 = vmatprep.subr.mxu0 0.0
    %3833 = vmatpush1.msra.mxu0 0.0
    %3834 = vmatprep.subr.mxu0 0.0
    %3835 = vmatpush1.msra.mxu0 0.0
    %3836 = vmatprep.subr.mxu0 0.0
    %3837 = vmatpush1.msra.mxu0 0.0
    %3838 = vmatprep.subr.mxu0 0.0
    %3839 = vmatpush1.msra.mxu0 0.0
    %3840 = vmatprep.subr.mxu0 0.0
    %3841 = vmatpush1.msra.mxu0 0.0
    %3842 = vmatprep.subr.mxu0 0.0
    %3843 = vmatpush1.msra.mxu0 0.0
    %3844 = vmatprep.subr.mxu0 0.0
    %3845 = vmatpush1.msra.mxu0 0.0
    %3846 = vmatprep.mubr.f32.mxu0 0.0
    %3847 = vmatmul.mubr.f32.gmra.mrb[0].mxu0 %v3777
    %v3848 = vpop.f32.mrb[0].mxu0
    %v3849 = vadd.f32 %v3774, %v3848
    %v3850 = vpop.f32.mrb[0].mxu0
    %3851 = vmatprep.mubr.f32.mxu0 0.0
    %3852 = vmatmul.mubr.f32.gmra.mrb[0].mxu0 %v3780
    %v3853 = vpop.f32.mrb[0].mxu0
    %v3854 = vadd.f32 %v3774, %v3853
    %v3855 = vpop.f32.mrb[0].mxu0
    %3856 = vdwg.mxu0
    %3857 = vst [vmem:[#allocation2] sm:$0xff] %v3849
    %3858 = vst [vmem:[#allocation2 + $0x8] sm:$0xff] %v3854
    // Predicated region
    $region66: #{tpu_custom_call.1} parent=1 // pred_check
      _
    $region67: #{tpu_custom_call.1} parent=1 // pred_check_branch
      %3860 = sbr.rel (0) target = $region69
    $region68: #{tpu_custom_call.1} parent=1 // pred_region
      %s3862 = ssub.s32 256, 256
      %3863 = vsyncadd [#allocation3], %s3862
      %s3864 = sshll.u32 [#allocation2], 4
      %s3865 = int_to_ptr.vmem [resolvable:$true] %s3864
      %3870 = dma.vmem_to_hbm [thread:$0]  %s3865, 256, %s16, [#allocation3], 128, 128, 8
    $region69: #{tpu_custom_call.1} parent=1 // pred_fallthru
      _
    // Predicated region
    $region70: #{tpu_custom_call.1} parent=1 // pred_check
      _
    $region71: #{tpu_custom_call.1} parent=1 // pred_check_branch
      %3872 = sbr.rel (0) target = $region73
    $region72: #{tpu_custom_call.1} parent=1 // pred_region
      %3873 = dma.done [#allocation3], 256
    $region73: #{tpu_custom_call.1} parent=1 // pred_fallthru
      _
    %3874 = vsyncpa [#allocation3], 1

</llo_original>
